<compile_context>
chip_gen: v6e
topology: v6e:2x2x1
jax: 0.10.0
libtpu: 0.0.40
codegen_flags: <defaults>
</compile_context>

<pallas_src>
import functools

import jax
import jax.numpy as jnp
import numpy as np
from jax import lax
from jax.experimental import pallas as pl
from jax.experimental.pallas import tpu as pltpu


def _round_up(x, m):
  return (x + m - 1) // m * m


def _vmem_capacity_bytes():
  try:
    return int(pltpu.get_tpu_info().vmem_capacity_bytes)
  except Exception:  # conservative fallback = v7x physical VMEM
    return 64 * 2**20


def _scale_pred_kernel(x_ref, w1_ref, shift_ref, w2_ref, b2_ref, out_ref,
                       acc_ref, *, row_pitch, n_out):
  """Fused 3x3 conv + BN(eval) + LeakyReLU(0.1) + 1x1 conv + bias, one image.

  x_ref    : [1, Lp, Cinp]    bf16  zero-padded image, rows flattened with
                                    pitch row_pitch = W+2 (1 halo col each side).
  w1_ref   : [9, Cinp, C1p]   bf16  3x3 weights, tap t = dy*3+dx, BN scale folded.
  shift_ref: [1, C1p]         f32   beta - mean * gamma / sqrt(var + eps).
  w2_ref   : [C1p, C2p]       bf16  1x1 conv weights (zero padded).
  b2_ref   : [1, C2p]         f32   1x1 conv bias (zero padded).
  out_ref  : [1, n_out, C2p]  bf16  lane-dense output (n_out = H*(W+2) rows;
                                    2 wrap-garbage cols/row dropped by wrapper).
  acc_ref  : [n_out, C1p]     f32   VMEM scratch accumulator.
  """
  xb = x_ref[0]                                    # [Lp, Cinp] bf16, resident
  # All 9 taps of the 3x3 conv are contiguous row windows of the flattened
  # (H+3, W+2) grid: window offset = dy*row_pitch + dx.
  acc_ref[...] = jnp.dot(xb[0:n_out], w1_ref[0],
                         preferred_element_type=jnp.float32)
  for t in range(1, 9):
    off = (t // 3) * row_pitch + (t % 3)
    acc_ref[...] += jnp.dot(xb[off:off + n_out], w1_ref[t],
                            preferred_element_type=jnp.float32)
  h = acc_ref[...] + shift_ref[...]                # BatchNorm shift (scale in w1)
  h = jnp.where(h > 0, h, 0.1 * h)                 # LeakyReLU(0.1), f32 on VPU
  out = jnp.dot(h.astype(w2_ref.dtype), w2_ref[...],
                preferred_element_type=jnp.float32) + b2_ref[...]
  out_ref[0] = out.astype(out_ref.dtype)           # bf16, unmasked (C2p % 128 == 0)


def scale_prediction_pallas(x_nchw, params, num_classes):
  """x_nchw: [B, Cin, H, W] float32 -> [B, 3, H, W, num_classes+5] float32."""
  w1, gamma, beta, rmean, rvar, w2, b2 = params
  B, Cin, H, W = x_nchw.shape
  C1 = w1.shape[-1]
  C2 = w2.shape[-1]
  nc5 = num_classes + 5
  assert C2 == 3 * nc5

  Cinp = _round_up(Cin, 128)        # lane-dense contraction dim per tap
  C1p = _round_up(C1, 128)          # lane-dense hidden channels
  C2p = _round_up(C2, 128)          # lane-dense output channels
  Wr = W + 2                        # flattened row pitch (1 halo col each side)
  Lp = (H + 3) * Wr                 # 1 halo row top + 1 bottom + 1 spare zero row
  Nout = H * Wr                     # output rows per image (incl. 2 garbage cols)

  # ---- glue: bf16 cast first (half the transpose bytes), NCHW -> NHWC,
  #      a single pad (halo rows/cols + spare row + channel lanes), flatten ----
  x = jnp.transpose(x_nchw.astype(jnp.bfloat16), (0, 2, 3, 1))    # [B, H, W, Cin]
  xpad = jnp.pad(x, ((0, 0), (1, 2), (1, 1), (0, Cinp - Cin)))    # [B,H+3,W+2,Cinp]
  xflat = xpad.reshape(B, Lp, Cinp)

  # ---- fold BatchNorm (inference) scale into the 3x3 weights ----
  eps = 1e-5
  scale = gamma / jnp.sqrt(rvar + eps)                            # [C1]
  shift = beta - rmean * scale                                    # [C1]
  w1f = (w1 * scale).reshape(9, Cin, C1)          # taps ordered t = dy*3 + dx
  w1p = jnp.zeros((9, Cinp, C1p), jnp.bfloat16).at[:, :Cin, :C1].set(
      w1f.astype(jnp.bfloat16))
  shift_p = jnp.zeros((1, C1p), jnp.float32).at[:, :C1].set(
      shift.astype(jnp.float32))
  w2p = jnp.zeros((C1p, C2p), jnp.bfloat16).at[:C1, :C2].set(
      w2.astype(jnp.bfloat16))
  b2p = jnp.zeros((1, C2p), jnp.float32).at[:, :C2].set(b2.astype(jnp.float32))

  # ---- VMEM budget: double-buffered I/O blocks (counted once here),
  #      single-buffered constants, scratch accumulator, epilogue temps ----
  in_blk = Lp * Cinp * 2
  out_blk = Nout * C2p * 2
  const_b = 9 * Cinp * C1p * 2 + C1p * C2p * 2 + (C1p + C2p) * 4
  acc_b = Nout * C1p * 4
  tmp_b = Nout * C1p * 4 + Nout * C1p * 2 + Nout * C2p * 4
  vmem_est = 2 * in_blk + 2 * out_blk + const_b + acc_b + tmp_b
  vmem_cap = (3 * _vmem_capacity_bytes()) // 4    # leave compiler scratch headroom
  vmem_limit = int(min(max(32 * 2**20, (5 * vmem_est) // 4), vmem_cap))

  def _const_spec(shape):
    return pl.BlockSpec(shape, lambda b: (0,) * len(shape),
                        pipeline_mode=pl.Buffered(1))

  out_flat = pl.pallas_call(
      functools.partial(_scale_pred_kernel, row_pitch=Wr, n_out=Nout),
      out_shape=jax.ShapeDtypeStruct((B, Nout, C2p), jnp.bfloat16),
      grid_spec=pltpu.PrefetchScalarGridSpec(
          num_scalar_prefetch=0,
          grid=(B,),
          in_specs=[
              pl.BlockSpec((1, Lp, Cinp), lambda b: (b, 0, 0)),
              _const_spec((9, Cinp, C1p)),
              _const_spec((1, C1p)),
              _const_spec((C1p, C2p)),
              _const_spec((1, C2p)),
          ],
          out_specs=pl.BlockSpec((1, Nout, C2p), lambda b: (b, 0, 0)),
          scratch_shapes=[pltpu.VMEM((Nout, C1p), jnp.float32)],
      ),
      compiler_params=pltpu.CompilerParams(
          dimension_semantics=("parallel",),
          vmem_limit_bytes=vmem_limit),
  )(xflat, w1p, shift_p, w2p, b2p)

  # ---- glue: [B, H*(W+2), C2p] bf16 -> [B, 3, H, W, nc+5] f32 ----
  out = out_flat.reshape(B, H, Wr, C2p)[:, :, :W, :C2]    # drop wrap/pad cols
  out = out.reshape(B, H, W, 3, nc5).astype(jnp.float32)
  return jnp.transpose(out, (0, 3, 1, 2, 4))


def scale_prediction_reference(x_nchw, params, num_classes):
  """Pure-JAX (f32) reference implementation for verification."""
  w1, gamma, beta, rmean, rvar, w2, b2 = params
  x = jnp.transpose(x_nchw, (0, 2, 3, 1))
  h = lax.conv_general_dilated(
      x, w1, window_strides=(1, 1), padding="SAME",
      dimension_numbers=("NHWC", "HWIO", "NHWC"))
  eps = 1e-5
  h = (h - rmean) / jnp.sqrt(rvar + eps) * gamma + beta
  h = jnp.where(h > 0, h, 0.1 * h)
  o = jnp.einsum("bhwc,cf->bhwf", h, w2) + b2
  B, H, W, _ = x.shape
  nc5 = num_classes + 5
  o = o.reshape(B, H, W, 3, nc5)
  return jnp.transpose(o, (0, 3, 1, 2, 4))


if __name__ == "__main__":
  # NOTE: toy shapes for the correctness check only; tile/buffering decisions
  # in the wrapper are derived from the actual shapes, so the same code path
  # is used at production sizes (Cin=128-512, nc~80, H,W=13-80).
  B, Cin, H, W = 2, 4, 16, 16
  num_classes = 3
  C1 = 2 * Cin                      # first CNN_block output channels
  C2 = (num_classes + 5) * 3        # prediction channels

  key = jax.random.PRNGKey(0)
  ks = jax.random.split(key, 8)
  w1 = 0.1 * jax.random.normal(ks[0], (3, 3, Cin, C1), jnp.float32)   # HWIO
  gamma = 1.0 + 0.1 * jax.random.normal(ks[1], (C1,), jnp.float32)
  beta = 0.1 * jax.random.normal(ks[2], (C1,), jnp.float32)
  rmean = 0.1 * jax.random.normal(ks[3], (C1,), jnp.float32)
  rvar = 1.0 + 0.1 * jax.random.uniform(ks[4], (C1,), jnp.float32)
  w2 = 0.1 * jax.random.normal(ks[5], (C1, C2), jnp.float32)
  b2 = 0.1 * jax.random.normal(ks[6], (C2,), jnp.float32)
  x = jax.random.normal(ks[7], (B, Cin, H, W), jnp.float32)

  params = (w1, gamma, beta, rmean, rvar, w2, b2)

  run = jax.jit(functools.partial(scale_prediction_pallas,
                                  num_classes=num_classes))
  out = jax.block_until_ready(run(x, params))

  ref = jax.block_until_ready(
      scale_prediction_reference(x, params, num_classes))

  assert out.shape == (B, 3, H, W, num_classes + 5), out.shape
  # bf16 inputs/weights/output with f32 accumulation vs. f32 reference.
  np.testing.assert_allclose(np.asarray(out), np.asarray(ref),
                             rtol=2e-2, atol=2e-2)
  print("KERNEL_OK")
</pallas_src>

<mosaic_0001>
module attributes {stable_mosaic.version = 11 : i64} {
  func.func @_scale_pred_kernel(%arg0: i32, %arg1: memref<1x342x128xbf16, #tpu.memory_space<vmem>>, %arg2: memref<9x128x128xbf16, #tpu.memory_space<vmem>>, %arg3: memref<1x128xf32, #tpu.memory_space<vmem>>, %arg4: memref<128x128xbf16, #tpu.memory_space<vmem>>, %arg5: memref<1x128xf32, #tpu.memory_space<vmem>>, %arg6: memref<1x288x128xbf16, #tpu.memory_space<vmem>>, %arg7: memref<288x128xf32, #tpu.memory_space<vmem>>) attributes {dimension_semantics = [#tpu.dimension_semantics<parallel>], iteration_bounds = array<i64: 2>, scalar_prefetch = 0 : i64, scratch_operands = 1 : i64, tpu.core_type = #tpu.core_type<tc>, window_params = [{transform_indices = @transform_0, window_bounds = array<i64: 1, 342, 128>}, {pipeline_mode = #tpu.pipeline_mode<synchronous>, transform_indices = @transform_1, window_bounds = array<i64: 9, 128, 128>}, {pipeline_mode = #tpu.pipeline_mode<synchronous>, transform_indices = @transform_2, window_bounds = array<i64: 1, 128>}, {pipeline_mode = #tpu.pipeline_mode<synchronous>, transform_indices = @transform_3, window_bounds = array<i64: 128, 128>}, {pipeline_mode = #tpu.pipeline_mode<synchronous>, transform_indices = @transform_4, window_bounds = array<i64: 1, 128>}, {transform_indices = @transform_5, window_bounds = array<i64: 1, 288, 128>}]} {
    %c0 = arith.constant 0 : index
    %c0_0 = arith.constant 0 : index
    %c0_1 = arith.constant 0 : index
    %0 = vector.load %arg1[%c0, %c0_0, %c0_1] : memref<1x342x128xbf16, #tpu.memory_space<vmem>>, vector<1x342x128xbf16>
    %1 = vector.shape_cast %0 : vector<1x342x128xbf16> to vector<342x128xbf16>
    %2 = vector.extract_strided_slice %1 {offsets = [0, 0], sizes = [288, 128], strides = [1, 1]} : vector<342x128xbf16> to vector<288x128xbf16>
    %c0_2 = arith.constant 0 : index
    %c0_3 = arith.constant 0 : index
    %c0_4 = arith.constant 0 : index
    %3 = vector.load %arg2[%c0_2, %c0_3, %c0_4] : memref<9x128x128xbf16, #tpu.memory_space<vmem>>, vector<1x128x128xbf16>
    %4 = vector.shape_cast %3 : vector<1x128x128xbf16> to vector<128x128xbf16>
    %cst = arith.constant dense<0.000000e+00> : vector<288x128xf32>
    %5 = tpu.matmul %2, %4, %cst {dimension_numbers = #tpu.dot_dimension_numbers<[1], [0], [0], [1], [0, 0, 1, 1], [], []>} : vector<288x128xbf16>, vector<128x128xbf16>, vector<288x128xf32> -> vector<288x128xf32>
    %c0_5 = arith.constant 0 : index
    %c0_6 = arith.constant 0 : index
    %6 = vector.load %arg7[%c0_5, %c0_6] : memref<288x128xf32, #tpu.memory_space<vmem>>, vector<288x128xf32>
    tpu.vector_store %arg7[%c0_5, %c0_6], %5 {strides = array<i32>} : memref<288x128xf32, #tpu.memory_space<vmem>>, vector<288x128xf32>,
    %c0_7 = arith.constant 0 : index
    %c0_8 = arith.constant 0 : index
    %7 = vector.load %arg7[%c0_7, %c0_8] : memref<288x128xf32, #tpu.memory_space<vmem>>, vector<288x128xf32>
    %8 = vector.extract_strided_slice %1 {offsets = [1, 0], sizes = [288, 128], strides = [1, 1]} : vector<342x128xbf16> to vector<288x128xbf16>
    %c1 = arith.constant 1 : index
    %c0_9 = arith.constant 0 : index
    %c0_10 = arith.constant 0 : index
    %9 = vector.load %arg2[%c1, %c0_9, %c0_10] : memref<9x128x128xbf16, #tpu.memory_space<vmem>>, vector<1x128x128xbf16>
    %10 = vector.shape_cast %9 : vector<1x128x128xbf16> to vector<128x128xbf16>
    %cst_11 = arith.constant dense<0.000000e+00> : vector<288x128xf32>
    %11 = tpu.matmul %8, %10, %cst_11 {dimension_numbers = #tpu.dot_dimension_numbers<[1], [0], [0], [1], [0, 0, 1, 1], [], []>} : vector<288x128xbf16>, vector<128x128xbf16>, vector<288x128xf32> -> vector<288x128xf32>
    %12 = arith.addf %7, %11 : vector<288x128xf32>
    %c0_12 = arith.constant 0 : index
    %c0_13 = arith.constant 0 : index
    %13 = vector.load %arg7[%c0_12, %c0_13] : memref<288x128xf32, #tpu.memory_space<vmem>>, vector<288x128xf32>
    tpu.vector_store %arg7[%c0_12, %c0_13], %12 {strides = array<i32>} : memref<288x128xf32, #tpu.memory_space<vmem>>, vector<288x128xf32>,
    %c0_14 = arith.constant 0 : index
    %c0_15 = arith.constant 0 : index
    %14 = vector.load %arg7[%c0_14, %c0_15] : memref<288x128xf32, #tpu.memory_space<vmem>>, vector<288x128xf32>
    %15 = vector.extract_strided_slice %1 {offsets = [2, 0], sizes = [288, 128], strides = [1, 1]} : vector<342x128xbf16> to vector<288x128xbf16>
    %c2 = arith.constant 2 : index
    %c0_16 = arith.constant 0 : index
    %c0_17 = arith.constant 0 : index
    %16 = vector.load %arg2[%c2, %c0_16, %c0_17] : memref<9x128x128xbf16, #tpu.memory_space<vmem>>, vector<1x128x128xbf16>
    %17 = vector.shape_cast %16 : vector<1x128x128xbf16> to vector<128x128xbf16>
    %cst_18 = arith.constant dense<0.000000e+00> : vector<288x128xf32>
    %18 = tpu.matmul %15, %17, %cst_18 {dimension_numbers = #tpu.dot_dimension_numbers<[1], [0], [0], [1], [0, 0, 1, 1], [], []>} : vector<288x128xbf16>, vector<128x128xbf16>, vector<288x128xf32> -> vector<288x128xf32>
    %19 = arith.addf %14, %18 : vector<288x128xf32>
    %c0_19 = arith.constant 0 : index
    %c0_20 = arith.constant 0 : index
    %20 = vector.load %arg7[%c0_19, %c0_20] : memref<288x128xf32, #tpu.memory_space<vmem>>, vector<288x128xf32>
    tpu.vector_store %arg7[%c0_19, %c0_20], %19 {strides = array<i32>} : memref<288x128xf32, #tpu.memory_space<vmem>>, vector<288x128xf32>,
    %c0_21 = arith.constant 0 : index
    %c0_22 = arith.constant 0 : index
    %21 = vector.load %arg7[%c0_21, %c0_22] : memref<288x128xf32, #tpu.memory_space<vmem>>, vector<288x128xf32>
    %22 = vector.extract_strided_slice %1 {offsets = [18, 0], sizes = [288, 128], strides = [1, 1]} : vector<342x128xbf16> to vector<288x128xbf16>
    %c3 = arith.constant 3 : index
    %c0_23 = arith.constant 0 : index
    %c0_24 = arith.constant 0 : index
    %23 = vector.load %arg2[%c3, %c0_23, %c0_24] : memref<9x128x128xbf16, #tpu.memory_space<vmem>>, vector<1x128x128xbf16>
    %24 = vector.shape_cast %23 : vector<1x128x128xbf16> to vector<128x128xbf16>
    %cst_25 = arith.constant dense<0.000000e+00> : vector<288x128xf32>
    %25 = tpu.matmul %22, %24, %cst_25 {dimension_numbers = #tpu.dot_dimension_numbers<[1], [0], [0], [1], [0, 0, 1, 1], [], []>} : vector<288x128xbf16>, vector<128x128xbf16>, vector<288x128xf32> -> vector<288x128xf32>
    %26 = arith.addf %21, %25 : vector<288x128xf32>
    %c0_26 = arith.constant 0 : index
    %c0_27 = arith.constant 0 : index
    %27 = vector.load %arg7[%c0_26, %c0_27] : memref<288x128xf32, #tpu.memory_space<vmem>>, vector<288x128xf32>
    tpu.vector_store %arg7[%c0_26, %c0_27], %26 {strides = array<i32>} : memref<288x128xf32, #tpu.memory_space<vmem>>, vector<288x128xf32>,
    %c0_28 = arith.constant 0 : index
    %c0_29 = arith.constant 0 : index
    %28 = vector.load %arg7[%c0_28, %c0_29] : memref<288x128xf32, #tpu.memory_space<vmem>>, vector<288x128xf32>
    %29 = vector.extract_strided_slice %1 {offsets = [19, 0], sizes = [288, 128], strides = [1, 1]} : vector<342x128xbf16> to vector<288x128xbf16>
    %c4 = arith.constant 4 : index
    %c0_30 = arith.constant 0 : index
    %c0_31 = arith.constant 0 : index
    %30 = vector.load %arg2[%c4, %c0_30, %c0_31] : memref<9x128x128xbf16, #tpu.memory_space<vmem>>, vector<1x128x128xbf16>
    %31 = vector.shape_cast %30 : vector<1x128x128xbf16> to vector<128x128xbf16>
    %cst_32 = arith.constant dense<0.000000e+00> : vector<288x128xf32>
    %32 = tpu.matmul %29, %31, %cst_32 {dimension_numbers = #tpu.dot_dimension_numbers<[1], [0], [0], [1], [0, 0, 1, 1], [], []>} : vector<288x128xbf16>, vector<128x128xbf16>, vector<288x128xf32> -> vector<288x128xf32>
    %33 = arith.addf %28, %32 : vector<288x128xf32>
    %c0_33 = arith.constant 0 : index
    %c0_34 = arith.constant 0 : index
    %34 = vector.load %arg7[%c0_33, %c0_34] : memref<288x128xf32, #tpu.memory_space<vmem>>, vector<288x128xf32>
    tpu.vector_store %arg7[%c0_33, %c0_34], %33 {strides = array<i32>} : memref<288x128xf32, #tpu.memory_space<vmem>>, vector<288x128xf32>,
    %c0_35 = arith.constant 0 : index
    %c0_36 = arith.constant 0 : index
    %35 = vector.load %arg7[%c0_35, %c0_36] : memref<288x128xf32, #tpu.memory_space<vmem>>, vector<288x128xf32>
    %36 = vector.extract_strided_slice %1 {offsets = [20, 0], sizes = [288, 128], strides = [1, 1]} : vector<342x128xbf16> to vector<288x128xbf16>
    %c5 = arith.constant 5 : index
    %c0_37 = arith.constant 0 : index
    %c0_38 = arith.constant 0 : index
    %37 = vector.load %arg2[%c5, %c0_37, %c0_38] : memref<9x128x128xbf16, #tpu.memory_space<vmem>>, vector<1x128x128xbf16>
    %38 = vector.shape_cast %37 : vector<1x128x128xbf16> to vector<128x128xbf16>
    %cst_39 = arith.constant dense<0.000000e+00> : vector<288x128xf32>
    %39 = tpu.matmul %36, %38, %cst_39 {dimension_numbers = #tpu.dot_dimension_numbers<[1], [0], [0], [1], [0, 0, 1, 1], [], []>} : vector<288x128xbf16>, vector<128x128xbf16>, vector<288x128xf32> -> vector<288x128xf32>
    %40 = arith.addf %35, %39 : vector<288x128xf32>
    %c0_40 = arith.constant 0 : index
    %c0_41 = arith.constant 0 : index
    %41 = vector.load %arg7[%c0_40, %c0_41] : memref<288x128xf32, #tpu.memory_space<vmem>>, vector<288x128xf32>
    tpu.vector_store %arg7[%c0_40, %c0_41], %40 {strides = array<i32>} : memref<288x128xf32, #tpu.memory_space<vmem>>, vector<288x128xf32>,
    %c0_42 = arith.constant 0 : index
    %c0_43 = arith.constant 0 : index
    %42 = vector.load %arg7[%c0_42, %c0_43] : memref<288x128xf32, #tpu.memory_space<vmem>>, vector<288x128xf32>
    %43 = vector.extract_strided_slice %1 {offsets = [36, 0], sizes = [288, 128], strides = [1, 1]} : vector<342x128xbf16> to vector<288x128xbf16>
    %c6 = arith.constant 6 : index
    %c0_44 = arith.constant 0 : index
    %c0_45 = arith.constant 0 : index
    %44 = vector.load %arg2[%c6, %c0_44, %c0_45] : memref<9x128x128xbf16, #tpu.memory_space<vmem>>, vector<1x128x128xbf16>
    %45 = vector.shape_cast %44 : vector<1x128x128xbf16> to vector<128x128xbf16>
    %cst_46 = arith.constant dense<0.000000e+00> : vector<288x128xf32>
    %46 = tpu.matmul %43, %45, %cst_46 {dimension_numbers = #tpu.dot_dimension_numbers<[1], [0], [0], [1], [0, 0, 1, 1], [], []>} : vector<288x128xbf16>, vector<128x128xbf16>, vector<288x128xf32> -> vector<288x128xf32>
    %47 = arith.addf %42, %46 : vector<288x128xf32>
    %c0_47 = arith.constant 0 : index
    %c0_48 = arith.constant 0 : index
    %48 = vector.load %arg7[%c0_47, %c0_48] : memref<288x128xf32, #tpu.memory_space<vmem>>, vector<288x128xf32>
    tpu.vector_store %arg7[%c0_47, %c0_48], %47 {strides = array<i32>} : memref<288x128xf32, #tpu.memory_space<vmem>>, vector<288x128xf32>,
    %c0_49 = arith.constant 0 : index
    %c0_50 = arith.constant 0 : index
    %49 = vector.load %arg7[%c0_49, %c0_50] : memref<288x128xf32, #tpu.memory_space<vmem>>, vector<288x128xf32>
    %50 = vector.extract_strided_slice %1 {offsets = [37, 0], sizes = [288, 128], strides = [1, 1]} : vector<342x128xbf16> to vector<288x128xbf16>
    %c7 = arith.constant 7 : index
    %c0_51 = arith.constant 0 : index
    %c0_52 = arith.constant 0 : index
    %51 = vector.load %arg2[%c7, %c0_51, %c0_52] : memref<9x128x128xbf16, #tpu.memory_space<vmem>>, vector<1x128x128xbf16>
    %52 = vector.shape_cast %51 : vector<1x128x128xbf16> to vector<128x128xbf16>
    %cst_53 = arith.constant dense<0.000000e+00> : vector<288x128xf32>
    %53 = tpu.matmul %50, %52, %cst_53 {dimension_numbers = #tpu.dot_dimension_numbers<[1], [0], [0], [1], [0, 0, 1, 1], [], []>} : vector<288x128xbf16>, vector<128x128xbf16>, vector<288x128xf32> -> vector<288x128xf32>
    %54 = arith.addf %49, %53 : vector<288x128xf32>
    %c0_54 = arith.constant 0 : index
    %c0_55 = arith.constant 0 : index
    %55 = vector.load %arg7[%c0_54, %c0_55] : memref<288x128xf32, #tpu.memory_space<vmem>>, vector<288x128xf32>
    tpu.vector_store %arg7[%c0_54, %c0_55], %54 {strides = array<i32>} : memref<288x128xf32, #tpu.memory_space<vmem>>, vector<288x128xf32>,
    %c0_56 = arith.constant 0 : index
    %c0_57 = arith.constant 0 : index
    %56 = vector.load %arg7[%c0_56, %c0_57] : memref<288x128xf32, #tpu.memory_space<vmem>>, vector<288x128xf32>
    %57 = vector.extract_strided_slice %1 {offsets = [38, 0], sizes = [288, 128], strides = [1, 1]} : vector<342x128xbf16> to vector<288x128xbf16>
    %c8 = arith.constant 8 : index
    %c0_58 = arith.constant 0 : index
    %c0_59 = arith.constant 0 : index
    %58 = vector.load %arg2[%c8, %c0_58, %c0_59] : memref<9x128x128xbf16, #tpu.memory_space<vmem>>, vector<1x128x128xbf16>
    %59 = vector.shape_cast %58 : vector<1x128x128xbf16> to vector<128x128xbf16>
    %cst_60 = arith.constant dense<0.000000e+00> : vector<288x128xf32>
    %60 = tpu.matmul %57, %59, %cst_60 {dimension_numbers = #tpu.dot_dimension_numbers<[1], [0], [0], [1], [0, 0, 1, 1], [], []>} : vector<288x128xbf16>, vector<128x128xbf16>, vector<288x128xf32> -> vector<288x128xf32>
    %61 = arith.addf %56, %60 : vector<288x128xf32>
    %c0_61 = arith.constant 0 : index
    %c0_62 = arith.constant 0 : index
    %62 = vector.load %arg7[%c0_61, %c0_62] : memref<288x128xf32, #tpu.memory_space<vmem>>, vector<288x128xf32>
    tpu.vector_store %arg7[%c0_61, %c0_62], %61 {strides = array<i32>} : memref<288x128xf32, #tpu.memory_space<vmem>>, vector<288x128xf32>,
    %c0_63 = arith.constant 0 : index
    %c0_64 = arith.constant 0 : index
    %63 = vector.load %arg7[%c0_63, %c0_64] : memref<288x128xf32, #tpu.memory_space<vmem>>, vector<288x128xf32>
    %c0_65 = arith.constant 0 : index
    %c0_66 = arith.constant 0 : index
    %64 = vector.load %arg3[%c0_65, %c0_66] : memref<1x128xf32, #tpu.memory_space<vmem>>, vector<1x128xf32>
    %65 = vector.broadcast %64 : vector<1x128xf32> to vector<288x128xf32>
    %66 = arith.addf %63, %65 : vector<288x128xf32>
    %cst_67 = arith.constant 0.000000e+00 : f32
    %67 = vector.broadcast %cst_67 : f32 to vector<288x128xf32>
    %68 = arith.cmpf ogt, %66, %67 : vector<288x128xf32>
    %cst_68 = arith.constant 1.000000e-01 : f32
    %69 = vector.broadcast %cst_68 : f32 to vector<288x128xf32>
    %70 = arith.mulf %69, %66 : vector<288x128xf32>
    %71 = arith.select %68, %66, %70 : vector<288x128xi1>, vector<288x128xf32>
    %72 = arith.truncf %71 : vector<288x128xf32> to vector<288x128xbf16>
    %c0_69 = arith.constant 0 : index
    %c0_70 = arith.constant 0 : index
    %73 = vector.load %arg4[%c0_69, %c0_70] : memref<128x128xbf16, #tpu.memory_space<vmem>>, vector<128x128xbf16>
    %cst_71 = arith.constant dense<0.000000e+00> : vector<288x128xf32>
    %74 = tpu.matmul %72, %73, %cst_71 {dimension_numbers = #tpu.dot_dimension_numbers<[1], [0], [0], [1], [0, 0, 1, 1], [], []>} : vector<288x128xbf16>, vector<128x128xbf16>, vector<288x128xf32> -> vector<288x128xf32>
    %c0_72 = arith.constant 0 : index
    %c0_73 = arith.constant 0 : index
    %75 = vector.load %arg5[%c0_72, %c0_73] : memref<1x128xf32, #tpu.memory_space<vmem>>, vector<1x128xf32>
    %76 = vector.broadcast %75 : vector<1x128xf32> to vector<288x128xf32>
    %77 = arith.addf %74, %76 : vector<288x128xf32>
    %78 = arith.truncf %77 : vector<288x128xf32> to vector<288x128xbf16>
    %c0_74 = arith.constant 0 : index
    %c0_75 = arith.constant 0 : index
    %c0_76 = arith.constant 0 : index
    %79 = vector.load %arg6[%c0_74, %c0_75, %c0_76] : memref<1x288x128xbf16, #tpu.memory_space<vmem>>, vector<1x288x128xbf16>
    %80 = vector.shape_cast %79 : vector<1x288x128xbf16> to vector<288x128xbf16>
    %81 = vector.shape_cast %78 : vector<288x128xbf16> to vector<1x288x128xbf16>
    tpu.vector_store %arg6[%c0_74, %c0_75, %c0_76], %81 {strides = array<i32>} : memref<1x288x128xbf16, #tpu.memory_space<vmem>>, vector<1x288x128xbf16>,
    return
  }
  func.func @transform_0(%arg0: i32) -> (i32, i32, i32) {
    %c0_i32 = arith.constant 0 : i32
    %c0_i32_0 = arith.constant 0 : i32
    %c0_i32_1 = arith.constant 0 : i32
    return %arg0, %c0_i32, %c0_i32_0 : i32, i32, i32
  }
  func.func @transform_1(%arg0: i32) -> (i32, i32, i32) {
    %c0_i32 = arith.constant 0 : i32
    %c0_i32_0 = arith.constant 0 : i32
    %c0_i32_1 = arith.constant 0 : i32
    %c0_i32_2 = arith.constant 0 : i32
    return %c0_i32, %c0_i32_0, %c0_i32_1 : i32, i32, i32
  }
  func.func @transform_2(%arg0: i32) -> (i32, i32) {
    %c0_i32 = arith.constant 0 : i32
    %c0_i32_0 = arith.constant 0 : i32
    %c0_i32_1 = arith.constant 0 : i32
    return %c0_i32, %c0_i32_0 : i32, i32
  }
  func.func @transform_3(%arg0: i32) -> (i32, i32) {
    %c0_i32 = arith.constant 0 : i32
    %c0_i32_0 = arith.constant 0 : i32
    %c0_i32_1 = arith.constant 0 : i32
    return %c0_i32, %c0_i32_0 : i32, i32
  }
  func.func @transform_4(%arg0: i32) -> (i32, i32) {
    %c0_i32 = arith.constant 0 : i32
    %c0_i32_0 = arith.constant 0 : i32
    %c0_i32_1 = arith.constant 0 : i32
    return %c0_i32, %c0_i32_0 : i32, i32
  }
  func.func @transform_5(%arg0: i32) -> (i32, i32, i32) {
    %c0_i32 = arith.constant 0 : i32
    %c0_i32_0 = arith.constant 0 : i32
    %c0_i32_1 = arith.constant 0 : i32
    return %arg0, %c0_i32, %c0_i32_0 : i32, i32, i32
  }
}

</mosaic_0001>

<llo_original>
// kernel: scale_prediction_pallas.1
$region0: #{scale_prediction_pallas.1}
  #allocation0 [shape = 'u32[]', space=smem, size = 0x4, offset = 0x4, fixed_abs, tag = 'smem constant byte address 0x4 - core index']
  #allocation1 [shape = 'u32[144,128]{1,0:T(1,128)}', space=vmem, size = 0x12000, scoped, tag = 'internal scratch']
  #allocation2 [shape = 'f32[288,128]{1,0:T(8,128)}', space=vmem, size = 0x24000, scoped, tag = 'scratch operand']
  %s0 = inlined_call_operand.vmem [shape: bf16[2,342,128], index: 0, kind: input, shape index: {}]
  %s1 = inlined_call_operand.vmem [shape: bf16[9,128,128], index: 1, kind: input, shape index: {}]
  %s2 = inlined_call_operand.vmem [shape: f32[1,128], index: 2, kind: input, shape index: {}]
  %s3 = inlined_call_operand.vmem [shape: bf16[128,128], index: 3, kind: input, shape index: {}]
  %s4 = inlined_call_operand.vmem [shape: f32[1,128], index: 4, kind: input, shape index: {}]
  %s5 = inlined_call_operand.vmem [shape: bf16[2,288,128], index: 5, kind: output, shape index: {}]
  %s6 = sld [smem:[#allocation0]]
  $region53: #{scale_prediction_pallas.1} parent=0
    _
  %s8 = ssub.s32 1, %s6
  %s9 = scalar_select 0, %s8, %s6
  loop: start=0, step=1, limit=4
  $region2: #{scale_prediction_pallas.1} parent=0 // loop_pre_header
    _
  $region3: #{scale_prediction_pallas.1} parent=0 // loop_header
    %s11 = sphi 0, %s15
    %p12 = scmp.ge.s32.totalorder %s11, 4
    %s21 = sphi 0, %s23
    %s24 = sphi 0, %s21
    %s25 = sphi 0, %s24
    %s41 = sphi 0, %s25
    %s45 = sphi 0, %s45
    %s47 = sphi 0, %s45
    %s48 = sphi 0, %s47
    %s62 = sphi 0, %s48
    %s66 = sphi 0, %s66
    %s68 = sphi 0, %s66
    %s69 = sphi 0, %s68
    %s83 = sphi 0, %s69
    %s87 = sphi 0, %s87
    %s89 = sphi 0, %s87
    %s90 = sphi 0, %s89
    %s104 = sphi 0, %s90
    %s108 = sphi 0, %s108
    %s110 = sphi 0, %s108
    %s111 = sphi 0, %s110
    %s125 = sphi 0, %s111
    %s131 = sphi 0, %s133
    %s134 = sphi 0, %s131
    %s135 = sphi 0, %s134
    %s151 = sphi 0, %s135
  $region4: #{scale_prediction_pallas.1} parent=0 // loop_header_branch
    %14 = sbr.rel (%p12) target = $region8
  $region5: #{scale_prediction_pallas.1} parent=0 // loop_body
    %s16 = ssub.s32 %s11, 1
    %s17 = ssub.s32 %s11, 2
    %s18 = sadd.s32 %s11, 1
    %s19 = ssub.s32 %s11, %s18
    %p20 = scmp.eq.s32.totalorder %s19, 0
    %s22 = sadd.s32 %s21, 1
    %s23 = scalar_select %p20, %s21, %s22
    %p26 = pneg %p20
    %p27 = scmp.eq.s32.totalorder %s11, 1
    %p28 = por %p26, %p27
    %p29 = scmp.ne.s32.totalorder %s21, %s24
    %p30 = scmp.eq.s32.totalorder %s11, 0
    %p31 = por %p29, %p30
    %p32 = scmp.ne.s32.totalorder %s21, %s24
    %p33 = scmp.eq.s32.totalorder %s16, 1
    %p34 = por %p32, %p33
    %p35 = scmp.ne.s32.totalorder %s24, %s25
    %p36 = scmp.eq.s32.totalorder %s16, 0
    %p37 = por %p35, %p36
    %p38 = scmp.ne.s32.totalorder %s24, %s25
    %p39 = scmp.eq.s32.totalorder %s17, 1
    %p40 = por %p38, %p39
    %p42 = scmp.ne.s32.totalorder %s25, %s41
    %p43 = scmp.eq.s32.totalorder %s17, 0
    %p44 = por %p42, %p43
    %s46 = sadd.s32 %s45, 1
    %p49 = scmp.eq.s32.totalorder %s11, 1
    %p50 = scmp.ne.s32.totalorder %s45, %s47
    %p51 = scmp.eq.s32.totalorder %s11, 0
    %p52 = por %p50, %p51
    %p53 = scmp.ne.s32.totalorder %s45, %s47
    %p54 = scmp.eq.s32.totalorder %s16, 1
    %p55 = por %p53, %p54
    %p56 = scmp.ne.s32.totalorder %s47, %s48
    %p57 = scmp.eq.s32.totalorder %s16, 0
    %p58 = por %p56, %p57
    %p59 = scmp.ne.s32.totalorder %s47, %s48
    %p60 = scmp.eq.s32.totalorder %s17, 1
    %p61 = por %p59, %p60
    %p63 = scmp.ne.s32.totalorder %s48, %s62
    %p64 = scmp.eq.s32.totalorder %s17, 0
    %p65 = por %p63, %p64
    %s67 = sadd.s32 %s66, 1
    %p70 = scmp.eq.s32.totalorder %s11, 1
    %p71 = scmp.ne.s32.totalorder %s66, %s68
    %p72 = scmp.eq.s32.totalorder %s11, 0
    %p73 = por %p71, %p72
    %p74 = scmp.ne.s32.totalorder %s66, %s68
    %p75 = scmp.eq.s32.totalorder %s16, 1
    %p76 = por %p74, %p75
    %p77 = scmp.ne.s32.totalorder %s68, %s69
    %p78 = scmp.eq.s32.totalorder %s16, 0
    %p79 = por %p77, %p78
    %p80 = scmp.ne.s32.totalorder %s68, %s69
    %p81 = scmp.eq.s32.totalorder %s17, 1
    %p82 = por %p80, %p81
    %p84 = scmp.ne.s32.totalorder %s69, %s83
    %p85 = scmp.eq.s32.totalorder %s17, 0
    %p86 = por %p84, %p85
    %s88 = sadd.s32 %s87, 1
    %p91 = scmp.eq.s32.totalorder %s11, 1
    %p92 = scmp.ne.s32.totalorder %s87, %s89
    %p93 = scmp.eq.s32.totalorder %s11, 0
    %p94 = por %p92, %p93
    %p95 = scmp.ne.s32.totalorder %s87, %s89
    %p96 = scmp.eq.s32.totalorder %s16, 1
    %p97 = por %p95, %p96
    %p98 = scmp.ne.s32.totalorder %s89, %s90
    %p99 = scmp.eq.s32.totalorder %s16, 0
    %p100 = por %p98, %p99
    %p101 = scmp.ne.s32.totalorder %s89, %s90
    %p102 = scmp.eq.s32.totalorder %s17, 1
    %p103 = por %p101, %p102
    %p105 = scmp.ne.s32.totalorder %s90, %s104
    %p106 = scmp.eq.s32.totalorder %s17, 0
    %p107 = por %p105, %p106
    %s109 = sadd.s32 %s108, 1
    %p112 = scmp.eq.s32.totalorder %s11, 1
    %p113 = scmp.ne.s32.totalorder %s108, %s110
    %p114 = scmp.eq.s32.totalorder %s11, 0
    %p115 = por %p113, %p114
    %p116 = scmp.ne.s32.totalorder %s108, %s110
    %p117 = scmp.eq.s32.totalorder %s16, 1
    %p118 = por %p116, %p117
    %p119 = scmp.ne.s32.totalorder %s110, %s111
    %p120 = scmp.eq.s32.totalorder %s16, 0
    %p121 = por %p119, %p120
    %p122 = scmp.ne.s32.totalorder %s110, %s111
    %p123 = scmp.eq.s32.totalorder %s17, 1
    %p124 = por %p122, %p123
    %p126 = scmp.ne.s32.totalorder %s111, %s125
    %p127 = scmp.eq.s32.totalorder %s17, 0
    %p128 = por %p126, %p127
    %s129 = ssub.s32 %s11, %s18
    %p130 = scmp.eq.s32.totalorder %s129, 0
    %s132 = sadd.s32 %s131, 1
    %s133 = scalar_select %p130, %s131, %s132
    %p136 = pneg %p130
    %p137 = scmp.eq.s32.totalorder %s11, 1
    %p138 = por %p136, %p137
    %p139 = scmp.ne.s32.totalorder %s131, %s134
    %p140 = scmp.eq.s32.totalorder %s11, 0
    %p141 = por %p139, %p140
    %p142 = scmp.ne.s32.totalorder %s131, %s134
    %p143 = scmp.eq.s32.totalorder %s16, 1
    %p144 = por %p142, %p143
    %p145 = scmp.ne.s32.totalorder %s134, %s135
    %p146 = scmp.eq.s32.totalorder %s16, 0
    %p147 = por %p145, %p146
    %p148 = scmp.ne.s32.totalorder %s134, %s135
    %p149 = scmp.eq.s32.totalorder %s17, 1
    %p150 = por %p148, %p149
    %p152 = scmp.ne.s32.totalorder %s135, %s151
    %p153 = scmp.eq.s32.totalorder %s17, 0
    %p154 = por %p152, %p153
    %p155 = scmp.le.s32.totalorder 1, %s11
    %p156 = scmp.lt.s32.totalorder %s11, 3
    %p157 = pnand %p155, %p156
    %p158 = pneg %p157
    // Predicated region
    $region9: #{scale_prediction_pallas.1} parent=5 // pred_check
      _
    $region10: #{scale_prediction_pallas.1} parent=5 // pred_check_branch
      %160 = sbr.rel (%p157) target = $region12
    $region11: #{scale_prediction_pallas.1} parent=5 // pred_region
      %s161 = ssub.s32 %s11, 1
      // Predicated region
      $region13: #{scale_prediction_pallas.1} parent=11 // pred_check
        %p162 = pneg %p58
      $region14: #{scale_prediction_pallas.1} parent=11 // pred_check_branch
        %164 = sbr.rel (%p162) target = $region16
      $region15: #{scale_prediction_pallas.1} parent=11 // pred_region
        _
      $region16: #{scale_prediction_pallas.1} parent=11 // pred_fallthru
        _
      // Predicated region
      $region17: #{scale_prediction_pallas.1} parent=11 // pred_check
        %p165 = pneg %p79
      $region18: #{scale_prediction_pallas.1} parent=11 // pred_check_branch
        %167 = sbr.rel (%p165) target = $region20
      $region19: #{scale_prediction_pallas.1} parent=11 // pred_region
        _
      $region20: #{scale_prediction_pallas.1} parent=11 // pred_fallthru
        _
      // Predicated region
      $region21: #{scale_prediction_pallas.1} parent=11 // pred_check
        %p168 = pneg %p100
      $region22: #{scale_prediction_pallas.1} parent=11 // pred_check_branch
        %170 = sbr.rel (%p168) target = $region24
      $region23: #{scale_prediction_pallas.1} parent=11 // pred_region
        _
      $region24: #{scale_prediction_pallas.1} parent=11 // pred_fallthru
        _
      // Predicated region
      $region25: #{scale_prediction_pallas.1} parent=11 // pred_check
        %p171 = pneg %p121
      $region26: #{scale_prediction_pallas.1} parent=11 // pred_check_branch
        %173 = sbr.rel (%p171) target = $region28
      $region27: #{scale_prediction_pallas.1} parent=11 // pred_region
        _
      $region28: #{scale_prediction_pallas.1} parent=11 // pred_fallthru
        _
    $region12: #{scale_prediction_pallas.1} parent=5 // pred_fallthru
      _
    %p174 = scmp.lt.s32.totalorder %s11, 2
    // Predicated region
    $region29: #{scale_prediction_pallas.1} parent=5 // pred_check
      %p175 = pneg %p174
    $region30: #{scale_prediction_pallas.1} parent=5 // pred_check_branch
      %177 = sbr.rel (%p175) target = $region32
    $region31: #{scale_prediction_pallas.1} parent=5 // pred_region
      // Predicated region
      $region33: #{scale_prediction_pallas.1} parent=31 // pred_check
        %p178 = pneg %p31
      $region34: #{scale_prediction_pallas.1} parent=31 // pred_check_branch
        %180 = sbr.rel (%p178) target = $region36
      $region35: #{scale_prediction_pallas.1} parent=31 // pred_region
        %p181 = scmp.lt.s32.totalorder %s11, 1
        %s182 = scalar_select %p181, %s11, 1
        %s183 = smul.addr %s182, 43
        %s184 = smul.addr %s183, 4
        %s185 = scalar_lea.vmem %s0, %s184
      $region36: #{scale_prediction_pallas.1} parent=31 // pred_fallthru
        _
    $region32: #{scale_prediction_pallas.1} parent=5 // pred_fallthru
      _
    %p186 = scmp.le.s32.totalorder 1, %s11
    %p187 = scmp.lt.s32.totalorder %s11, 3
    %p188 = pnand %p186, %p187
    %p189 = pneg %p188
    // Predicated region
    $region37: #{scale_prediction_pallas.1} parent=5 // pred_check
      _
    $region38: #{scale_prediction_pallas.1} parent=5 // pred_check_branch
      %191 = sbr.rel (%p188) target = $region40
    $region39: #{scale_prediction_pallas.1} parent=5 // pred_region
      %s192 = ssub.s32 %s11, 1
      %p193 = scmp.lt.s32.totalorder %s16, 1
      %s194 = scalar_select %p193, %s16, 1
      %s195 = smul.addr %s194, 43
      %s196 = smul.addr %s195, 4
      %s197 = scalar_lea.vmem %s0, %s196
      %p198 = pneg %p37
      %p199 = pneg %p34
      %p200 = pneg %p58
      %p201 = pneg %p55
      %p202 = pneg %p79
      %p203 = pneg %p76
      %p204 = pneg %p100
      %p205 = pneg %p97
      %p206 = pneg %p121
      %p207 = pneg %p118
      %p208 = pneg %p147
      %p209 = pneg %p144
      %p210 = scmp.lt.s32.totalorder %s16, 1
      %s211 = scalar_select %p210, %s16, 1
      %s212 = smul.addr %s211, 36
      %s213 = smul.addr %s212, 4
      %s214 = scalar_lea.vmem %s5, %s213
      %p215 = scmp.lt.s32.totalorder %s16, 1
      %s216 = scalar_select %p215, %s16, 1
      %s217 = smul.addr %s216, 43
      %s218 = smul.addr %s217, 4
      %s219 = scalar_lea.vmem %s0, %s218
      %p220 = scmp.lt.s32.totalorder %s16, 1
      %s221 = scalar_select %p220, %s16, 1
      %s222 = smul.addr %s221, 36
      %s223 = smul.addr %s222, 4
      %s224 = scalar_lea.vmem %s5, %s223
      %v226 = vld [vmem:[%s219] sm:$0xf]
      %v227 = vld [vmem:[%s219 + $0x4] sm:$0xf]
      %v228 = vld [vmem:[%s219 + $0x8] sm:$0xf]
      %v229 = vld [vmem:[%s219 + $0xc] sm:$0xf]
      %v230 = vld [vmem:[%s219 + $0x10] sm:$0xf]
      %v231 = vld [vmem:[%s219 + $0x14] sm:$0xf]
      %v232 = vld [vmem:[%s219 + $0x18] sm:$0xf]
      %v233 = vld [vmem:[%s219 + $0x1c] sm:$0xf]
      %v234 = vld [vmem:[%s219 + $0x20] sm:$0xf]
      %v235 = vld [vmem:[%s219 + $0x24] sm:$0xf]
      %v236 = vld [vmem:[%s219 + $0x28] sm:$0xf]
      %v237 = vld [vmem:[%s219 + $0x2c] sm:$0xf]
      %v238 = vld [vmem:[%s219 + $0x30] sm:$0xf]
      %v239 = vld [vmem:[%s219 + $0x34] sm:$0xf]
      %v240 = vld [vmem:[%s219 + $0x38] sm:$0xf]
      %v241 = vld [vmem:[%s219 + $0x3c] sm:$0xf]
      %v242 = vld [vmem:[%s219 + $0x40] sm:$0xf]
      %v243 = vld [vmem:[%s219 + $0x44] sm:$0xf]
      %v244 = vld [vmem:[%s219 + $0x48] sm:$0xf]
      %v245 = vld [vmem:[%s219 + $0x4c] sm:$0xf]
      %v246 = vld [vmem:[%s219 + $0x50] sm:$0xf]
      %v247 = vld [vmem:[%s219 + $0x54] sm:$0xf]
      %v248 = vld [vmem:[%s219 + $0x58] sm:$0xf]
      %v249 = vld [vmem:[%s219 + $0x5c] sm:$0xf]
      %v250 = vld [vmem:[%s219 + $0x60] sm:$0xf]
      %v251 = vld [vmem:[%s219 + $0x64] sm:$0xf]
      %v252 = vld [vmem:[%s219 + $0x68] sm:$0xf]
      %v253 = vld [vmem:[%s219 + $0x6c] sm:$0xf]
      %v254 = vld [vmem:[%s219 + $0x70] sm:$0xf]
      %v255 = vld [vmem:[%s219 + $0x74] sm:$0xf]
      %v256 = vld [vmem:[%s219 + $0x78] sm:$0xf]
      %v257 = vld [vmem:[%s219 + $0x7c] sm:$0xf]
      %v258 = vld [vmem:[%s219 + $0x80] sm:$0xf]
      %v259 = vld [vmem:[%s219 + $0x84] sm:$0xf]
      %v260 = vld [vmem:[%s219 + $0x88] sm:$0xf]
      %v261 = vld [vmem:[%s219 + $0x8c] sm:$0xf]
      %v262 = vld [vmem:[%s219 + $0x90] sm:$0xf]
      %v263 = vld [vmem:[%s219 + $0x94] sm:$0xf]
      %v264 = vld [vmem:[%s219 + $0x98] sm:$0xf]
      %v265 = vld [vmem:[%s219 + $0x9c] sm:$0xf]
      %v266 = vld [vmem:[%s219 + $0xa0] sm:$0xf]
      %v267 = vld [vmem:[%s1] sm:$0xf]
      %v268 = vld [vmem:[%s1 + $0x4] sm:$0xf]
      %v269 = vld [vmem:[%s1 + $0x8] sm:$0xf]
      %v270 = vld [vmem:[%s1 + $0xc] sm:$0xf]
      %v271 = vld [vmem:[%s1 + $0x10] sm:$0xf]
      %v272 = vld [vmem:[%s1 + $0x14] sm:$0xf]
      %v273 = vld [vmem:[%s1 + $0x18] sm:$0xf]
      %v274 = vld [vmem:[%s1 + $0x1c] sm:$0xf]
      %v275 = vld [vmem:[%s1 + $0x20] sm:$0xf]
      %v276 = vld [vmem:[%s1 + $0x24] sm:$0xf]
      %v277 = vld [vmem:[%s1 + $0x28] sm:$0xf]
      %v278 = vld [vmem:[%s1 + $0x2c] sm:$0xf]
      %v279 = vld [vmem:[%s1 + $0x30] sm:$0xf]
      %v280 = vld [vmem:[%s1 + $0x34] sm:$0xf]
      %v281 = vld [vmem:[%s1 + $0x38] sm:$0xf]
      %v282 = vld [vmem:[%s1 + $0x3c] sm:$0xf]
      %v319 = vunpack.c.l.b16 %v226
      %v320 = vunpack.c.l.b16 %v227
      %v321 = vunpack.c.l.b16 %v228
      %v322 = vunpack.c.l.b16 %v229
      %v323 = vunpack.c.l.b16 %v230
      %v324 = vunpack.c.l.b16 %v231
      %v325 = vunpack.c.l.b16 %v232
      %v326 = vunpack.c.l.b16 %v233
      %v327 = vunpack.c.l.b16 %v234
      %v328 = vunpack.c.l.b16 %v235
      %v329 = vunpack.c.l.b16 %v236
      %v330 = vunpack.c.l.b16 %v237
      %v331 = vunpack.c.l.b16 %v238
      %v332 = vunpack.c.l.b16 %v239
      %v333 = vunpack.c.l.b16 %v240
      %v334 = vunpack.c.l.b16 %v241
      %v335 = vunpack.c.l.b16 %v242
      %v336 = vunpack.c.l.b16 %v243
      %v337 = vunpack.c.l.b16 %v244
      %v338 = vunpack.c.l.b16 %v245
      %v339 = vunpack.c.l.b16 %v246
      %v340 = vunpack.c.l.b16 %v247
      %v341 = vunpack.c.l.b16 %v248
      %v342 = vunpack.c.l.b16 %v249
      %v343 = vunpack.c.l.b16 %v250
      %v344 = vunpack.c.l.b16 %v251
      %v345 = vunpack.c.l.b16 %v252
      %v346 = vunpack.c.l.b16 %v253
      %v347 = vunpack.c.l.b16 %v254
      %v348 = vunpack.c.l.b16 %v255
      %v349 = vunpack.c.l.b16 %v256
      %v350 = vunpack.c.l.b16 %v257
      %v351 = vunpack.c.l.b16 %v258
      %v352 = vunpack.c.l.b16 %v259
      %v353 = vunpack.c.l.b16 %v260
      %v354 = vunpack.c.l.b16 %v261
      %v355 = vpack.c.b16 %v320, %v319
      %v356 = vpack.c.b16 %v322, %v321
      %v357 = vpack.c.b16 %v324, %v323
      %v358 = vpack.c.b16 %v326, %v325
      %v359 = vpack.c.b16 %v328, %v327
      %v360 = vpack.c.b16 %v330, %v329
      %v361 = vpack.c.b16 %v332, %v331
      %v362 = vpack.c.b16 %v334, %v333
      %v363 = vpack.c.b16 %v336, %v335
      %v364 = vpack.c.b16 %v338, %v337
      %v365 = vpack.c.b16 %v340, %v339
      %v366 = vpack.c.b16 %v342, %v341
      %v367 = vpack.c.b16 %v344, %v343
      %v368 = vpack.c.b16 %v346, %v345
      %v369 = vpack.c.b16 %v348, %v347
      %v370 = vpack.c.b16 %v350, %v349
      %v371 = vpack.c.b16 %v352, %v351
      %v372 = vpack.c.b16 %v354, %v353
      %v407 = vunpack.c.l.b16 %v267
      %v408 = vunpack.c.l.b16 %v268
      %v409 = vunpack.c.l.b16 %v269
      %v410 = vunpack.c.l.b16 %v270
      %v411 = vunpack.c.l.b16 %v271
      %v412 = vunpack.c.l.b16 %v272
      %v413 = vunpack.c.l.b16 %v273
      %v414 = vunpack.c.l.b16 %v274
      %v415 = vunpack.c.l.b16 %v275
      %v416 = vunpack.c.l.b16 %v276
      %v417 = vunpack.c.l.b16 %v277
      %v418 = vunpack.c.l.b16 %v278
      %v419 = vunpack.c.l.b16 %v279
      %v420 = vunpack.c.l.b16 %v280
      %v421 = vunpack.c.l.b16 %v281
      %v422 = vunpack.c.l.b16 %v282
      %v423 = vpack.c.b16 %v408, %v407
      %v424 = vpack.c.b16 %v410, %v409
      %v425 = vpack.c.b16 %v412, %v411
      %v426 = vpack.c.b16 %v414, %v413
      %v427 = vpack.c.b16 %v416, %v415
      %v428 = vpack.c.b16 %v418, %v417
      %v429 = vpack.c.b16 %v420, %v419
      %v430 = vpack.c.b16 %v422, %v421
      %439 = vmatprep.subr.bf16.mxu0 0
      %440 = vmatpush1.bf16.msra.mxu0 %v430
      %441 = vmatprep.subr.bf16.mxu0 0
      %442 = vmatpush1.bf16.msra.mxu0 %v429
      %443 = vmatprep.subr.bf16.mxu0 0
      %444 = vmatpush1.bf16.msra.mxu0 %v428
      %445 = vmatprep.subr.bf16.mxu0 0
      %446 = vmatpush1.bf16.msra.mxu0 %v427
      %447 = vmatprep.subr.bf16.mxu0 0
      %448 = vmatpush1.bf16.msra.mxu0 %v426
      %449 = vmatprep.subr.bf16.mxu0 0
      %450 = vmatpush1.bf16.msra.mxu0 %v425
      %451 = vmatprep.subr.bf16.mxu0 0
      %452 = vmatpush1.bf16.msra.mxu0 %v424
      %453 = vmatprep.subr.bf16.mxu0 0
      %454 = vmatpush1.bf16.msra.mxu0 %v423
      %455 = vmatprep.subr.bf16.mxu0 0
      %456 = vmatpush2.bf16.msra.mxu0 0
      %457 = vmatprep.subr.bf16.mxu0 0
      %458 = vmatpush2.bf16.msra.mxu0 0
      %459 = vmatprep.subr.bf16.mxu0 0
      %460 = vmatpush2.bf16.msra.mxu0 0
      %461 = vmatprep.subr.bf16.mxu0 0
      %462 = vmatpush2.bf16.msra.mxu0 0
      %463 = vmatprep.subr.bf16.mxu0 0
      %464 = vmatpush2.bf16.msra.mxu0 0
      %465 = vmatprep.subr.bf16.mxu0 0
      %466 = vmatpush2.bf16.msra.mxu0 0
      %467 = vmatprep.subr.bf16.mxu0 0
      %468 = vmatpush2.bf16.msra.mxu0 0
      %469 = vmatprep.subr.bf16.mxu0 0
      %470 = vmatpush2.bf16.msra.mxu0 0
      %471 = vmatprep.mubr.bf16.mxu0 0
      %472 = vmatmul.mubr.bf16.gmra.mxu0 %v355
      %v473 = vpop.f32.mrf.mxu0
      %v474 = vadd.f32 0.0, %v473
      %v475 = vpop.f32.mrf.mxu0
      %v476 = vpop.f32.mrf.mxu0
      %v477 = vadd.f32 0.0, %v476
      %v478 = vpop.f32.mrf.mxu0
      %479 = vmatprep.mubr.bf16.mxu0 0
      %480 = vmatmul.mubr.bf16.gmra.mxu0 %v356
      %v481 = vpop.f32.mrf.mxu0
      %v482 = vadd.f32 0.0, %v481
      %v483 = vpop.f32.mrf.mxu0
      %v484 = vpop.f32.mrf.mxu0
      %v485 = vadd.f32 0.0, %v484
      %v486 = vpop.f32.mrf.mxu0
      %487 = vmatprep.mubr.bf16.mxu0 0
      %488 = vmatmul.mubr.bf16.gmra.mxu0 %v357
      %v489 = vpop.f32.mrf.mxu0
      %v490 = vadd.f32 0.0, %v489
      %v491 = vpop.f32.mrf.mxu0
      %v492 = vpop.f32.mrf.mxu0
      %v493 = vadd.f32 0.0, %v492
      %v494 = vpop.f32.mrf.mxu0
      %495 = vmatprep.mubr.bf16.mxu0 0
      %496 = vmatmul.mubr.bf16.gmra.mxu0 %v358
      %v497 = vpop.f32.mrf.mxu0
      %v498 = vadd.f32 0.0, %v497
      %v499 = vpop.f32.mrf.mxu0
      %v500 = vpop.f32.mrf.mxu0
      %v501 = vadd.f32 0.0, %v500
      %v502 = vpop.f32.mrf.mxu0
      %503 = vmatprep.mubr.bf16.mxu0 0
      %504 = vmatmul.mubr.bf16.gmra.mxu0 %v359
      %v505 = vpop.f32.mrf.mxu0
      %v506 = vadd.f32 0.0, %v505
      %v507 = vpop.f32.mrf.mxu0
      %v508 = vpop.f32.mrf.mxu0
      %v509 = vadd.f32 0.0, %v508
      %v510 = vpop.f32.mrf.mxu0
      %511 = vmatprep.mubr.bf16.mxu0 0
      %512 = vmatmul.mubr.bf16.gmra.mxu0 %v360
      %v513 = vpop.f32.mrf.mxu0
      %v514 = vadd.f32 0.0, %v513
      %v515 = vpop.f32.mrf.mxu0
      %v516 = vpop.f32.mrf.mxu0
      %v517 = vadd.f32 0.0, %v516
      %v518 = vpop.f32.mrf.mxu0
      %519 = vmatprep.mubr.bf16.mxu0 0
      %520 = vmatmul.mubr.bf16.gmra.mxu0 %v361
      %v521 = vpop.f32.mrf.mxu0
      %v522 = vadd.f32 0.0, %v521
      %v523 = vpop.f32.mrf.mxu0
      %v524 = vpop.f32.mrf.mxu0
      %v525 = vadd.f32 0.0, %v524
      %v526 = vpop.f32.mrf.mxu0
      %527 = vmatprep.mubr.bf16.mxu0 0
      %528 = vmatmul.mubr.bf16.gmra.mxu0 %v362
      %v529 = vpop.f32.mrf.mxu0
      %v530 = vadd.f32 0.0, %v529
      %v531 = vpop.f32.mrf.mxu0
      %v532 = vpop.f32.mrf.mxu0
      %v533 = vadd.f32 0.0, %v532
      %v534 = vpop.f32.mrf.mxu0
      %535 = vmatprep.mubr.bf16.mxu0 0
      %536 = vmatmul.mubr.bf16.gmra.mxu0 %v363
      %v537 = vpop.f32.mrf.mxu0
      %v538 = vadd.f32 0.0, %v537
      %v539 = vpop.f32.mrf.mxu0
      %v540 = vpop.f32.mrf.mxu0
      %v541 = vadd.f32 0.0, %v540
      %v542 = vpop.f32.mrf.mxu0
      %543 = vmatprep.mubr.bf16.mxu0 0
      %544 = vmatmul.mubr.bf16.gmra.mxu0 %v364
      %v545 = vpop.f32.mrf.mxu0
      %v546 = vadd.f32 0.0, %v545
      %v547 = vpop.f32.mrf.mxu0
      %v548 = vpop.f32.mrf.mxu0
      %v549 = vadd.f32 0.0, %v548
      %v550 = vpop.f32.mrf.mxu0
      %551 = vmatprep.mubr.bf16.mxu0 0
      %552 = vmatmul.mubr.bf16.gmra.mxu0 %v365
      %v553 = vpop.f32.mrf.mxu0
      %v554 = vadd.f32 0.0, %v553
      %v555 = vpop.f32.mrf.mxu0
      %v556 = vpop.f32.mrf.mxu0
      %v557 = vadd.f32 0.0, %v556
      %v558 = vpop.f32.mrf.mxu0
      %559 = vmatprep.mubr.bf16.mxu0 0
      %560 = vmatmul.mubr.bf16.gmra.mxu0 %v366
      %v561 = vpop.f32.mrf.mxu0
      %v562 = vadd.f32 0.0, %v561
      %v563 = vpop.f32.mrf.mxu0
      %v564 = vpop.f32.mrf.mxu0
      %v565 = vadd.f32 0.0, %v564
      %v566 = vpop.f32.mrf.mxu0
      %567 = vmatprep.mubr.bf16.mxu0 0
      %568 = vmatmul.mubr.bf16.gmra.mxu0 %v367
      %v569 = vpop.f32.mrf.mxu0
      %v570 = vadd.f32 0.0, %v569
      %v571 = vpop.f32.mrf.mxu0
      %v572 = vpop.f32.mrf.mxu0
      %v573 = vadd.f32 0.0, %v572
      %v574 = vpop.f32.mrf.mxu0
      %575 = vmatprep.mubr.bf16.mxu0 0
      %576 = vmatmul.mubr.bf16.gmra.mxu0 %v368
      %v577 = vpop.f32.mrf.mxu0
      %v578 = vadd.f32 0.0, %v577
      %v579 = vpop.f32.mrf.mxu0
      %v580 = vpop.f32.mrf.mxu0
      %v581 = vadd.f32 0.0, %v580
      %v582 = vpop.f32.mrf.mxu0
      %583 = vmatprep.mubr.bf16.mxu0 0
      %584 = vmatmul.mubr.bf16.gmra.mxu0 %v369
      %v585 = vpop.f32.mrf.mxu0
      %v586 = vadd.f32 0.0, %v585
      %v587 = vpop.f32.mrf.mxu0
      %v588 = vpop.f32.mrf.mxu0
      %v589 = vadd.f32 0.0, %v588
      %v590 = vpop.f32.mrf.mxu0
      %591 = vmatprep.mubr.bf16.mxu0 0
      %592 = vmatmul.mubr.bf16.gmra.mxu0 %v370
      %v593 = vpop.f32.mrf.mxu0
      %v594 = vadd.f32 0.0, %v593
      %v595 = vpop.f32.mrf.mxu0
      %v596 = vpop.f32.mrf.mxu0
      %v597 = vadd.f32 0.0, %v596
      %v598 = vpop.f32.mrf.mxu0
      %599 = vmatprep.mubr.bf16.mxu0 0
      %600 = vmatmul.mubr.bf16.gmra.mxu0 %v371
      %v601 = vpop.f32.mrf.mxu0
      %v602 = vadd.f32 0.0, %v601
      %v603 = vpop.f32.mrf.mxu0
      %v604 = vpop.f32.mrf.mxu0
      %v605 = vadd.f32 0.0, %v604
      %v606 = vpop.f32.mrf.mxu0
      %607 = vmatprep.mubr.bf16.mxu0 0
      %608 = vmatmul.mubr.bf16.gmra.mxu0 %v372
      %v609 = vpop.f32.mrf.mxu0
      %v610 = vadd.f32 0.0, %v609
      %v611 = vpop.f32.mrf.mxu0
      %v612 = vpop.f32.mrf.mxu0
      %v613 = vadd.f32 0.0, %v612
      %v614 = vpop.f32.mrf.mxu0
      %615 = vdwg.mxu0
      %616 = vst [vmem:[#allocation2] sm:$0xff] %v474
      %617 = vst [vmem:[#allocation2 + $0x8] sm:$0xff] %v477
      %618 = vst [vmem:[#allocation2 + $0x10] sm:$0xff] %v482
      %619 = vst [vmem:[#allocation2 + $0x18] sm:$0xff] %v485
      %620 = vst [vmem:[#allocation2 + $0x20] sm:$0xff] %v490
      %621 = vst [vmem:[#allocation2 + $0x28] sm:$0xff] %v493
      %622 = vst [vmem:[#allocation2 + $0x30] sm:$0xff] %v498
      %623 = vst [vmem:[#allocation2 + $0x38] sm:$0xff] %v501
      %624 = vst [vmem:[#allocation2 + $0x40] sm:$0xff] %v506
      %625 = vst [vmem:[#allocation2 + $0x48] sm:$0xff] %v509
      %626 = vst [vmem:[#allocation2 + $0x50] sm:$0xff] %v514
      %627 = vst [vmem:[#allocation2 + $0x58] sm:$0xff] %v517
      %628 = vst [vmem:[#allocation2 + $0x60] sm:$0xff] %v522
      %629 = vst [vmem:[#allocation2 + $0x68] sm:$0xff] %v525
      %630 = vst [vmem:[#allocation2 + $0x70] sm:$0xff] %v530
      %631 = vst [vmem:[#allocation2 + $0x78] sm:$0xff] %v533
      %632 = vst [vmem:[#allocation2 + $0x80] sm:$0xff] %v538
      %633 = vst [vmem:[#allocation2 + $0x88] sm:$0xff] %v541
      %634 = vst [vmem:[#allocation2 + $0x90] sm:$0xff] %v546
      %635 = vst [vmem:[#allocation2 + $0x98] sm:$0xff] %v549
      %636 = vst [vmem:[#allocation2 + $0xa0] sm:$0xff] %v554
      %637 = vst [vmem:[#allocation2 + $0xa8] sm:$0xff] %v557
      %638 = vst [vmem:[#allocation2 + $0xb0] sm:$0xff] %v562
      %639 = vst [vmem:[#allocation2 + $0xb8] sm:$0xff] %v565
      %640 = vst [vmem:[#allocation2 + $0xc0] sm:$0xff] %v570
      %641 = vst [vmem:[#allocation2 + $0xc8] sm:$0xff] %v573
      %642 = vst [vmem:[#allocation2 + $0xd0] sm:$0xff] %v578
      %643 = vst [vmem:[#allocation2 + $0xd8] sm:$0xff] %v581
      %644 = vst [vmem:[#allocation2 + $0xe0] sm:$0xff] %v586
      %645 = vst [vmem:[#allocation2 + $0xe8] sm:$0xff] %v589
      %646 = vst [vmem:[#allocation2 + $0xf0] sm:$0xff] %v594
      %647 = vst [vmem:[#allocation2 + $0xf8] sm:$0xff] %v597
      %648 = vst [vmem:[#allocation2 + $0x100] sm:$0xff] %v602
      %649 = vst [vmem:[#allocation2 + $0x108] sm:$0xff] %v605
      %650 = vst [vmem:[#allocation2 + $0x110] sm:$0xff] %v610
      %651 = vst [vmem:[#allocation2 + $0x118] sm:$0xff] %v613
      %v652 = vld [vmem:[#allocation2] sm:$0xff]
      %v653 = vld [vmem:[#allocation2 + $0x8] sm:$0xff]
      %v654 = vld [vmem:[#allocation2 + $0x10] sm:$0xff]
      %v655 = vld [vmem:[#allocation2 + $0x18] sm:$0xff]
      %v656 = vld [vmem:[#allocation2 + $0x20] sm:$0xff]
      %v657 = vld [vmem:[#allocation2 + $0x28] sm:$0xff]
      %v658 = vld [vmem:[#allocation2 + $0x30] sm:$0xff]
      %v659 = vld [vmem:[#allocation2 + $0x38] sm:$0xff]
      %v660 = vld [vmem:[#allocation2 + $0x40] sm:$0xff]
      %v661 = vld [vmem:[#allocation2 + $0x48] sm:$0xff]
      %v662 = vld [vmem:[#allocation2 + $0x50] sm:$0xff]
      %v663 = vld [vmem:[#allocation2 + $0x58] sm:$0xff]
      %v664 = vld [vmem:[#allocation2 + $0x60] sm:$0xff]
      %v665 = vld [vmem:[#allocation2 + $0x68] sm:$0xff]
      %v666 = vld [vmem:[#allocation2 + $0x70] sm:$0xff]
      %v667 = vld [vmem:[#allocation2 + $0x78] sm:$0xff]
      %v668 = vld [vmem:[#allocation2 + $0x80] sm:$0xff]
      %v669 = vld [vmem:[#allocation2 + $0x88] sm:$0xff]
      %v670 = vld [vmem:[#allocation2 + $0x90] sm:$0xff]
      %v671 = vld [vmem:[#allocation2 + $0x98] sm:$0xff]
      %v672 = vld [vmem:[#allocation2 + $0xa0] sm:$0xff]
      %v673 = vld [vmem:[#allocation2 + $0xa8] sm:$0xff]
      %v674 = vld [vmem:[#allocation2 + $0xb0] sm:$0xff]
      %v675 = vld [vmem:[#allocation2 + $0xb8] sm:$0xff]
      %v676 = vld [vmem:[#allocation2 + $0xc0] sm:$0xff]
      %v677 = vld [vmem:[#allocation2 + $0xc8] sm:$0xff]
      %v678 = vld [vmem:[#allocation2 + $0xd0] sm:$0xff]
      %v679 = vld [vmem:[#allocation2 + $0xd8] sm:$0xff]
      %v680 = vld [vmem:[#allocation2 + $0xe0] sm:$0xff]
      %v681 = vld [vmem:[#allocation2 + $0xe8] sm:$0xff]
      %v682 = vld [vmem:[#allocation2 + $0xf0] sm:$0xff]
      %v683 = vld [vmem:[#allocation2 + $0xf8] sm:$0xff]
      %v684 = vld [vmem:[#allocation2 + $0x100] sm:$0xff]
      %v685 = vld [vmem:[#allocation2 + $0x108] sm:$0xff]
      %v686 = vld [vmem:[#allocation2 + $0x110] sm:$0xff]
      %v687 = vld [vmem:[#allocation2 + $0x118] sm:$0xff]
      %s688 = scalar_lea.vmem %s1, 64
      %v689 = vld [vmem:[%s688] sm:$0xf]
      %v690 = vld [vmem:[%s688 + $0x4] sm:$0xf]
      %v691 = vld [vmem:[%s688 + $0x8] sm:$0xf]
      %v692 = vld [vmem:[%s688 + $0xc] sm:$0xf]
      %v693 = vld [vmem:[%s688 + $0x10] sm:$0xf]
      %v694 = vld [vmem:[%s688 + $0x14] sm:$0xf]
      %v695 = vld [vmem:[%s688 + $0x18] sm:$0xf]
      %v696 = vld [vmem:[%s688 + $0x1c] sm:$0xf]
      %v697 = vld [vmem:[%s688 + $0x20] sm:$0xf]
      %v698 = vld [vmem:[%s688 + $0x24] sm:$0xf]
      %v699 = vld [vmem:[%s688 + $0x28] sm:$0xf]
      %v700 = vld [vmem:[%s688 + $0x2c] sm:$0xf]
      %v701 = vld [vmem:[%s688 + $0x30] sm:$0xf]
      %v702 = vld [vmem:[%s688 + $0x34] sm:$0xf]
      %v703 = vld [vmem:[%s688 + $0x38] sm:$0xf]
      %v704 = vld [vmem:[%s688 + $0x3c] sm:$0xf]
      %v706 = vunpack.c.l.b16 %v262
      %v707 = vpack.c.b16 %v706, %v706
      %vm708 = vsmask.f32 7424
      %v710 = vshrl.u32 %v355, 16
      %v712 = vshll.u32 %v355, 16
      %v714 = vrot.slane %v712, 1
      %v715 = vor.u32 %v710, %v714
      %v717 = vshll.u32 %v356, 16
      %v719 = vrot.slane %v717, 1
      %v720 = vsel %vm708, %v715, %v719
      %v721 = vshrl.u32 %v356, 16
      %v723 = vor.u32 %v721, %v719
      %v725 = vshll.u32 %v357, 16
      %v727 = vrot.slane %v725, 1
      %v728 = vsel %vm708, %v723, %v727
      %v729 = vshrl.u32 %v357, 16
      %v731 = vor.u32 %v729, %v727
      %v733 = vshll.u32 %v358, 16
      %v735 = vrot.slane %v733, 1
      %v736 = vsel %vm708, %v731, %v735
      %v737 = vshrl.u32 %v358, 16
      %v739 = vor.u32 %v737, %v735
      %v741 = vshll.u32 %v359, 16
      %v743 = vrot.slane %v741, 1
      %v744 = vsel %vm708, %v739, %v743
      %v745 = vshrl.u32 %v359, 16
      %v747 = vor.u32 %v745, %v743
      %v749 = vshll.u32 %v360, 16
      %v751 = vrot.slane %v749, 1
      %v752 = vsel %vm708, %v747, %v751
      %v753 = vshrl.u32 %v360, 16
      %v755 = vor.u32 %v753, %v751
      %v757 = vshll.u32 %v361, 16
      %v759 = vrot.slane %v757, 1
      %v760 = vsel %vm708, %v755, %v759
      %v761 = vshrl.u32 %v361, 16
      %v763 = vor.u32 %v761, %v759
      %v765 = vshll.u32 %v362, 16
      %v767 = vrot.slane %v765, 1
      %v768 = vsel %vm708, %v763, %v767
      %v769 = vshrl.u32 %v362, 16
      %v771 = vor.u32 %v769, %v767
      %v773 = vshll.u32 %v363, 16
      %v775 = vrot.slane %v773, 1
      %v776 = vsel %vm708, %v771, %v775
      %v777 = vshrl.u32 %v363, 16
      %v779 = vor.u32 %v777, %v775
      %v781 = vshll.u32 %v364, 16
      %v783 = vrot.slane %v781, 1
      %v784 = vsel %vm708, %v779, %v783
      %v785 = vshrl.u32 %v364, 16
      %v787 = vor.u32 %v785, %v783
      %v789 = vshll.u32 %v365, 16
      %v791 = vrot.slane %v789, 1
      %v792 = vsel %vm708, %v787, %v791
      %v793 = vshrl.u32 %v365, 16
      %v795 = vor.u32 %v793, %v791
      %v797 = vshll.u32 %v366, 16
      %v799 = vrot.slane %v797, 1
      %v800 = vsel %vm708, %v795, %v799
      %v801 = vshrl.u32 %v366, 16
      %v803 = vor.u32 %v801, %v799
      %v805 = vshll.u32 %v367, 16
      %v807 = vrot.slane %v805, 1
      %v808 = vsel %vm708, %v803, %v807
      %v809 = vshrl.u32 %v367, 16
      %v811 = vor.u32 %v809, %v807
      %v813 = vshll.u32 %v368, 16
      %v815 = vrot.slane %v813, 1
      %v816 = vsel %vm708, %v811, %v815
      %v817 = vshrl.u32 %v368, 16
      %v819 = vor.u32 %v817, %v815
      %v821 = vshll.u32 %v369, 16
      %v823 = vrot.slane %v821, 1
      %v824 = vsel %vm708, %v819, %v823
      %v825 = vshrl.u32 %v369, 16
      %v827 = vor.u32 %v825, %v823
      %v829 = vshll.u32 %v370, 16
      %v831 = vrot.slane %v829, 1
      %v832 = vsel %vm708, %v827, %v831
      %v833 = vshrl.u32 %v370, 16
      %v835 = vor.u32 %v833, %v831
      %v837 = vshll.u32 %v371, 16
      %v839 = vrot.slane %v837, 1
      %v840 = vsel %vm708, %v835, %v839
      %v841 = vshrl.u32 %v371, 16
      %v843 = vor.u32 %v841, %v839
      %v845 = vshll.u32 %v372, 16
      %v847 = vrot.slane %v845, 1
      %v848 = vsel %vm708, %v843, %v847
      %v849 = vshrl.u32 %v372, 16
      %v851 = vor.u32 %v849, %v847
      %v853 = vshll.u32 %v707, 16
      %v855 = vrot.slane %v853, 1
      %v856 = vsel %vm708, %v851, %v855
      %v891 = vunpack.c.l.b16 %v689
      %v892 = vunpack.c.l.b16 %v690
      %v893 = vunpack.c.l.b16 %v691
      %v894 = vunpack.c.l.b16 %v692
      %v895 = vunpack.c.l.b16 %v693
      %v896 = vunpack.c.l.b16 %v694
      %v897 = vunpack.c.l.b16 %v695
      %v898 = vunpack.c.l.b16 %v696
      %v899 = vunpack.c.l.b16 %v697
      %v900 = vunpack.c.l.b16 %v698
      %v901 = vunpack.c.l.b16 %v699
      %v902 = vunpack.c.l.b16 %v700
      %v903 = vunpack.c.l.b16 %v701
      %v904 = vunpack.c.l.b16 %v702
      %v905 = vunpack.c.l.b16 %v703
      %v906 = vunpack.c.l.b16 %v704
      %v907 = vpack.c.b16 %v892, %v891
      %v908 = vpack.c.b16 %v894, %v893
      %v909 = vpack.c.b16 %v896, %v895
      %v910 = vpack.c.b16 %v898, %v897
      %v911 = vpack.c.b16 %v900, %v899
      %v912 = vpack.c.b16 %v902, %v901
      %v913 = vpack.c.b16 %v904, %v903
      %v914 = vpack.c.b16 %v906, %v905
      %923 = vmatprep.subr.bf16.mxu0 0
      %924 = vmatpush1.bf16.msra.mxu0 %v914
      %925 = vmatprep.subr.bf16.mxu0 0
      %926 = vmatpush1.bf16.msra.mxu0 %v913
      %927 = vmatprep.subr.bf16.mxu0 0
      %928 = vmatpush1.bf16.msra.mxu0 %v912
      %929 = vmatprep.subr.bf16.mxu0 0
      %930 = vmatpush1.bf16.msra.mxu0 %v911
      %931 = vmatprep.subr.bf16.mxu0 0
      %932 = vmatpush1.bf16.msra.mxu0 %v910
      %933 = vmatprep.subr.bf16.mxu0 0
      %934 = vmatpush1.bf16.msra.mxu0 %v909
      %935 = vmatprep.subr.bf16.mxu0 0
      %936 = vmatpush1.bf16.msra.mxu0 %v908
      %937 = vmatprep.subr.bf16.mxu0 0
      %938 = vmatpush1.bf16.msra.mxu0 %v907
      %939 = vmatprep.subr.bf16.mxu0 0
      %940 = vmatpush2.bf16.msra.mxu0 0
      %941 = vmatprep.subr.bf16.mxu0 0
      %942 = vmatpush2.bf16.msra.mxu0 0
      %943 = vmatprep.subr.bf16.mxu0 0
      %944 = vmatpush2.bf16.msra.mxu0 0
      %945 = vmatprep.subr.bf16.mxu0 0
      %946 = vmatpush2.bf16.msra.mxu0 0
      %947 = vmatprep.subr.bf16.mxu0 0
      %948 = vmatpush2.bf16.msra.mxu0 0
      %949 = vmatprep.subr.bf16.mxu0 0
      %950 = vmatpush2.bf16.msra.mxu0 0
      %951 = vmatprep.subr.bf16.mxu0 0
      %952 = vmatpush2.bf16.msra.mxu0 0
      %953 = vmatprep.subr.bf16.mxu0 0
      %954 = vmatpush2.bf16.msra.mxu0 0
      %955 = vmatprep.mubr.bf16.mxu0 0
      %956 = vmatmul.mubr.bf16.gmra.mxu0 %v720
      %v957 = vpop.f32.mrf.mxu0
      %v958 = vadd.f32 0.0, %v957
      %v959 = vpop.f32.mrf.mxu0
      %v960 = vpop.f32.mrf.mxu0
      %v961 = vadd.f32 0.0, %v960
      %v962 = vpop.f32.mrf.mxu0
      %963 = vmatprep.mubr.bf16.mxu0 0
      %964 = vmatmul.mubr.bf16.gmra.mxu0 %v728
      %v965 = vpop.f32.mrf.mxu0
      %v966 = vadd.f32 0.0, %v965
      %v967 = vpop.f32.mrf.mxu0
      %v968 = vpop.f32.mrf.mxu0
      %v969 = vadd.f32 0.0, %v968
      %v970 = vpop.f32.mrf.mxu0
      %971 = vmatprep.mubr.bf16.mxu0 0
      %972 = vmatmul.mubr.bf16.gmra.mxu0 %v736
      %v973 = vpop.f32.mrf.mxu0
      %v974 = vadd.f32 0.0, %v973
      %v975 = vpop.f32.mrf.mxu0
      %v976 = vpop.f32.mrf.mxu0
      %v977 = vadd.f32 0.0, %v976
      %v978 = vpop.f32.mrf.mxu0
      %979 = vmatprep.mubr.bf16.mxu0 0
      %980 = vmatmul.mubr.bf16.gmra.mxu0 %v744
      %v981 = vpop.f32.mrf.mxu0
      %v982 = vadd.f32 0.0, %v981
      %v983 = vpop.f32.mrf.mxu0
      %v984 = vpop.f32.mrf.mxu0
      %v985 = vadd.f32 0.0, %v984
      %v986 = vpop.f32.mrf.mxu0
      %987 = vmatprep.mubr.bf16.mxu0 0
      %988 = vmatmul.mubr.bf16.gmra.mxu0 %v752
      %v989 = vpop.f32.mrf.mxu0
      %v990 = vadd.f32 0.0, %v989
      %v991 = vpop.f32.mrf.mxu0
      %v992 = vpop.f32.mrf.mxu0
      %v993 = vadd.f32 0.0, %v992
      %v994 = vpop.f32.mrf.mxu0
      %995 = vmatprep.mubr.bf16.mxu0 0
      %996 = vmatmul.mubr.bf16.gmra.mxu0 %v760
      %v997 = vpop.f32.mrf.mxu0
      %v998 = vadd.f32 0.0, %v997
      %v999 = vpop.f32.mrf.mxu0
      %v1000 = vpop.f32.mrf.mxu0
      %v1001 = vadd.f32 0.0, %v1000
      %v1002 = vpop.f32.mrf.mxu0
      %1003 = vmatprep.mubr.bf16.mxu0 0
      %1004 = vmatmul.mubr.bf16.gmra.mxu0 %v768
      %v1005 = vpop.f32.mrf.mxu0
      %v1006 = vadd.f32 0.0, %v1005
      %v1007 = vpop.f32.mrf.mxu0
      %v1008 = vpop.f32.mrf.mxu0
      %v1009 = vadd.f32 0.0, %v1008
      %v1010 = vpop.f32.mrf.mxu0
      %1011 = vmatprep.mubr.bf16.mxu0 0
      %1012 = vmatmul.mubr.bf16.gmra.mxu0 %v776
      %v1013 = vpop.f32.mrf.mxu0
      %v1014 = vadd.f32 0.0, %v1013
      %v1015 = vpop.f32.mrf.mxu0
      %v1016 = vpop.f32.mrf.mxu0
      %v1017 = vadd.f32 0.0, %v1016
      %v1018 = vpop.f32.mrf.mxu0
      %1019 = vmatprep.mubr.bf16.mxu0 0
      %1020 = vmatmul.mubr.bf16.gmra.mxu0 %v784
      %v1021 = vpop.f32.mrf.mxu0
      %v1022 = vadd.f32 0.0, %v1021
      %v1023 = vpop.f32.mrf.mxu0
      %v1024 = vpop.f32.mrf.mxu0
      %v1025 = vadd.f32 0.0, %v1024
      %v1026 = vpop.f32.mrf.mxu0
      %1027 = vmatprep.mubr.bf16.mxu0 0
      %1028 = vmatmul.mubr.bf16.gmra.mxu0 %v792
      %v1029 = vpop.f32.mrf.mxu0
      %v1030 = vadd.f32 0.0, %v1029
      %v1031 = vpop.f32.mrf.mxu0
      %v1032 = vpop.f32.mrf.mxu0
      %v1033 = vadd.f32 0.0, %v1032
      %v1034 = vpop.f32.mrf.mxu0
      %1035 = vmatprep.mubr.bf16.mxu0 0
      %1036 = vmatmul.mubr.bf16.gmra.mxu0 %v800
      %v1037 = vpop.f32.mrf.mxu0
      %v1038 = vadd.f32 0.0, %v1037
      %v1039 = vpop.f32.mrf.mxu0
      %v1040 = vpop.f32.mrf.mxu0
      %v1041 = vadd.f32 0.0, %v1040
      %v1042 = vpop.f32.mrf.mxu0
      %1043 = vmatprep.mubr.bf16.mxu0 0
      %1044 = vmatmul.mubr.bf16.gmra.mxu0 %v808
      %v1045 = vpop.f32.mrf.mxu0
      %v1046 = vadd.f32 0.0, %v1045
      %v1047 = vpop.f32.mrf.mxu0
      %v1048 = vpop.f32.mrf.mxu0
      %v1049 = vadd.f32 0.0, %v1048
      %v1050 = vpop.f32.mrf.mxu0
      %1051 = vmatprep.mubr.bf16.mxu0 0
      %1052 = vmatmul.mubr.bf16.gmra.mxu0 %v816
      %v1053 = vpop.f32.mrf.mxu0
      %v1054 = vadd.f32 0.0, %v1053
      %v1055 = vpop.f32.mrf.mxu0
      %v1056 = vpop.f32.mrf.mxu0
      %v1057 = vadd.f32 0.0, %v1056
      %v1058 = vpop.f32.mrf.mxu0
      %1059 = vmatprep.mubr.bf16.mxu0 0
      %1060 = vmatmul.mubr.bf16.gmra.mxu0 %v824
      %v1061 = vpop.f32.mrf.mxu0
      %v1062 = vadd.f32 0.0, %v1061
      %v1063 = vpop.f32.mrf.mxu0
      %v1064 = vpop.f32.mrf.mxu0
      %v1065 = vadd.f32 0.0, %v1064
      %v1066 = vpop.f32.mrf.mxu0
      %1067 = vmatprep.mubr.bf16.mxu0 0
      %1068 = vmatmul.mubr.bf16.gmra.mxu0 %v832
      %v1069 = vpop.f32.mrf.mxu0
      %v1070 = vadd.f32 0.0, %v1069
      %v1071 = vpop.f32.mrf.mxu0
      %v1072 = vpop.f32.mrf.mxu0
      %v1073 = vadd.f32 0.0, %v1072
      %v1074 = vpop.f32.mrf.mxu0
      %1075 = vmatprep.mubr.bf16.mxu0 0
      %1076 = vmatmul.mubr.bf16.gmra.mxu0 %v840
      %v1077 = vpop.f32.mrf.mxu0
      %v1078 = vadd.f32 0.0, %v1077
      %v1079 = vpop.f32.mrf.mxu0
      %v1080 = vpop.f32.mrf.mxu0
      %v1081 = vadd.f32 0.0, %v1080
      %v1082 = vpop.f32.mrf.mxu0
      %1083 = vmatprep.mubr.bf16.mxu0 0
      %1084 = vmatmul.mubr.bf16.gmra.mxu0 %v848
      %v1085 = vpop.f32.mrf.mxu0
      %v1086 = vadd.f32 0.0, %v1085
      %v1087 = vpop.f32.mrf.mxu0
      %v1088 = vpop.f32.mrf.mxu0
      %v1089 = vadd.f32 0.0, %v1088
      %v1090 = vpop.f32.mrf.mxu0
      %1091 = vmatprep.mubr.bf16.mxu0 0
      %1092 = vmatmul.mubr.bf16.gmra.mxu0 %v856
      %v1093 = vpop.f32.mrf.mxu0
      %v1094 = vadd.f32 0.0, %v1093
      %v1095 = vpop.f32.mrf.mxu0
      %v1096 = vpop.f32.mrf.mxu0
      %v1097 = vadd.f32 0.0, %v1096
      %v1098 = vpop.f32.mrf.mxu0
      %1099 = vdwg.mxu0
      %v1100 = vadd.f32 %v652, %v958
      %v1101 = vadd.f32 %v653, %v961
      %v1102 = vadd.f32 %v654, %v966
      %v1103 = vadd.f32 %v655, %v969
      %v1104 = vadd.f32 %v656, %v974
      %v1105 = vadd.f32 %v657, %v977
      %v1106 = vadd.f32 %v658, %v982
      %v1107 = vadd.f32 %v659, %v985
      %v1108 = vadd.f32 %v660, %v990
      %v1109 = vadd.f32 %v661, %v993
      %v1110 = vadd.f32 %v662, %v998
      %v1111 = vadd.f32 %v663, %v1001
      %v1112 = vadd.f32 %v664, %v1006
      %v1113 = vadd.f32 %v665, %v1009
      %v1114 = vadd.f32 %v666, %v1014
      %v1115 = vadd.f32 %v667, %v1017
      %v1116 = vadd.f32 %v668, %v1022
      %v1117 = vadd.f32 %v669, %v1025
      %v1118 = vadd.f32 %v670, %v1030
      %v1119 = vadd.f32 %v671, %v1033
      %v1120 = vadd.f32 %v672, %v1038
      %v1121 = vadd.f32 %v673, %v1041
      %v1122 = vadd.f32 %v674, %v1046
      %v1123 = vadd.f32 %v675, %v1049
      %v1124 = vadd.f32 %v676, %v1054
      %v1125 = vadd.f32 %v677, %v1057
      %v1126 = vadd.f32 %v678, %v1062
      %v1127 = vadd.f32 %v679, %v1065
      %v1128 = vadd.f32 %v680, %v1070
      %v1129 = vadd.f32 %v681, %v1073
      %v1130 = vadd.f32 %v682, %v1078
      %v1131 = vadd.f32 %v683, %v1081
      %v1132 = vadd.f32 %v684, %v1086
      %v1133 = vadd.f32 %v685, %v1089
      %v1134 = vadd.f32 %v686, %v1094
      %v1135 = vadd.f32 %v687, %v1097
      %1136 = vst [vmem:[#allocation2] sm:$0xff] %v1100
      %1137 = vst [vmem:[#allocation2 + $0x8] sm:$0xff] %v1101
      %1138 = vst [vmem:[#allocation2 + $0x10] sm:$0xff] %v1102
      %1139 = vst [vmem:[#allocation2 + $0x18] sm:$0xff] %v1103
      %1140 = vst [vmem:[#allocation2 + $0x20] sm:$0xff] %v1104
      %1141 = vst [vmem:[#allocation2 + $0x28] sm:$0xff] %v1105
      %1142 = vst [vmem:[#allocation2 + $0x30] sm:$0xff] %v1106
      %1143 = vst [vmem:[#allocation2 + $0x38] sm:$0xff] %v1107
      %1144 = vst [vmem:[#allocation2 + $0x40] sm:$0xff] %v1108
      %1145 = vst [vmem:[#allocation2 + $0x48] sm:$0xff] %v1109
      %1146 = vst [vmem:[#allocation2 + $0x50] sm:$0xff] %v1110
      %1147 = vst [vmem:[#allocation2 + $0x58] sm:$0xff] %v1111
      %1148 = vst [vmem:[#allocation2 + $0x60] sm:$0xff] %v1112
      %1149 = vst [vmem:[#allocation2 + $0x68] sm:$0xff] %v1113
      %1150 = vst [vmem:[#allocation2 + $0x70] sm:$0xff] %v1114
      %1151 = vst [vmem:[#allocation2 + $0x78] sm:$0xff] %v1115
      %1152 = vst [vmem:[#allocation2 + $0x80] sm:$0xff] %v1116
      %1153 = vst [vmem:[#allocation2 + $0x88] sm:$0xff] %v1117
      %1154 = vst [vmem:[#allocation2 + $0x90] sm:$0xff] %v1118
      %1155 = vst [vmem:[#allocation2 + $0x98] sm:$0xff] %v1119
      %1156 = vst [vmem:[#allocation2 + $0xa0] sm:$0xff] %v1120
      %1157 = vst [vmem:[#allocation2 + $0xa8] sm:$0xff] %v1121
      %1158 = vst [vmem:[#allocation2 + $0xb0] sm:$0xff] %v1122
      %1159 = vst [vmem:[#allocation2 + $0xb8] sm:$0xff] %v1123
      %1160 = vst [vmem:[#allocation2 + $0xc0] sm:$0xff] %v1124
      %1161 = vst [vmem:[#allocation2 + $0xc8] sm:$0xff] %v1125
      %1162 = vst [vmem:[#allocation2 + $0xd0] sm:$0xff] %v1126
      %1163 = vst [vmem:[#allocation2 + $0xd8] sm:$0xff] %v1127
      %1164 = vst [vmem:[#allocation2 + $0xe0] sm:$0xff] %v1128
      %1165 = vst [vmem:[#allocation2 + $0xe8] sm:$0xff] %v1129
      %1166 = vst [vmem:[#allocation2 + $0xf0] sm:$0xff] %v1130
      %1167 = vst [vmem:[#allocation2 + $0xf8] sm:$0xff] %v1131
      %1168 = vst [vmem:[#allocation2 + $0x100] sm:$0xff] %v1132
      %1169 = vst [vmem:[#allocation2 + $0x108] sm:$0xff] %v1133
      %1170 = vst [vmem:[#allocation2 + $0x110] sm:$0xff] %v1134
      %1171 = vst [vmem:[#allocation2 + $0x118] sm:$0xff] %v1135
      %v1172 = vld [vmem:[#allocation2] sm:$0xff]
      %v1173 = vld [vmem:[#allocation2 + $0x8] sm:$0xff]
      %v1174 = vld [vmem:[#allocation2 + $0x10] sm:$0xff]
      %v1175 = vld [vmem:[#allocation2 + $0x18] sm:$0xff]
      %v1176 = vld [vmem:[#allocation2 + $0x20] sm:$0xff]
      %v1177 = vld [vmem:[#allocation2 + $0x28] sm:$0xff]
      %v1178 = vld [vmem:[#allocation2 + $0x30] sm:$0xff]
      %v1179 = vld [vmem:[#allocation2 + $0x38] sm:$0xff]
      %v1180 = vld [vmem:[#allocation2 + $0x40] sm:$0xff]
      %v1181 = vld [vmem:[#allocation2 + $0x48] sm:$0xff]
      %v1182 = vld [vmem:[#allocation2 + $0x50] sm:$0xff]
      %v1183 = vld [vmem:[#allocation2 + $0x58] sm:$0xff]
      %v1184 = vld [vmem:[#allocation2 + $0x60] sm:$0xff]
      %v1185 = vld [vmem:[#allocation2 + $0x68] sm:$0xff]
      %v1186 = vld [vmem:[#allocation2 + $0x70] sm:$0xff]
      %v1187 = vld [vmem:[#allocation2 + $0x78] sm:$0xff]
      %v1188 = vld [vmem:[#allocation2 + $0x80] sm:$0xff]
      %v1189 = vld [vmem:[#allocation2 + $0x88] sm:$0xff]
      %v1190 = vld [vmem:[#allocation2 + $0x90] sm:$0xff]
      %v1191 = vld [vmem:[#allocation2 + $0x98] sm:$0xff]
      %v1192 = vld [vmem:[#allocation2 + $0xa0] sm:$0xff]
      %v1193 = vld [vmem:[#allocation2 + $0xa8] sm:$0xff]
      %v1194 = vld [vmem:[#allocation2 + $0xb0] sm:$0xff]
      %v1195 = vld [vmem:[#allocation2 + $0xb8] sm:$0xff]
      %v1196 = vld [vmem:[#allocation2 + $0xc0] sm:$0xff]
      %v1197 = vld [vmem:[#allocation2 + $0xc8] sm:$0xff]
      %v1198 = vld [vmem:[#allocation2 + $0xd0] sm:$0xff]
      %v1199 = vld [vmem:[#allocation2 + $0xd8] sm:$0xff]
      %v1200 = vld [vmem:[#allocation2 + $0xe0] sm:$0xff]
      %v1201 = vld [vmem:[#allocation2 + $0xe8] sm:$0xff]
      %v1202 = vld [vmem:[#allocation2 + $0xf0] sm:$0xff]
      %v1203 = vld [vmem:[#allocation2 + $0xf8] sm:$0xff]
      %v1204 = vld [vmem:[#allocation2 + $0x100] sm:$0xff]
      %v1205 = vld [vmem:[#allocation2 + $0x108] sm:$0xff]
      %v1206 = vld [vmem:[#allocation2 + $0x110] sm:$0xff]
      %v1207 = vld [vmem:[#allocation2 + $0x118] sm:$0xff]
      %s1208 = scalar_lea.vmem %s1, 128
      %v1209 = vld [vmem:[%s1208] sm:$0xf]
      %v1210 = vld [vmem:[%s1208 + $0x4] sm:$0xf]
      %v1211 = vld [vmem:[%s1208 + $0x8] sm:$0xf]
      %v1212 = vld [vmem:[%s1208 + $0xc] sm:$0xf]
      %v1213 = vld [vmem:[%s1208 + $0x10] sm:$0xf]
      %v1214 = vld [vmem:[%s1208 + $0x14] sm:$0xf]
      %v1215 = vld [vmem:[%s1208 + $0x18] sm:$0xf]
      %v1216 = vld [vmem:[%s1208 + $0x1c] sm:$0xf]
      %v1217 = vld [vmem:[%s1208 + $0x20] sm:$0xf]
      %v1218 = vld [vmem:[%s1208 + $0x24] sm:$0xf]
      %v1219 = vld [vmem:[%s1208 + $0x28] sm:$0xf]
      %v1220 = vld [vmem:[%s1208 + $0x2c] sm:$0xf]
      %v1221 = vld [vmem:[%s1208 + $0x30] sm:$0xf]
      %v1222 = vld [vmem:[%s1208 + $0x34] sm:$0xf]
      %v1223 = vld [vmem:[%s1208 + $0x38] sm:$0xf]
      %v1224 = vld [vmem:[%s1208 + $0x3c] sm:$0xf]
      %vm1225 = vcmask 1046528
      %v1226 = vrot.slane %v355, 1
      %v1227 = vrot.slane %v356, 1
      %v1228 = vsel %vm1225, %v1226, %v1227
      %v1229 = vrot.slane %v357, 1
      %v1230 = vsel %vm1225, %v1227, %v1229
      %v1231 = vrot.slane %v358, 1
      %v1232 = vsel %vm1225, %v1229, %v1231
      %v1233 = vrot.slane %v359, 1
      %v1234 = vsel %vm1225, %v1231, %v1233
      %v1235 = vrot.slane %v360, 1
      %v1236 = vsel %vm1225, %v1233, %v1235
      %v1237 = vrot.slane %v361, 1
      %v1238 = vsel %vm1225, %v1235, %v1237
      %v1239 = vrot.slane %v362, 1
      %v1240 = vsel %vm1225, %v1237, %v1239
      %v1241 = vrot.slane %v363, 1
      %v1242 = vsel %vm1225, %v1239, %v1241
      %v1243 = vrot.slane %v364, 1
      %v1244 = vsel %vm1225, %v1241, %v1243
      %v1245 = vrot.slane %v365, 1
      %v1246 = vsel %vm1225, %v1243, %v1245
      %v1247 = vrot.slane %v366, 1
      %v1248 = vsel %vm1225, %v1245, %v1247
      %v1249 = vrot.slane %v367, 1
      %v1250 = vsel %vm1225, %v1247, %v1249
      %v1251 = vrot.slane %v368, 1
      %v1252 = vsel %vm1225, %v1249, %v1251
      %v1253 = vrot.slane %v369, 1
      %v1254 = vsel %vm1225, %v1251, %v1253
      %v1255 = vrot.slane %v370, 1
      %v1256 = vsel %vm1225, %v1253, %v1255
      %v1257 = vrot.slane %v371, 1
      %v1258 = vsel %vm1225, %v1255, %v1257
      %v1259 = vrot.slane %v372, 1
      %v1260 = vsel %vm1225, %v1257, %v1259
      %v1261 = vrot.slane %v707, 1
      %v1262 = vsel %vm1225, %v1259, %v1261
      %v1297 = vunpack.c.l.b16 %v1209
      %v1298 = vunpack.c.l.b16 %v1210
      %v1299 = vunpack.c.l.b16 %v1211
      %v1300 = vunpack.c.l.b16 %v1212
      %v1301 = vunpack.c.l.b16 %v1213
      %v1302 = vunpack.c.l.b16 %v1214
      %v1303 = vunpack.c.l.b16 %v1215
      %v1304 = vunpack.c.l.b16 %v1216
      %v1305 = vunpack.c.l.b16 %v1217
      %v1306 = vunpack.c.l.b16 %v1218
      %v1307 = vunpack.c.l.b16 %v1219
      %v1308 = vunpack.c.l.b16 %v1220
      %v1309 = vunpack.c.l.b16 %v1221
      %v1310 = vunpack.c.l.b16 %v1222
      %v1311 = vunpack.c.l.b16 %v1223
      %v1312 = vunpack.c.l.b16 %v1224
      %v1313 = vpack.c.b16 %v1298, %v1297
      %v1314 = vpack.c.b16 %v1300, %v1299
      %v1315 = vpack.c.b16 %v1302, %v1301
      %v1316 = vpack.c.b16 %v1304, %v1303
      %v1317 = vpack.c.b16 %v1306, %v1305
      %v1318 = vpack.c.b16 %v1308, %v1307
      %v1319 = vpack.c.b16 %v1310, %v1309
      %v1320 = vpack.c.b16 %v1312, %v1311
      %1329 = vmatprep.subr.bf16.mxu0 0
      %1330 = vmatpush1.bf16.msra.mxu0 %v1320
      %1331 = vmatprep.subr.bf16.mxu0 0
      %1332 = vmatpush1.bf16.msra.mxu0 %v1319
      %1333 = vmatprep.subr.bf16.mxu0 0
      %1334 = vmatpush1.bf16.msra.mxu0 %v1318
      %1335 = vmatprep.subr.bf16.mxu0 0
      %1336 = vmatpush1.bf16.msra.mxu0 %v1317
      %1337 = vmatprep.subr.bf16.mxu0 0
      %1338 = vmatpush1.bf16.msra.mxu0 %v1316
      %1339 = vmatprep.subr.bf16.mxu0 0
      %1340 = vmatpush1.bf16.msra.mxu0 %v1315
      %1341 = vmatprep.subr.bf16.mxu0 0
      %1342 = vmatpush1.bf16.msra.mxu0 %v1314
      %1343 = vmatprep.subr.bf16.mxu0 0
      %1344 = vmatpush1.bf16.msra.mxu0 %v1313
      %1345 = vmatprep.subr.bf16.mxu0 0
      %1346 = vmatpush2.bf16.msra.mxu0 0
      %1347 = vmatprep.subr.bf16.mxu0 0
      %1348 = vmatpush2.bf16.msra.mxu0 0
      %1349 = vmatprep.subr.bf16.mxu0 0
      %1350 = vmatpush2.bf16.msra.mxu0 0
      %1351 = vmatprep.subr.bf16.mxu0 0
      %1352 = vmatpush2.bf16.msra.mxu0 0
      %1353 = vmatprep.subr.bf16.mxu0 0
      %1354 = vmatpush2.bf16.msra.mxu0 0
      %1355 = vmatprep.subr.bf16.mxu0 0
      %1356 = vmatpush2.bf16.msra.mxu0 0
      %1357 = vmatprep.subr.bf16.mxu0 0
      %1358 = vmatpush2.bf16.msra.mxu0 0
      %1359 = vmatprep.subr.bf16.mxu0 0
      %1360 = vmatpush2.bf16.msra.mxu0 0
      %1361 = vmatprep.mubr.bf16.mxu0 0
      %1362 = vmatmul.mubr.bf16.gmra.mxu0 %v1228
      %v1363 = vpop.f32.mrf.mxu0
      %v1364 = vadd.f32 0.0, %v1363
      %v1365 = vpop.f32.mrf.mxu0
      %v1366 = vpop.f32.mrf.mxu0
      %v1367 = vadd.f32 0.0, %v1366
      %v1368 = vpop.f32.mrf.mxu0
      %1369 = vmatprep.mubr.bf16.mxu0 0
      %1370 = vmatmul.mubr.bf16.gmra.mxu0 %v1230
      %v1371 = vpop.f32.mrf.mxu0
      %v1372 = vadd.f32 0.0, %v1371
      %v1373 = vpop.f32.mrf.mxu0
      %v1374 = vpop.f32.mrf.mxu0
      %v1375 = vadd.f32 0.0, %v1374
      %v1376 = vpop.f32.mrf.mxu0
      %1377 = vmatprep.mubr.bf16.mxu0 0
      %1378 = vmatmul.mubr.bf16.gmra.mxu0 %v1232
      %v1379 = vpop.f32.mrf.mxu0
      %v1380 = vadd.f32 0.0, %v1379
      %v1381 = vpop.f32.mrf.mxu0
      %v1382 = vpop.f32.mrf.mxu0
      %v1383 = vadd.f32 0.0, %v1382
      %v1384 = vpop.f32.mrf.mxu0
      %1385 = vmatprep.mubr.bf16.mxu0 0
      %1386 = vmatmul.mubr.bf16.gmra.mxu0 %v1234
      %v1387 = vpop.f32.mrf.mxu0
      %v1388 = vadd.f32 0.0, %v1387
      %v1389 = vpop.f32.mrf.mxu0
      %v1390 = vpop.f32.mrf.mxu0
      %v1391 = vadd.f32 0.0, %v1390
      %v1392 = vpop.f32.mrf.mxu0
      %1393 = vmatprep.mubr.bf16.mxu0 0
      %1394 = vmatmul.mubr.bf16.gmra.mxu0 %v1236
      %v1395 = vpop.f32.mrf.mxu0
      %v1396 = vadd.f32 0.0, %v1395
      %v1397 = vpop.f32.mrf.mxu0
      %v1398 = vpop.f32.mrf.mxu0
      %v1399 = vadd.f32 0.0, %v1398
      %v1400 = vpop.f32.mrf.mxu0
      %1401 = vmatprep.mubr.bf16.mxu0 0
      %1402 = vmatmul.mubr.bf16.gmra.mxu0 %v1238
      %v1403 = vpop.f32.mrf.mxu0
      %v1404 = vadd.f32 0.0, %v1403
      %v1405 = vpop.f32.mrf.mxu0
      %v1406 = vpop.f32.mrf.mxu0
      %v1407 = vadd.f32 0.0, %v1406
      %v1408 = vpop.f32.mrf.mxu0
      %1409 = vmatprep.mubr.bf16.mxu0 0
      %1410 = vmatmul.mubr.bf16.gmra.mxu0 %v1240
      %v1411 = vpop.f32.mrf.mxu0
      %v1412 = vadd.f32 0.0, %v1411
      %v1413 = vpop.f32.mrf.mxu0
      %v1414 = vpop.f32.mrf.mxu0
      %v1415 = vadd.f32 0.0, %v1414
      %v1416 = vpop.f32.mrf.mxu0
      %1417 = vmatprep.mubr.bf16.mxu0 0
      %1418 = vmatmul.mubr.bf16.gmra.mxu0 %v1242
      %v1419 = vpop.f32.mrf.mxu0
      %v1420 = vadd.f32 0.0, %v1419
      %v1421 = vpop.f32.mrf.mxu0
      %v1422 = vpop.f32.mrf.mxu0
      %v1423 = vadd.f32 0.0, %v1422
      %v1424 = vpop.f32.mrf.mxu0
      %1425 = vmatprep.mubr.bf16.mxu0 0
      %1426 = vmatmul.mubr.bf16.gmra.mxu0 %v1244
      %v1427 = vpop.f32.mrf.mxu0
      %v1428 = vadd.f32 0.0, %v1427
      %v1429 = vpop.f32.mrf.mxu0
      %v1430 = vpop.f32.mrf.mxu0
      %v1431 = vadd.f32 0.0, %v1430
      %v1432 = vpop.f32.mrf.mxu0
      %1433 = vmatprep.mubr.bf16.mxu0 0
      %1434 = vmatmul.mubr.bf16.gmra.mxu0 %v1246
      %v1435 = vpop.f32.mrf.mxu0
      %v1436 = vadd.f32 0.0, %v1435
      %v1437 = vpop.f32.mrf.mxu0
      %v1438 = vpop.f32.mrf.mxu0
      %v1439 = vadd.f32 0.0, %v1438
      %v1440 = vpop.f32.mrf.mxu0
      %1441 = vmatprep.mubr.bf16.mxu0 0
      %1442 = vmatmul.mubr.bf16.gmra.mxu0 %v1248
      %v1443 = vpop.f32.mrf.mxu0
      %v1444 = vadd.f32 0.0, %v1443
      %v1445 = vpop.f32.mrf.mxu0
      %v1446 = vpop.f32.mrf.mxu0
      %v1447 = vadd.f32 0.0, %v1446
      %v1448 = vpop.f32.mrf.mxu0
      %1449 = vmatprep.mubr.bf16.mxu0 0
      %1450 = vmatmul.mubr.bf16.gmra.mxu0 %v1250
      %v1451 = vpop.f32.mrf.mxu0
      %v1452 = vadd.f32 0.0, %v1451
      %v1453 = vpop.f32.mrf.mxu0
      %v1454 = vpop.f32.mrf.mxu0
      %v1455 = vadd.f32 0.0, %v1454
      %v1456 = vpop.f32.mrf.mxu0
      %1457 = vmatprep.mubr.bf16.mxu0 0
      %1458 = vmatmul.mubr.bf16.gmra.mxu0 %v1252
      %v1459 = vpop.f32.mrf.mxu0
      %v1460 = vadd.f32 0.0, %v1459
      %v1461 = vpop.f32.mrf.mxu0
      %v1462 = vpop.f32.mrf.mxu0
      %v1463 = vadd.f32 0.0, %v1462
      %v1464 = vpop.f32.mrf.mxu0
      %1465 = vmatprep.mubr.bf16.mxu0 0
      %1466 = vmatmul.mubr.bf16.gmra.mxu0 %v1254
      %v1467 = vpop.f32.mrf.mxu0
      %v1468 = vadd.f32 0.0, %v1467
      %v1469 = vpop.f32.mrf.mxu0
      %v1470 = vpop.f32.mrf.mxu0
      %v1471 = vadd.f32 0.0, %v1470
      %v1472 = vpop.f32.mrf.mxu0
      %1473 = vmatprep.mubr.bf16.mxu0 0
      %1474 = vmatmul.mubr.bf16.gmra.mxu0 %v1256
      %v1475 = vpop.f32.mrf.mxu0
      %v1476 = vadd.f32 0.0, %v1475
      %v1477 = vpop.f32.mrf.mxu0
      %v1478 = vpop.f32.mrf.mxu0
      %v1479 = vadd.f32 0.0, %v1478
      %v1480 = vpop.f32.mrf.mxu0
      %1481 = vmatprep.mubr.bf16.mxu0 0
      %1482 = vmatmul.mubr.bf16.gmra.mxu0 %v1258
      %v1483 = vpop.f32.mrf.mxu0
      %v1484 = vadd.f32 0.0, %v1483
      %v1485 = vpop.f32.mrf.mxu0
      %v1486 = vpop.f32.mrf.mxu0
      %v1487 = vadd.f32 0.0, %v1486
      %v1488 = vpop.f32.mrf.mxu0
      %1489 = vmatprep.mubr.bf16.mxu0 0
      %1490 = vmatmul.mubr.bf16.gmra.mxu0 %v1260
      %v1491 = vpop.f32.mrf.mxu0
      %v1492 = vadd.f32 0.0, %v1491
      %v1493 = vpop.f32.mrf.mxu0
      %v1494 = vpop.f32.mrf.mxu0
      %v1495 = vadd.f32 0.0, %v1494
      %v1496 = vpop.f32.mrf.mxu0
      %1497 = vmatprep.mubr.bf16.mxu0 0
      %1498 = vmatmul.mubr.bf16.gmra.mxu0 %v1262
      %v1499 = vpop.f32.mrf.mxu0
      %v1500 = vadd.f32 0.0, %v1499
      %v1501 = vpop.f32.mrf.mxu0
      %v1502 = vpop.f32.mrf.mxu0
      %v1503 = vadd.f32 0.0, %v1502
      %v1504 = vpop.f32.mrf.mxu0
      %1505 = vdwg.mxu0
      %v1506 = vadd.f32 %v1172, %v1364
      %v1507 = vadd.f32 %v1173, %v1367
      %v1508 = vadd.f32 %v1174, %v1372
      %v1509 = vadd.f32 %v1175, %v1375
      %v1510 = vadd.f32 %v1176, %v1380
      %v1511 = vadd.f32 %v1177, %v1383
      %v1512 = vadd.f32 %v1178, %v1388
      %v1513 = vadd.f32 %v1179, %v1391
      %v1514 = vadd.f32 %v1180, %v1396
      %v1515 = vadd.f32 %v1181, %v1399
      %v1516 = vadd.f32 %v1182, %v1404
      %v1517 = vadd.f32 %v1183, %v1407
      %v1518 = vadd.f32 %v1184, %v1412
      %v1519 = vadd.f32 %v1185, %v1415
      %v1520 = vadd.f32 %v1186, %v1420
      %v1521 = vadd.f32 %v1187, %v1423
      %v1522 = vadd.f32 %v1188, %v1428
      %v1523 = vadd.f32 %v1189, %v1431
      %v1524 = vadd.f32 %v1190, %v1436
      %v1525 = vadd.f32 %v1191, %v1439
      %v1526 = vadd.f32 %v1192, %v1444
      %v1527 = vadd.f32 %v1193, %v1447
      %v1528 = vadd.f32 %v1194, %v1452
      %v1529 = vadd.f32 %v1195, %v1455
      %v1530 = vadd.f32 %v1196, %v1460
      %v1531 = vadd.f32 %v1197, %v1463
      %v1532 = vadd.f32 %v1198, %v1468
      %v1533 = vadd.f32 %v1199, %v1471
      %v1534 = vadd.f32 %v1200, %v1476
      %v1535 = vadd.f32 %v1201, %v1479
      %v1536 = vadd.f32 %v1202, %v1484
      %v1537 = vadd.f32 %v1203, %v1487
      %v1538 = vadd.f32 %v1204, %v1492
      %v1539 = vadd.f32 %v1205, %v1495
      %v1540 = vadd.f32 %v1206, %v1500
      %v1541 = vadd.f32 %v1207, %v1503
      %1542 = vst [vmem:[#allocation2] sm:$0xff] %v1506
      %1543 = vst [vmem:[#allocation2 + $0x8] sm:$0xff] %v1507
      %1544 = vst [vmem:[#allocation2 + $0x10] sm:$0xff] %v1508
      %1545 = vst [vmem:[#allocation2 + $0x18] sm:$0xff] %v1509
      %1546 = vst [vmem:[#allocation2 + $0x20] sm:$0xff] %v1510
      %1547 = vst [vmem:[#allocation2 + $0x28] sm:$0xff] %v1511
      %1548 = vst [vmem:[#allocation2 + $0x30] sm:$0xff] %v1512
      %1549 = vst [vmem:[#allocation2 + $0x38] sm:$0xff] %v1513
      %1550 = vst [vmem:[#allocation2 + $0x40] sm:$0xff] %v1514
      %1551 = vst [vmem:[#allocation2 + $0x48] sm:$0xff] %v1515
      %1552 = vst [vmem:[#allocation2 + $0x50] sm:$0xff] %v1516
      %1553 = vst [vmem:[#allocation2 + $0x58] sm:$0xff] %v1517
      %1554 = vst [vmem:[#allocation2 + $0x60] sm:$0xff] %v1518
      %1555 = vst [vmem:[#allocation2 + $0x68] sm:$0xff] %v1519
      %1556 = vst [vmem:[#allocation2 + $0x70] sm:$0xff] %v1520
      %1557 = vst [vmem:[#allocation2 + $0x78] sm:$0xff] %v1521
      %1558 = vst [vmem:[#allocation2 + $0x80] sm:$0xff] %v1522
      %1559 = vst [vmem:[#allocation2 + $0x88] sm:$0xff] %v1523
      %1560 = vst [vmem:[#allocation2 + $0x90] sm:$0xff] %v1524
      %1561 = vst [vmem:[#allocation2 + $0x98] sm:$0xff] %v1525
      %1562 = vst [vmem:[#allocation2 + $0xa0] sm:$0xff] %v1526
      %1563 = vst [vmem:[#allocation2 + $0xa8] sm:$0xff] %v1527
      %1564 = vst [vmem:[#allocation2 + $0xb0] sm:$0xff] %v1528
      %1565 = vst [vmem:[#allocation2 + $0xb8] sm:$0xff] %v1529
      %1566 = vst [vmem:[#allocation2 + $0xc0] sm:$0xff] %v1530
      %1567 = vst [vmem:[#allocation2 + $0xc8] sm:$0xff] %v1531
      %1568 = vst [vmem:[#allocation2 + $0xd0] sm:$0xff] %v1532
      %1569 = vst [vmem:[#allocation2 + $0xd8] sm:$0xff] %v1533
      %1570 = vst [vmem:[#allocation2 + $0xe0] sm:$0xff] %v1534
      %1571 = vst [vmem:[#allocation2 + $0xe8] sm:$0xff] %v1535
      %1572 = vst [vmem:[#allocation2 + $0xf0] sm:$0xff] %v1536
      %1573 = vst [vmem:[#allocation2 + $0xf8] sm:$0xff] %v1537
      %1574 = vst [vmem:[#allocation2 + $0x100] sm:$0xff] %v1538
      %1575 = vst [vmem:[#allocation2 + $0x108] sm:$0xff] %v1539
      %1576 = vst [vmem:[#allocation2 + $0x110] sm:$0xff] %v1540
      %1577 = vst [vmem:[#allocation2 + $0x118] sm:$0xff] %v1541
      %v1578 = vld [vmem:[#allocation2] sm:$0xff]
      %v1579 = vld [vmem:[#allocation2 + $0x8] sm:$0xff]
      %v1580 = vld [vmem:[#allocation2 + $0x10] sm:$0xff]
      %v1581 = vld [vmem:[#allocation2 + $0x18] sm:$0xff]
      %v1582 = vld [vmem:[#allocation2 + $0x20] sm:$0xff]
      %v1583 = vld [vmem:[#allocation2 + $0x28] sm:$0xff]
      %v1584 = vld [vmem:[#allocation2 + $0x30] sm:$0xff]
      %v1585 = vld [vmem:[#allocation2 + $0x38] sm:$0xff]
      %v1586 = vld [vmem:[#allocation2 + $0x40] sm:$0xff]
      %v1587 = vld [vmem:[#allocation2 + $0x48] sm:$0xff]
      %v1588 = vld [vmem:[#allocation2 + $0x50] sm:$0xff]
      %v1589 = vld [vmem:[#allocation2 + $0x58] sm:$0xff]
      %v1590 = vld [vmem:[#allocation2 + $0x60] sm:$0xff]
      %v1591 = vld [vmem:[#allocation2 + $0x68] sm:$0xff]
      %v1592 = vld [vmem:[#allocation2 + $0x70] sm:$0xff]
      %v1593 = vld [vmem:[#allocation2 + $0x78] sm:$0xff]
      %v1594 = vld [vmem:[#allocation2 + $0x80] sm:$0xff]
      %v1595 = vld [vmem:[#allocation2 + $0x88] sm:$0xff]
      %v1596 = vld [vmem:[#allocation2 + $0x90] sm:$0xff]
      %v1597 = vld [vmem:[#allocation2 + $0x98] sm:$0xff]
      %v1598 = vld [vmem:[#allocation2 + $0xa0] sm:$0xff]
      %v1599 = vld [vmem:[#allocation2 + $0xa8] sm:$0xff]
      %v1600 = vld [vmem:[#allocation2 + $0xb0] sm:$0xff]
      %v1601 = vld [vmem:[#allocation2 + $0xb8] sm:$0xff]
      %v1602 = vld [vmem:[#allocation2 + $0xc0] sm:$0xff]
      %v1603 = vld [vmem:[#allocation2 + $0xc8] sm:$0xff]
      %v1604 = vld [vmem:[#allocation2 + $0xd0] sm:$0xff]
      %v1605 = vld [vmem:[#allocation2 + $0xd8] sm:$0xff]
      %v1606 = vld [vmem:[#allocation2 + $0xe0] sm:$0xff]
      %v1607 = vld [vmem:[#allocation2 + $0xe8] sm:$0xff]
      %v1608 = vld [vmem:[#allocation2 + $0xf0] sm:$0xff]
      %v1609 = vld [vmem:[#allocation2 + $0xf8] sm:$0xff]
      %v1610 = vld [vmem:[#allocation2 + $0x100] sm:$0xff]
      %v1611 = vld [vmem:[#allocation2 + $0x108] sm:$0xff]
      %v1612 = vld [vmem:[#allocation2 + $0x110] sm:$0xff]
      %v1613 = vld [vmem:[#allocation2 + $0x118] sm:$0xff]
      %s1614 = scalar_lea.vmem %s1, 192
      %v1615 = vld [vmem:[%s1614] sm:$0xf]
      %v1616 = vld [vmem:[%s1614 + $0x4] sm:$0xf]
      %v1617 = vld [vmem:[%s1614 + $0x8] sm:$0xf]
      %v1618 = vld [vmem:[%s1614 + $0xc] sm:$0xf]
      %v1619 = vld [vmem:[%s1614 + $0x10] sm:$0xf]
      %v1620 = vld [vmem:[%s1614 + $0x14] sm:$0xf]
      %v1621 = vld [vmem:[%s1614 + $0x18] sm:$0xf]
      %v1622 = vld [vmem:[%s1614 + $0x1c] sm:$0xf]
      %v1623 = vld [vmem:[%s1614 + $0x20] sm:$0xf]
      %v1624 = vld [vmem:[%s1614 + $0x24] sm:$0xf]
      %v1625 = vld [vmem:[%s1614 + $0x28] sm:$0xf]
      %v1626 = vld [vmem:[%s1614 + $0x2c] sm:$0xf]
      %v1627 = vld [vmem:[%s1614 + $0x30] sm:$0xf]
      %v1628 = vld [vmem:[%s1614 + $0x34] sm:$0xf]
      %v1629 = vld [vmem:[%s1614 + $0x38] sm:$0xf]
      %v1630 = vld [vmem:[%s1614 + $0x3c] sm:$0xf]
      %v1633 = vunpack.c.l.b16 %v263
      %v1634 = vunpack.c.l.b16 %v264
      %v1635 = vpack.c.b16 %v1633, %v706
      %v1636 = vpack.c.b16 %v1634, %v1634
      %v1637 = vrot.slane %v1635, 1
      %v1638 = vsel %vm1225, %v1259, %v1637
      %v1639 = vrot.slane %v1636, 1
      %v1640 = vsel %vm1225, %v1637, %v1639
      %v1659 = vunpack.c.l.b16 %v1615
      %v1660 = vunpack.c.l.b16 %v1616
      %v1661 = vunpack.c.l.b16 %v1617
      %v1662 = vunpack.c.l.b16 %v1618
      %v1663 = vunpack.c.l.b16 %v1619
      %v1664 = vunpack.c.l.b16 %v1620
      %v1665 = vunpack.c.l.b16 %v1621
      %v1666 = vunpack.c.l.b16 %v1622
      %v1667 = vunpack.c.l.b16 %v1623
      %v1668 = vunpack.c.l.b16 %v1624
      %v1669 = vunpack.c.l.b16 %v1625
      %v1670 = vunpack.c.l.b16 %v1626
      %v1671 = vunpack.c.l.b16 %v1627
      %v1672 = vunpack.c.l.b16 %v1628
      %v1673 = vunpack.c.l.b16 %v1629
      %v1674 = vunpack.c.l.b16 %v1630
      %v1675 = vpack.c.b16 %v1660, %v1659
      %v1676 = vpack.c.b16 %v1662, %v1661
      %v1677 = vpack.c.b16 %v1664, %v1663
      %v1678 = vpack.c.b16 %v1666, %v1665
      %v1679 = vpack.c.b16 %v1668, %v1667
      %v1680 = vpack.c.b16 %v1670, %v1669
      %v1681 = vpack.c.b16 %v1672, %v1671
      %v1682 = vpack.c.b16 %v1674, %v1673
      %1691 = vmatprep.subr.bf16.mxu0 0
      %1692 = vmatpush1.bf16.msra.mxu0 %v1682
      %1693 = vmatprep.subr.bf16.mxu0 0
      %1694 = vmatpush1.bf16.msra.mxu0 %v1681
      %1695 = vmatprep.subr.bf16.mxu0 0
      %1696 = vmatpush1.bf16.msra.mxu0 %v1680
      %1697 = vmatprep.subr.bf16.mxu0 0
      %1698 = vmatpush1.bf16.msra.mxu0 %v1679
      %1699 = vmatprep.subr.bf16.mxu0 0
      %1700 = vmatpush1.bf16.msra.mxu0 %v1678
      %1701 = vmatprep.subr.bf16.mxu0 0
      %1702 = vmatpush1.bf16.msra.mxu0 %v1677
      %1703 = vmatprep.subr.bf16.mxu0 0
      %1704 = vmatpush1.bf16.msra.mxu0 %v1676
      %1705 = vmatprep.subr.bf16.mxu0 0
      %1706 = vmatpush1.bf16.msra.mxu0 %v1675
      %1707 = vmatprep.subr.bf16.mxu0 0
      %1708 = vmatpush2.bf16.msra.mxu0 0
      %1709 = vmatprep.subr.bf16.mxu0 0
      %1710 = vmatpush2.bf16.msra.mxu0 0
      %1711 = vmatprep.subr.bf16.mxu0 0
      %1712 = vmatpush2.bf16.msra.mxu0 0
      %1713 = vmatprep.subr.bf16.mxu0 0
      %1714 = vmatpush2.bf16.msra.mxu0 0
      %1715 = vmatprep.subr.bf16.mxu0 0
      %1716 = vmatpush2.bf16.msra.mxu0 0
      %1717 = vmatprep.subr.bf16.mxu0 0
      %1718 = vmatpush2.bf16.msra.mxu0 0
      %1719 = vmatprep.subr.bf16.mxu0 0
      %1720 = vmatpush2.bf16.msra.mxu0 0
      %1721 = vmatprep.subr.bf16.mxu0 0
      %1722 = vmatpush2.bf16.msra.mxu0 0
      %1723 = vmatprep.mubr.bf16.mxu0 0
      %1724 = vmatmul.mubr.bf16.gmra.mxu0 %v1230
      %v1725 = vpop.f32.mrf.mxu0
      %v1726 = vadd.f32 0.0, %v1725
      %v1727 = vpop.f32.mrf.mxu0
      %v1728 = vpop.f32.mrf.mxu0
      %v1729 = vadd.f32 0.0, %v1728
      %v1730 = vpop.f32.mrf.mxu0
      %1731 = vmatprep.mubr.bf16.mxu0 0
      %1732 = vmatmul.mubr.bf16.gmra.mxu0 %v1232
      %v1733 = vpop.f32.mrf.mxu0
      %v1734 = vadd.f32 0.0, %v1733
      %v1735 = vpop.f32.mrf.mxu0
      %v1736 = vpop.f32.mrf.mxu0
      %v1737 = vadd.f32 0.0, %v1736
      %v1738 = vpop.f32.mrf.mxu0
      %1739 = vmatprep.mubr.bf16.mxu0 0
      %1740 = vmatmul.mubr.bf16.gmra.mxu0 %v1234
      %v1741 = vpop.f32.mrf.mxu0
      %v1742 = vadd.f32 0.0, %v1741
      %v1743 = vpop.f32.mrf.mxu0
      %v1744 = vpop.f32.mrf.mxu0
      %v1745 = vadd.f32 0.0, %v1744
      %v1746 = vpop.f32.mrf.mxu0
      %1747 = vmatprep.mubr.bf16.mxu0 0
      %1748 = vmatmul.mubr.bf16.gmra.mxu0 %v1236
      %v1749 = vpop.f32.mrf.mxu0
      %v1750 = vadd.f32 0.0, %v1749
      %v1751 = vpop.f32.mrf.mxu0
      %v1752 = vpop.f32.mrf.mxu0
      %v1753 = vadd.f32 0.0, %v1752
      %v1754 = vpop.f32.mrf.mxu0
      %1755 = vmatprep.mubr.bf16.mxu0 0
      %1756 = vmatmul.mubr.bf16.gmra.mxu0 %v1238
      %v1757 = vpop.f32.mrf.mxu0
      %v1758 = vadd.f32 0.0, %v1757
      %v1759 = vpop.f32.mrf.mxu0
      %v1760 = vpop.f32.mrf.mxu0
      %v1761 = vadd.f32 0.0, %v1760
      %v1762 = vpop.f32.mrf.mxu0
      %1763 = vmatprep.mubr.bf16.mxu0 0
      %1764 = vmatmul.mubr.bf16.gmra.mxu0 %v1240
      %v1765 = vpop.f32.mrf.mxu0
      %v1766 = vadd.f32 0.0, %v1765
      %v1767 = vpop.f32.mrf.mxu0
      %v1768 = vpop.f32.mrf.mxu0
      %v1769 = vadd.f32 0.0, %v1768
      %v1770 = vpop.f32.mrf.mxu0
      %1771 = vmatprep.mubr.bf16.mxu0 0
      %1772 = vmatmul.mubr.bf16.gmra.mxu0 %v1242
      %v1773 = vpop.f32.mrf.mxu0
      %v1774 = vadd.f32 0.0, %v1773
      %v1775 = vpop.f32.mrf.mxu0
      %v1776 = vpop.f32.mrf.mxu0
      %v1777 = vadd.f32 0.0, %v1776
      %v1778 = vpop.f32.mrf.mxu0
      %1779 = vmatprep.mubr.bf16.mxu0 0
      %1780 = vmatmul.mubr.bf16.gmra.mxu0 %v1244
      %v1781 = vpop.f32.mrf.mxu0
      %v1782 = vadd.f32 0.0, %v1781
      %v1783 = vpop.f32.mrf.mxu0
      %v1784 = vpop.f32.mrf.mxu0
      %v1785 = vadd.f32 0.0, %v1784
      %v1786 = vpop.f32.mrf.mxu0
      %1787 = vmatprep.mubr.bf16.mxu0 0
      %1788 = vmatmul.mubr.bf16.gmra.mxu0 %v1246
      %v1789 = vpop.f32.mrf.mxu0
      %v1790 = vadd.f32 0.0, %v1789
      %v1791 = vpop.f32.mrf.mxu0
      %v1792 = vpop.f32.mrf.mxu0
      %v1793 = vadd.f32 0.0, %v1792
      %v1794 = vpop.f32.mrf.mxu0
      %1795 = vmatprep.mubr.bf16.mxu0 0
      %1796 = vmatmul.mubr.bf16.gmra.mxu0 %v1248
      %v1797 = vpop.f32.mrf.mxu0
      %v1798 = vadd.f32 0.0, %v1797
      %v1799 = vpop.f32.mrf.mxu0
      %v1800 = vpop.f32.mrf.mxu0
      %v1801 = vadd.f32 0.0, %v1800
      %v1802 = vpop.f32.mrf.mxu0
      %1803 = vmatprep.mubr.bf16.mxu0 0
      %1804 = vmatmul.mubr.bf16.gmra.mxu0 %v1250
      %v1805 = vpop.f32.mrf.mxu0
      %v1806 = vadd.f32 0.0, %v1805
      %v1807 = vpop.f32.mrf.mxu0
      %v1808 = vpop.f32.mrf.mxu0
      %v1809 = vadd.f32 0.0, %v1808
      %v1810 = vpop.f32.mrf.mxu0
      %1811 = vmatprep.mubr.bf16.mxu0 0
      %1812 = vmatmul.mubr.bf16.gmra.mxu0 %v1252
      %v1813 = vpop.f32.mrf.mxu0
      %v1814 = vadd.f32 0.0, %v1813
      %v1815 = vpop.f32.mrf.mxu0
      %v1816 = vpop.f32.mrf.mxu0
      %v1817 = vadd.f32 0.0, %v1816
      %v1818 = vpop.f32.mrf.mxu0
      %1819 = vmatprep.mubr.bf16.mxu0 0
      %1820 = vmatmul.mubr.bf16.gmra.mxu0 %v1254
      %v1821 = vpop.f32.mrf.mxu0
      %v1822 = vadd.f32 0.0, %v1821
      %v1823 = vpop.f32.mrf.mxu0
      %v1824 = vpop.f32.mrf.mxu0
      %v1825 = vadd.f32 0.0, %v1824
      %v1826 = vpop.f32.mrf.mxu0
      %1827 = vmatprep.mubr.bf16.mxu0 0
      %1828 = vmatmul.mubr.bf16.gmra.mxu0 %v1256
      %v1829 = vpop.f32.mrf.mxu0
      %v1830 = vadd.f32 0.0, %v1829
      %v1831 = vpop.f32.mrf.mxu0
      %v1832 = vpop.f32.mrf.mxu0
      %v1833 = vadd.f32 0.0, %v1832
      %v1834 = vpop.f32.mrf.mxu0
      %1835 = vmatprep.mubr.bf16.mxu0 0
      %1836 = vmatmul.mubr.bf16.gmra.mxu0 %v1258
      %v1837 = vpop.f32.mrf.mxu0
      %v1838 = vadd.f32 0.0, %v1837
      %v1839 = vpop.f32.mrf.mxu0
      %v1840 = vpop.f32.mrf.mxu0
      %v1841 = vadd.f32 0.0, %v1840
      %v1842 = vpop.f32.mrf.mxu0
      %1843 = vmatprep.mubr.bf16.mxu0 0
      %1844 = vmatmul.mubr.bf16.gmra.mxu0 %v1260
      %v1845 = vpop.f32.mrf.mxu0
      %v1846 = vadd.f32 0.0, %v1845
      %v1847 = vpop.f32.mrf.mxu0
      %v1848 = vpop.f32.mrf.mxu0
      %v1849 = vadd.f32 0.0, %v1848
      %v1850 = vpop.f32.mrf.mxu0
      %1851 = vmatprep.mubr.bf16.mxu0 0
      %1852 = vmatmul.mubr.bf16.gmra.mxu0 %v1638
      %v1853 = vpop.f32.mrf.mxu0
      %v1854 = vadd.f32 0.0, %v1853
      %v1855 = vpop.f32.mrf.mxu0
      %v1856 = vpop.f32.mrf.mxu0
      %v1857 = vadd.f32 0.0, %v1856
      %v1858 = vpop.f32.mrf.mxu0
      %1859 = vmatprep.mubr.bf16.mxu0 0
      %1860 = vmatmul.mubr.bf16.gmra.mxu0 %v1640
      %v1861 = vpop.f32.mrf.mxu0
      %v1862 = vadd.f32 0.0, %v1861
      %v1863 = vpop.f32.mrf.mxu0
      %v1864 = vpop.f32.mrf.mxu0
      %v1865 = vadd.f32 0.0, %v1864
      %v1866 = vpop.f32.mrf.mxu0
      %1867 = vdwg.mxu0
      %v1868 = vadd.f32 %v1578, %v1726
      %v1869 = vadd.f32 %v1579, %v1729
      %v1870 = vadd.f32 %v1580, %v1734
      %v1871 = vadd.f32 %v1581, %v1737
      %v1872 = vadd.f32 %v1582, %v1742
      %v1873 = vadd.f32 %v1583, %v1745
      %v1874 = vadd.f32 %v1584, %v1750
      %v1875 = vadd.f32 %v1585, %v1753
      %v1876 = vadd.f32 %v1586, %v1758
      %v1877 = vadd.f32 %v1587, %v1761
      %v1878 = vadd.f32 %v1588, %v1766
      %v1879 = vadd.f32 %v1589, %v1769
      %v1880 = vadd.f32 %v1590, %v1774
      %v1881 = vadd.f32 %v1591, %v1777
      %v1882 = vadd.f32 %v1592, %v1782
      %v1883 = vadd.f32 %v1593, %v1785
      %v1884 = vadd.f32 %v1594, %v1790
      %v1885 = vadd.f32 %v1595, %v1793
      %v1886 = vadd.f32 %v1596, %v1798
      %v1887 = vadd.f32 %v1597, %v1801
      %v1888 = vadd.f32 %v1598, %v1806
      %v1889 = vadd.f32 %v1599, %v1809
      %v1890 = vadd.f32 %v1600, %v1814
      %v1891 = vadd.f32 %v1601, %v1817
      %v1892 = vadd.f32 %v1602, %v1822
      %v1893 = vadd.f32 %v1603, %v1825
      %v1894 = vadd.f32 %v1604, %v1830
      %v1895 = vadd.f32 %v1605, %v1833
      %v1896 = vadd.f32 %v1606, %v1838
      %v1897 = vadd.f32 %v1607, %v1841
      %v1898 = vadd.f32 %v1608, %v1846
      %v1899 = vadd.f32 %v1609, %v1849
      %v1900 = vadd.f32 %v1610, %v1854
      %v1901 = vadd.f32 %v1611, %v1857
      %v1902 = vadd.f32 %v1612, %v1862
      %v1903 = vadd.f32 %v1613, %v1865
      %1904 = vst [vmem:[#allocation2] sm:$0xff] %v1868
      %1905 = vst [vmem:[#allocation2 + $0x8] sm:$0xff] %v1869
      %1906 = vst [vmem:[#allocation2 + $0x10] sm:$0xff] %v1870
      %1907 = vst [vmem:[#allocation2 + $0x18] sm:$0xff] %v1871
      %1908 = vst [vmem:[#allocation2 + $0x20] sm:$0xff] %v1872
      %1909 = vst [vmem:[#allocation2 + $0x28] sm:$0xff] %v1873
      %1910 = vst [vmem:[#allocation2 + $0x30] sm:$0xff] %v1874
      %1911 = vst [vmem:[#allocation2 + $0x38] sm:$0xff] %v1875
      %1912 = vst [vmem:[#allocation2 + $0x40] sm:$0xff] %v1876
      %1913 = vst [vmem:[#allocation2 + $0x48] sm:$0xff] %v1877
      %1914 = vst [vmem:[#allocation2 + $0x50] sm:$0xff] %v1878
      %1915 = vst [vmem:[#allocation2 + $0x58] sm:$0xff] %v1879
      %1916 = vst [vmem:[#allocation2 + $0x60] sm:$0xff] %v1880
      %1917 = vst [vmem:[#allocation2 + $0x68] sm:$0xff] %v1881
      %1918 = vst [vmem:[#allocation2 + $0x70] sm:$0xff] %v1882
      %1919 = vst [vmem:[#allocation2 + $0x78] sm:$0xff] %v1883
      %1920 = vst [vmem:[#allocation2 + $0x80] sm:$0xff] %v1884
      %1921 = vst [vmem:[#allocation2 + $0x88] sm:$0xff] %v1885
      %1922 = vst [vmem:[#allocation2 + $0x90] sm:$0xff] %v1886
      %1923 = vst [vmem:[#allocation2 + $0x98] sm:$0xff] %v1887
      %1924 = vst [vmem:[#allocation2 + $0xa0] sm:$0xff] %v1888
      %1925 = vst [vmem:[#allocation2 + $0xa8] sm:$0xff] %v1889
      %1926 = vst [vmem:[#allocation2 + $0xb0] sm:$0xff] %v1890
      %1927 = vst [vmem:[#allocation2 + $0xb8] sm:$0xff] %v1891
      %1928 = vst [vmem:[#allocation2 + $0xc0] sm:$0xff] %v1892
      %1929 = vst [vmem:[#allocation2 + $0xc8] sm:$0xff] %v1893
      %1930 = vst [vmem:[#allocation2 + $0xd0] sm:$0xff] %v1894
      %1931 = vst [vmem:[#allocation2 + $0xd8] sm:$0xff] %v1895
      %1932 = vst [vmem:[#allocation2 + $0xe0] sm:$0xff] %v1896
      %1933 = vst [vmem:[#allocation2 + $0xe8] sm:$0xff] %v1897
      %1934 = vst [vmem:[#allocation2 + $0xf0] sm:$0xff] %v1898
      %1935 = vst [vmem:[#allocation2 + $0xf8] sm:$0xff] %v1899
      %1936 = vst [vmem:[#allocation2 + $0x100] sm:$0xff] %v1900
      %1937 = vst [vmem:[#allocation2 + $0x108] sm:$0xff] %v1901
      %1938 = vst [vmem:[#allocation2 + $0x110] sm:$0xff] %v1902
      %1939 = vst [vmem:[#allocation2 + $0x118] sm:$0xff] %v1903
      %v1940 = vld [vmem:[#allocation2] sm:$0xff]
      %v1941 = vld [vmem:[#allocation2 + $0x8] sm:$0xff]
      %v1942 = vld [vmem:[#allocation2 + $0x10] sm:$0xff]
      %v1943 = vld [vmem:[#allocation2 + $0x18] sm:$0xff]
      %v1944 = vld [vmem:[#allocation2 + $0x20] sm:$0xff]
      %v1945 = vld [vmem:[#allocation2 + $0x28] sm:$0xff]
      %v1946 = vld [vmem:[#allocation2 + $0x30] sm:$0xff]
      %v1947 = vld [vmem:[#allocation2 + $0x38] sm:$0xff]
      %v1948 = vld [vmem:[#allocation2 + $0x40] sm:$0xff]
      %v1949 = vld [vmem:[#allocation2 + $0x48] sm:$0xff]
      %v1950 = vld [vmem:[#allocation2 + $0x50] sm:$0xff]
      %v1951 = vld [vmem:[#allocation2 + $0x58] sm:$0xff]
      %v1952 = vld [vmem:[#allocation2 + $0x60] sm:$0xff]
      %v1953 = vld [vmem:[#allocation2 + $0x68] sm:$0xff]
      %v1954 = vld [vmem:[#allocation2 + $0x70] sm:$0xff]
      %v1955 = vld [vmem:[#allocation2 + $0x78] sm:$0xff]
      %v1956 = vld [vmem:[#allocation2 + $0x80] sm:$0xff]
      %v1957 = vld [vmem:[#allocation2 + $0x88] sm:$0xff]
      %v1958 = vld [vmem:[#allocation2 + $0x90] sm:$0xff]
      %v1959 = vld [vmem:[#allocation2 + $0x98] sm:$0xff]
      %v1960 = vld [vmem:[#allocation2 + $0xa0] sm:$0xff]
      %v1961 = vld [vmem:[#allocation2 + $0xa8] sm:$0xff]
      %v1962 = vld [vmem:[#allocation2 + $0xb0] sm:$0xff]
      %v1963 = vld [vmem:[#allocation2 + $0xb8] sm:$0xff]
      %v1964 = vld [vmem:[#allocation2 + $0xc0] sm:$0xff]
      %v1965 = vld [vmem:[#allocation2 + $0xc8] sm:$0xff]
      %v1966 = vld [vmem:[#allocation2 + $0xd0] sm:$0xff]
      %v1967 = vld [vmem:[#allocation2 + $0xd8] sm:$0xff]
      %v1968 = vld [vmem:[#allocation2 + $0xe0] sm:$0xff]
      %v1969 = vld [vmem:[#allocation2 + $0xe8] sm:$0xff]
      %v1970 = vld [vmem:[#allocation2 + $0xf0] sm:$0xff]
      %v1971 = vld [vmem:[#allocation2 + $0xf8] sm:$0xff]
      %v1972 = vld [vmem:[#allocation2 + $0x100] sm:$0xff]
      %v1973 = vld [vmem:[#allocation2 + $0x108] sm:$0xff]
      %v1974 = vld [vmem:[#allocation2 + $0x110] sm:$0xff]
      %v1975 = vld [vmem:[#allocation2 + $0x118] sm:$0xff]
      %s1976 = scalar_lea.vmem %s1, 256
      %v1977 = vld [vmem:[%s1976] sm:$0xf]
      %v1978 = vld [vmem:[%s1976 + $0x4] sm:$0xf]
      %v1979 = vld [vmem:[%s1976 + $0x8] sm:$0xf]
      %v1980 = vld [vmem:[%s1976 + $0xc] sm:$0xf]
      %v1981 = vld [vmem:[%s1976 + $0x10] sm:$0xf]
      %v1982 = vld [vmem:[%s1976 + $0x14] sm:$0xf]
      %v1983 = vld [vmem:[%s1976 + $0x18] sm:$0xf]
      %v1984 = vld [vmem:[%s1976 + $0x1c] sm:$0xf]
      %v1985 = vld [vmem:[%s1976 + $0x20] sm:$0xf]
      %v1986 = vld [vmem:[%s1976 + $0x24] sm:$0xf]
      %v1987 = vld [vmem:[%s1976 + $0x28] sm:$0xf]
      %v1988 = vld [vmem:[%s1976 + $0x2c] sm:$0xf]
      %v1989 = vld [vmem:[%s1976 + $0x30] sm:$0xf]
      %v1990 = vld [vmem:[%s1976 + $0x34] sm:$0xf]
      %v1991 = vld [vmem:[%s1976 + $0x38] sm:$0xf]
      %v1992 = vld [vmem:[%s1976 + $0x3c] sm:$0xf]
      %vm1993 = vsmask.f32 6400
      %v1994 = vrot.slane %v721, 1
      %v1995 = vrot.slane %v717, 2
      %v1996 = vor.u32 %v1994, %v1995
      %v1997 = vrot.slane %v729, 1
      %v1998 = vrot.slane %v725, 2
      %v1999 = vor.u32 %v1997, %v1998
      %v2000 = vsel %vm1993, %v1996, %v1999
      %v2001 = vrot.slane %v737, 1
      %v2002 = vrot.slane %v733, 2
      %v2003 = vor.u32 %v2001, %v2002
      %v2004 = vsel %vm1993, %v1999, %v2003
      %v2005 = vrot.slane %v745, 1
      %v2006 = vrot.slane %v741, 2
      %v2007 = vor.u32 %v2005, %v2006
      %v2008 = vsel %vm1993, %v2003, %v2007
      %v2009 = vrot.slane %v753, 1
      %v2010 = vrot.slane %v749, 2
      %v2011 = vor.u32 %v2009, %v2010
      %v2012 = vsel %vm1993, %v2007, %v2011
      %v2013 = vrot.slane %v761, 1
      %v2014 = vrot.slane %v757, 2
      %v2015 = vor.u32 %v2013, %v2014
      %v2016 = vsel %vm1993, %v2011, %v2015
      %v2017 = vrot.slane %v769, 1
      %v2018 = vrot.slane %v765, 2
      %v2019 = vor.u32 %v2017, %v2018
      %v2020 = vsel %vm1993, %v2015, %v2019
      %v2021 = vrot.slane %v777, 1
      %v2022 = vrot.slane %v773, 2
      %v2023 = vor.u32 %v2021, %v2022
      %v2024 = vsel %vm1993, %v2019, %v2023
      %v2025 = vrot.slane %v785, 1
      %v2026 = vrot.slane %v781, 2
      %v2027 = vor.u32 %v2025, %v2026
      %v2028 = vsel %vm1993, %v2023, %v2027
      %v2029 = vrot.slane %v793, 1
      %v2030 = vrot.slane %v789, 2
      %v2031 = vor.u32 %v2029, %v2030
      %v2032 = vsel %vm1993, %v2027, %v2031
      %v2033 = vrot.slane %v801, 1
      %v2034 = vrot.slane %v797, 2
      %v2035 = vor.u32 %v2033, %v2034
      %v2036 = vsel %vm1993, %v2031, %v2035
      %v2037 = vrot.slane %v809, 1
      %v2038 = vrot.slane %v805, 2
      %v2039 = vor.u32 %v2037, %v2038
      %v2040 = vsel %vm1993, %v2035, %v2039
      %v2041 = vrot.slane %v817, 1
      %v2042 = vrot.slane %v813, 2
      %v2043 = vor.u32 %v2041, %v2042
      %v2044 = vsel %vm1993, %v2039, %v2043
      %v2045 = vrot.slane %v825, 1
      %v2046 = vrot.slane %v821, 2
      %v2047 = vor.u32 %v2045, %v2046
      %v2048 = vsel %vm1993, %v2043, %v2047
      %v2049 = vrot.slane %v833, 1
      %v2050 = vrot.slane %v829, 2
      %v2051 = vor.u32 %v2049, %v2050
      %v2052 = vsel %vm1993, %v2047, %v2051
      %v2053 = vrot.slane %v841, 1
      %v2054 = vrot.slane %v837, 2
      %v2055 = vor.u32 %v2053, %v2054
      %v2056 = vsel %vm1993, %v2051, %v2055
      %v2057 = vrot.slane %v849, 1
      %v2058 = vrot.slane %v845, 2
      %v2059 = vor.u32 %v2057, %v2058
      %v2060 = vsel %vm1993, %v2055, %v2059
      %v2062 = vshrl.u32 %v1635, 16
      %v2064 = vrot.slane %v2062, 1
      %v2065 = vshll.u32 %v1635, 16
      %v2067 = vrot.slane %v2065, 2
      %v2068 = vor.u32 %v2064, %v2067
      %v2069 = vsel %vm1993, %v2059, %v2068
      %v2071 = vshrl.u32 %v1636, 16
      %v2073 = vrot.slane %v2071, 1
      %v2074 = vshll.u32 %v1636, 16
      %v2076 = vrot.slane %v2074, 2
      %v2077 = vor.u32 %v2073, %v2076
      %v2078 = vsel %vm1993, %v2068, %v2077
      %v2113 = vunpack.c.l.b16 %v1977
      %v2114 = vunpack.c.l.b16 %v1978
      %v2115 = vunpack.c.l.b16 %v1979
      %v2116 = vunpack.c.l.b16 %v1980
      %v2117 = vunpack.c.l.b16 %v1981
      %v2118 = vunpack.c.l.b16 %v1982
      %v2119 = vunpack.c.l.b16 %v1983
      %v2120 = vunpack.c.l.b16 %v1984
      %v2121 = vunpack.c.l.b16 %v1985
      %v2122 = vunpack.c.l.b16 %v1986
      %v2123 = vunpack.c.l.b16 %v1987
      %v2124 = vunpack.c.l.b16 %v1988
      %v2125 = vunpack.c.l.b16 %v1989
      %v2126 = vunpack.c.l.b16 %v1990
      %v2127 = vunpack.c.l.b16 %v1991
      %v2128 = vunpack.c.l.b16 %v1992
      %v2129 = vpack.c.b16 %v2114, %v2113
      %v2130 = vpack.c.b16 %v2116, %v2115
      %v2131 = vpack.c.b16 %v2118, %v2117
      %v2132 = vpack.c.b16 %v2120, %v2119
      %v2133 = vpack.c.b16 %v2122, %v2121
      %v2134 = vpack.c.b16 %v2124, %v2123
      %v2135 = vpack.c.b16 %v2126, %v2125
      %v2136 = vpack.c.b16 %v2128, %v2127
      %2145 = vmatprep.subr.bf16.mxu0 0
      %2146 = vmatpush1.bf16.msra.mxu0 %v2136
      %2147 = vmatprep.subr.bf16.mxu0 0
      %2148 = vmatpush1.bf16.msra.mxu0 %v2135
      %2149 = vmatprep.subr.bf16.mxu0 0
      %2150 = vmatpush1.bf16.msra.mxu0 %v2134
      %2151 = vmatprep.subr.bf16.mxu0 0
      %2152 = vmatpush1.bf16.msra.mxu0 %v2133
      %2153 = vmatprep.subr.bf16.mxu0 0
      %2154 = vmatpush1.bf16.msra.mxu0 %v2132
      %2155 = vmatprep.subr.bf16.mxu0 0
      %2156 = vmatpush1.bf16.msra.mxu0 %v2131
      %2157 = vmatprep.subr.bf16.mxu0 0
      %2158 = vmatpush1.bf16.msra.mxu0 %v2130
      %2159 = vmatprep.subr.bf16.mxu0 0
      %2160 = vmatpush1.bf16.msra.mxu0 %v2129
      %2161 = vmatprep.subr.bf16.mxu0 0
      %2162 = vmatpush2.bf16.msra.mxu0 0
      %2163 = vmatprep.subr.bf16.mxu0 0
      %2164 = vmatpush2.bf16.msra.mxu0 0
      %2165 = vmatprep.subr.bf16.mxu0 0
      %2166 = vmatpush2.bf16.msra.mxu0 0
      %2167 = vmatprep.subr.bf16.mxu0 0
      %2168 = vmatpush2.bf16.msra.mxu0 0
      %2169 = vmatprep.subr.bf16.mxu0 0
      %2170 = vmatpush2.bf16.msra.mxu0 0
      %2171 = vmatprep.subr.bf16.mxu0 0
      %2172 = vmatpush2.bf16.msra.mxu0 0
      %2173 = vmatprep.subr.bf16.mxu0 0
      %2174 = vmatpush2.bf16.msra.mxu0 0
      %2175 = vmatprep.subr.bf16.mxu0 0
      %2176 = vmatpush2.bf16.msra.mxu0 0
      %2177 = vmatprep.mubr.bf16.mxu0 0
      %2178 = vmatmul.mubr.bf16.gmra.mxu0 %v2000
      %v2179 = vpop.f32.mrf.mxu0
      %v2180 = vadd.f32 0.0, %v2179
      %v2181 = vpop.f32.mrf.mxu0
      %v2182 = vpop.f32.mrf.mxu0
      %v2183 = vadd.f32 0.0, %v2182
      %v2184 = vpop.f32.mrf.mxu0
      %2185 = vmatprep.mubr.bf16.mxu0 0
      %2186 = vmatmul.mubr.bf16.gmra.mxu0 %v2004
      %v2187 = vpop.f32.mrf.mxu0
      %v2188 = vadd.f32 0.0, %v2187
      %v2189 = vpop.f32.mrf.mxu0
      %v2190 = vpop.f32.mrf.mxu0
      %v2191 = vadd.f32 0.0, %v2190
      %v2192 = vpop.f32.mrf.mxu0
      %2193 = vmatprep.mubr.bf16.mxu0 0
      %2194 = vmatmul.mubr.bf16.gmra.mxu0 %v2008
      %v2195 = vpop.f32.mrf.mxu0
      %v2196 = vadd.f32 0.0, %v2195
      %v2197 = vpop.f32.mrf.mxu0
      %v2198 = vpop.f32.mrf.mxu0
      %v2199 = vadd.f32 0.0, %v2198
      %v2200 = vpop.f32.mrf.mxu0
      %2201 = vmatprep.mubr.bf16.mxu0 0
      %2202 = vmatmul.mubr.bf16.gmra.mxu0 %v2012
      %v2203 = vpop.f32.mrf.mxu0
      %v2204 = vadd.f32 0.0, %v2203
      %v2205 = vpop.f32.mrf.mxu0
      %v2206 = vpop.f32.mrf.mxu0
      %v2207 = vadd.f32 0.0, %v2206
      %v2208 = vpop.f32.mrf.mxu0
      %2209 = vmatprep.mubr.bf16.mxu0 0
      %2210 = vmatmul.mubr.bf16.gmra.mxu0 %v2016
      %v2211 = vpop.f32.mrf.mxu0
      %v2212 = vadd.f32 0.0, %v2211
      %v2213 = vpop.f32.mrf.mxu0
      %v2214 = vpop.f32.mrf.mxu0
      %v2215 = vadd.f32 0.0, %v2214
      %v2216 = vpop.f32.mrf.mxu0
      %2217 = vmatprep.mubr.bf16.mxu0 0
      %2218 = vmatmul.mubr.bf16.gmra.mxu0 %v2020
      %v2219 = vpop.f32.mrf.mxu0
      %v2220 = vadd.f32 0.0, %v2219
      %v2221 = vpop.f32.mrf.mxu0
      %v2222 = vpop.f32.mrf.mxu0
      %v2223 = vadd.f32 0.0, %v2222
      %v2224 = vpop.f32.mrf.mxu0
      %2225 = vmatprep.mubr.bf16.mxu0 0
      %2226 = vmatmul.mubr.bf16.gmra.mxu0 %v2024
      %v2227 = vpop.f32.mrf.mxu0
      %v2228 = vadd.f32 0.0, %v2227
      %v2229 = vpop.f32.mrf.mxu0
      %v2230 = vpop.f32.mrf.mxu0
      %v2231 = vadd.f32 0.0, %v2230
      %v2232 = vpop.f32.mrf.mxu0
      %2233 = vmatprep.mubr.bf16.mxu0 0
      %2234 = vmatmul.mubr.bf16.gmra.mxu0 %v2028
      %v2235 = vpop.f32.mrf.mxu0
      %v2236 = vadd.f32 0.0, %v2235
      %v2237 = vpop.f32.mrf.mxu0
      %v2238 = vpop.f32.mrf.mxu0
      %v2239 = vadd.f32 0.0, %v2238
      %v2240 = vpop.f32.mrf.mxu0
      %2241 = vmatprep.mubr.bf16.mxu0 0
      %2242 = vmatmul.mubr.bf16.gmra.mxu0 %v2032
      %v2243 = vpop.f32.mrf.mxu0
      %v2244 = vadd.f32 0.0, %v2243
      %v2245 = vpop.f32.mrf.mxu0
      %v2246 = vpop.f32.mrf.mxu0
      %v2247 = vadd.f32 0.0, %v2246
      %v2248 = vpop.f32.mrf.mxu0
      %2249 = vmatprep.mubr.bf16.mxu0 0
      %2250 = vmatmul.mubr.bf16.gmra.mxu0 %v2036
      %v2251 = vpop.f32.mrf.mxu0
      %v2252 = vadd.f32 0.0, %v2251
      %v2253 = vpop.f32.mrf.mxu0
      %v2254 = vpop.f32.mrf.mxu0
      %v2255 = vadd.f32 0.0, %v2254
      %v2256 = vpop.f32.mrf.mxu0
      %2257 = vmatprep.mubr.bf16.mxu0 0
      %2258 = vmatmul.mubr.bf16.gmra.mxu0 %v2040
      %v2259 = vpop.f32.mrf.mxu0
      %v2260 = vadd.f32 0.0, %v2259
      %v2261 = vpop.f32.mrf.mxu0
      %v2262 = vpop.f32.mrf.mxu0
      %v2263 = vadd.f32 0.0, %v2262
      %v2264 = vpop.f32.mrf.mxu0
      %2265 = vmatprep.mubr.bf16.mxu0 0
      %2266 = vmatmul.mubr.bf16.gmra.mxu0 %v2044
      %v2267 = vpop.f32.mrf.mxu0
      %v2268 = vadd.f32 0.0, %v2267
      %v2269 = vpop.f32.mrf.mxu0
      %v2270 = vpop.f32.mrf.mxu0
      %v2271 = vadd.f32 0.0, %v2270
      %v2272 = vpop.f32.mrf.mxu0
      %2273 = vmatprep.mubr.bf16.mxu0 0
      %2274 = vmatmul.mubr.bf16.gmra.mxu0 %v2048
      %v2275 = vpop.f32.mrf.mxu0
      %v2276 = vadd.f32 0.0, %v2275
      %v2277 = vpop.f32.mrf.mxu0
      %v2278 = vpop.f32.mrf.mxu0
      %v2279 = vadd.f32 0.0, %v2278
      %v2280 = vpop.f32.mrf.mxu0
      %2281 = vmatprep.mubr.bf16.mxu0 0
      %2282 = vmatmul.mubr.bf16.gmra.mxu0 %v2052
      %v2283 = vpop.f32.mrf.mxu0
      %v2284 = vadd.f32 0.0, %v2283
      %v2285 = vpop.f32.mrf.mxu0
      %v2286 = vpop.f32.mrf.mxu0
      %v2287 = vadd.f32 0.0, %v2286
      %v2288 = vpop.f32.mrf.mxu0
      %2289 = vmatprep.mubr.bf16.mxu0 0
      %2290 = vmatmul.mubr.bf16.gmra.mxu0 %v2056
      %v2291 = vpop.f32.mrf.mxu0
      %v2292 = vadd.f32 0.0, %v2291
      %v2293 = vpop.f32.mrf.mxu0
      %v2294 = vpop.f32.mrf.mxu0
      %v2295 = vadd.f32 0.0, %v2294
      %v2296 = vpop.f32.mrf.mxu0
      %2297 = vmatprep.mubr.bf16.mxu0 0
      %2298 = vmatmul.mubr.bf16.gmra.mxu0 %v2060
      %v2299 = vpop.f32.mrf.mxu0
      %v2300 = vadd.f32 0.0, %v2299
      %v2301 = vpop.f32.mrf.mxu0
      %v2302 = vpop.f32.mrf.mxu0
      %v2303 = vadd.f32 0.0, %v2302
      %v2304 = vpop.f32.mrf.mxu0
      %2305 = vmatprep.mubr.bf16.mxu0 0
      %2306 = vmatmul.mubr.bf16.gmra.mxu0 %v2069
      %v2307 = vpop.f32.mrf.mxu0
      %v2308 = vadd.f32 0.0, %v2307
      %v2309 = vpop.f32.mrf.mxu0
      %v2310 = vpop.f32.mrf.mxu0
      %v2311 = vadd.f32 0.0, %v2310
      %v2312 = vpop.f32.mrf.mxu0
      %2313 = vmatprep.mubr.bf16.mxu0 0
      %2314 = vmatmul.mubr.bf16.gmra.mxu0 %v2078
      %v2315 = vpop.f32.mrf.mxu0
      %v2316 = vadd.f32 0.0, %v2315
      %v2317 = vpop.f32.mrf.mxu0
      %v2318 = vpop.f32.mrf.mxu0
      %v2319 = vadd.f32 0.0, %v2318
      %v2320 = vpop.f32.mrf.mxu0
      %2321 = vdwg.mxu0
      %v2322 = vadd.f32 %v1940, %v2180
      %v2323 = vadd.f32 %v1941, %v2183
      %v2324 = vadd.f32 %v1942, %v2188
      %v2325 = vadd.f32 %v1943, %v2191
      %v2326 = vadd.f32 %v1944, %v2196
      %v2327 = vadd.f32 %v1945, %v2199
      %v2328 = vadd.f32 %v1946, %v2204
      %v2329 = vadd.f32 %v1947, %v2207
      %v2330 = vadd.f32 %v1948, %v2212
      %v2331 = vadd.f32 %v1949, %v2215
      %v2332 = vadd.f32 %v1950, %v2220
      %v2333 = vadd.f32 %v1951, %v2223
      %v2334 = vadd.f32 %v1952, %v2228
      %v2335 = vadd.f32 %v1953, %v2231
      %v2336 = vadd.f32 %v1954, %v2236
      %v2337 = vadd.f32 %v1955, %v2239
      %v2338 = vadd.f32 %v1956, %v2244
      %v2339 = vadd.f32 %v1957, %v2247
      %v2340 = vadd.f32 %v1958, %v2252
      %v2341 = vadd.f32 %v1959, %v2255
      %v2342 = vadd.f32 %v1960, %v2260
      %v2343 = vadd.f32 %v1961, %v2263
      %v2344 = vadd.f32 %v1962, %v2268
      %v2345 = vadd.f32 %v1963, %v2271
      %v2346 = vadd.f32 %v1964, %v2276
      %v2347 = vadd.f32 %v1965, %v2279
      %v2348 = vadd.f32 %v1966, %v2284
      %v2349 = vadd.f32 %v1967, %v2287
      %v2350 = vadd.f32 %v1968, %v2292
      %v2351 = vadd.f32 %v1969, %v2295
      %v2352 = vadd.f32 %v1970, %v2300
      %v2353 = vadd.f32 %v1971, %v2303
      %v2354 = vadd.f32 %v1972, %v2308
      %v2355 = vadd.f32 %v1973, %v2311
      %v2356 = vadd.f32 %v1974, %v2316
      %v2357 = vadd.f32 %v1975, %v2319
      %2358 = vst [vmem:[#allocation2] sm:$0xff] %v2322
      %2359 = vst [vmem:[#allocation2 + $0x8] sm:$0xff] %v2323
      %2360 = vst [vmem:[#allocation2 + $0x10] sm:$0xff] %v2324
      %2361 = vst [vmem:[#allocation2 + $0x18] sm:$0xff] %v2325
      %2362 = vst [vmem:[#allocation2 + $0x20] sm:$0xff] %v2326
      %2363 = vst [vmem:[#allocation2 + $0x28] sm:$0xff] %v2327
      %2364 = vst [vmem:[#allocation2 + $0x30] sm:$0xff] %v2328
      %2365 = vst [vmem:[#allocation2 + $0x38] sm:$0xff] %v2329
      %2366 = vst [vmem:[#allocation2 + $0x40] sm:$0xff] %v2330
      %2367 = vst [vmem:[#allocation2 + $0x48] sm:$0xff] %v2331
      %2368 = vst [vmem:[#allocation2 + $0x50] sm:$0xff] %v2332
      %2369 = vst [vmem:[#allocation2 + $0x58] sm:$0xff] %v2333
      %2370 = vst [vmem:[#allocation2 + $0x60] sm:$0xff] %v2334
      %2371 = vst [vmem:[#allocation2 + $0x68] sm:$0xff] %v2335
      %2372 = vst [vmem:[#allocation2 + $0x70] sm:$0xff] %v2336
      %2373 = vst [vmem:[#allocation2 + $0x78] sm:$0xff] %v2337
      %2374 = vst [vmem:[#allocation2 + $0x80] sm:$0xff] %v2338
      %2375 = vst [vmem:[#allocation2 + $0x88] sm:$0xff] %v2339
      %2376 = vst [vmem:[#allocation2 + $0x90] sm:$0xff] %v2340
      %2377 = vst [vmem:[#allocation2 + $0x98] sm:$0xff] %v2341
      %2378 = vst [vmem:[#allocation2 + $0xa0] sm:$0xff] %v2342
      %2379 = vst [vmem:[#allocation2 + $0xa8] sm:$0xff] %v2343
      %2380 = vst [vmem:[#allocation2 + $0xb0] sm:$0xff] %v2344
      %2381 = vst [vmem:[#allocation2 + $0xb8] sm:$0xff] %v2345
      %2382 = vst [vmem:[#allocation2 + $0xc0] sm:$0xff] %v2346
      %2383 = vst [vmem:[#allocation2 + $0xc8] sm:$0xff] %v2347
      %2384 = vst [vmem:[#allocation2 + $0xd0] sm:$0xff] %v2348
      %2385 = vst [vmem:[#allocation2 + $0xd8] sm:$0xff] %v2349
      %2386 = vst [vmem:[#allocation2 + $0xe0] sm:$0xff] %v2350
      %2387 = vst [vmem:[#allocation2 + $0xe8] sm:$0xff] %v2351
      %2388 = vst [vmem:[#allocation2 + $0xf0] sm:$0xff] %v2352
      %2389 = vst [vmem:[#allocation2 + $0xf8] sm:$0xff] %v2353
      %2390 = vst [vmem:[#allocation2 + $0x100] sm:$0xff] %v2354
      %2391 = vst [vmem:[#allocation2 + $0x108] sm:$0xff] %v2355
      %2392 = vst [vmem:[#allocation2 + $0x110] sm:$0xff] %v2356
      %2393 = vst [vmem:[#allocation2 + $0x118] sm:$0xff] %v2357
      %v2394 = vld [vmem:[#allocation2] sm:$0xff]
      %v2395 = vld [vmem:[#allocation2 + $0x8] sm:$0xff]
      %v2396 = vld [vmem:[#allocation2 + $0x10] sm:$0xff]
      %v2397 = vld [vmem:[#allocation2 + $0x18] sm:$0xff]
      %v2398 = vld [vmem:[#allocation2 + $0x20] sm:$0xff]
      %v2399 = vld [vmem:[#allocation2 + $0x28] sm:$0xff]
      %v2400 = vld [vmem:[#allocation2 + $0x30] sm:$0xff]
      %v2401 = vld [vmem:[#allocation2 + $0x38] sm:$0xff]
      %v2402 = vld [vmem:[#allocation2 + $0x40] sm:$0xff]
      %v2403 = vld [vmem:[#allocation2 + $0x48] sm:$0xff]
      %v2404 = vld [vmem:[#allocation2 + $0x50] sm:$0xff]
      %v2405 = vld [vmem:[#allocation2 + $0x58] sm:$0xff]
      %v2406 = vld [vmem:[#allocation2 + $0x60] sm:$0xff]
      %v2407 = vld [vmem:[#allocation2 + $0x68] sm:$0xff]
      %v2408 = vld [vmem:[#allocation2 + $0x70] sm:$0xff]
      %v2409 = vld [vmem:[#allocation2 + $0x78] sm:$0xff]
      %v2410 = vld [vmem:[#allocation2 + $0x80] sm:$0xff]
      %v2411 = vld [vmem:[#allocation2 + $0x88] sm:$0xff]
      %v2412 = vld [vmem:[#allocation2 + $0x90] sm:$0xff]
      %v2413 = vld [vmem:[#allocation2 + $0x98] sm:$0xff]
      %v2414 = vld [vmem:[#allocation2 + $0xa0] sm:$0xff]
      %v2415 = vld [vmem:[#allocation2 + $0xa8] sm:$0xff]
      %v2416 = vld [vmem:[#allocation2 + $0xb0] sm:$0xff]
      %v2417 = vld [vmem:[#allocation2 + $0xb8] sm:$0xff]
      %v2418 = vld [vmem:[#allocation2 + $0xc0] sm:$0xff]
      %v2419 = vld [vmem:[#allocation2 + $0xc8] sm:$0xff]
      %v2420 = vld [vmem:[#allocation2 + $0xd0] sm:$0xff]
      %v2421 = vld [vmem:[#allocation2 + $0xd8] sm:$0xff]
      %v2422 = vld [vmem:[#allocation2 + $0xe0] sm:$0xff]
      %v2423 = vld [vmem:[#allocation2 + $0xe8] sm:$0xff]
      %v2424 = vld [vmem:[#allocation2 + $0xf0] sm:$0xff]
      %v2425 = vld [vmem:[#allocation2 + $0xf8] sm:$0xff]
      %v2426 = vld [vmem:[#allocation2 + $0x100] sm:$0xff]
      %v2427 = vld [vmem:[#allocation2 + $0x108] sm:$0xff]
      %v2428 = vld [vmem:[#allocation2 + $0x110] sm:$0xff]
      %v2429 = vld [vmem:[#allocation2 + $0x118] sm:$0xff]
      %s2430 = scalar_lea.vmem %s1, 320
      %v2431 = vld [vmem:[%s2430] sm:$0xf]
      %v2432 = vld [vmem:[%s2430 + $0x4] sm:$0xf]
      %v2433 = vld [vmem:[%s2430 + $0x8] sm:$0xf]
      %v2434 = vld [vmem:[%s2430 + $0xc] sm:$0xf]
      %v2435 = vld [vmem:[%s2430 + $0x10] sm:$0xf]
      %v2436 = vld [vmem:[%s2430 + $0x14] sm:$0xf]
      %v2437 = vld [vmem:[%s2430 + $0x18] sm:$0xf]
      %v2438 = vld [vmem:[%s2430 + $0x1c] sm:$0xf]
      %v2439 = vld [vmem:[%s2430 + $0x20] sm:$0xf]
      %v2440 = vld [vmem:[%s2430 + $0x24] sm:$0xf]
      %v2441 = vld [vmem:[%s2430 + $0x28] sm:$0xf]
      %v2442 = vld [vmem:[%s2430 + $0x2c] sm:$0xf]
      %v2443 = vld [vmem:[%s2430 + $0x30] sm:$0xf]
      %v2444 = vld [vmem:[%s2430 + $0x34] sm:$0xf]
      %v2445 = vld [vmem:[%s2430 + $0x38] sm:$0xf]
      %v2446 = vld [vmem:[%s2430 + $0x3c] sm:$0xf]
      %vm2447 = vcmask 1045504
      %v2448 = vrot.slane %v356, 2
      %v2449 = vrot.slane %v357, 2
      %v2450 = vsel %vm2447, %v2448, %v2449
      %v2451 = vrot.slane %v358, 2
      %v2452 = vsel %vm2447, %v2449, %v2451
      %v2453 = vrot.slane %v359, 2
      %v2454 = vsel %vm2447, %v2451, %v2453
      %v2455 = vrot.slane %v360, 2
      %v2456 = vsel %vm2447, %v2453, %v2455
      %v2457 = vrot.slane %v361, 2
      %v2458 = vsel %vm2447, %v2455, %v2457
      %v2459 = vrot.slane %v362, 2
      %v2460 = vsel %vm2447, %v2457, %v2459
      %v2461 = vrot.slane %v363, 2
      %v2462 = vsel %vm2447, %v2459, %v2461
      %v2463 = vrot.slane %v364, 2
      %v2464 = vsel %vm2447, %v2461, %v2463
      %v2465 = vrot.slane %v365, 2
      %v2466 = vsel %vm2447, %v2463, %v2465
      %v2467 = vrot.slane %v366, 2
      %v2468 = vsel %vm2447, %v2465, %v2467
      %v2469 = vrot.slane %v367, 2
      %v2470 = vsel %vm2447, %v2467, %v2469
      %v2471 = vrot.slane %v368, 2
      %v2472 = vsel %vm2447, %v2469, %v2471
      %v2473 = vrot.slane %v369, 2
      %v2474 = vsel %vm2447, %v2471, %v2473
      %v2475 = vrot.slane %v370, 2
      %v2476 = vsel %vm2447, %v2473, %v2475
      %v2477 = vrot.slane %v371, 2
      %v2478 = vsel %vm2447, %v2475, %v2477
      %v2479 = vrot.slane %v372, 2
      %v2480 = vsel %vm2447, %v2477, %v2479
      %v2481 = vrot.slane %v1635, 2
      %v2482 = vsel %vm2447, %v2479, %v2481
      %v2483 = vrot.slane %v1636, 2
      %v2484 = vsel %vm2447, %v2481, %v2483
      %v2519 = vunpack.c.l.b16 %v2431
      %v2520 = vunpack.c.l.b16 %v2432
      %v2521 = vunpack.c.l.b16 %v2433
      %v2522 = vunpack.c.l.b16 %v2434
      %v2523 = vunpack.c.l.b16 %v2435
      %v2524 = vunpack.c.l.b16 %v2436
      %v2525 = vunpack.c.l.b16 %v2437
      %v2526 = vunpack.c.l.b16 %v2438
      %v2527 = vunpack.c.l.b16 %v2439
      %v2528 = vunpack.c.l.b16 %v2440
      %v2529 = vunpack.c.l.b16 %v2441
      %v2530 = vunpack.c.l.b16 %v2442
      %v2531 = vunpack.c.l.b16 %v2443
      %v2532 = vunpack.c.l.b16 %v2444
      %v2533 = vunpack.c.l.b16 %v2445
      %v2534 = vunpack.c.l.b16 %v2446
      %v2535 = vpack.c.b16 %v2520, %v2519
      %v2536 = vpack.c.b16 %v2522, %v2521
      %v2537 = vpack.c.b16 %v2524, %v2523
      %v2538 = vpack.c.b16 %v2526, %v2525
      %v2539 = vpack.c.b16 %v2528, %v2527
      %v2540 = vpack.c.b16 %v2530, %v2529
      %v2541 = vpack.c.b16 %v2532, %v2531
      %v2542 = vpack.c.b16 %v2534, %v2533
      %2551 = vmatprep.subr.bf16.mxu0 0
      %2552 = vmatpush1.bf16.msra.mxu0 %v2542
      %2553 = vmatprep.subr.bf16.mxu0 0
      %2554 = vmatpush1.bf16.msra.mxu0 %v2541
      %2555 = vmatprep.subr.bf16.mxu0 0
      %2556 = vmatpush1.bf16.msra.mxu0 %v2540
      %2557 = vmatprep.subr.bf16.mxu0 0
      %2558 = vmatpush1.bf16.msra.mxu0 %v2539
      %2559 = vmatprep.subr.bf16.mxu0 0
      %2560 = vmatpush1.bf16.msra.mxu0 %v2538
      %2561 = vmatprep.subr.bf16.mxu0 0
      %2562 = vmatpush1.bf16.msra.mxu0 %v2537
      %2563 = vmatprep.subr.bf16.mxu0 0
      %2564 = vmatpush1.bf16.msra.mxu0 %v2536
      %2565 = vmatprep.subr.bf16.mxu0 0
      %2566 = vmatpush1.bf16.msra.mxu0 %v2535
      %2567 = vmatprep.subr.bf16.mxu0 0
      %2568 = vmatpush2.bf16.msra.mxu0 0
      %2569 = vmatprep.subr.bf16.mxu0 0
      %2570 = vmatpush2.bf16.msra.mxu0 0
      %2571 = vmatprep.subr.bf16.mxu0 0
      %2572 = vmatpush2.bf16.msra.mxu0 0
      %2573 = vmatprep.subr.bf16.mxu0 0
      %2574 = vmatpush2.bf16.msra.mxu0 0
      %2575 = vmatprep.subr.bf16.mxu0 0
      %2576 = vmatpush2.bf16.msra.mxu0 0
      %2577 = vmatprep.subr.bf16.mxu0 0
      %2578 = vmatpush2.bf16.msra.mxu0 0
      %2579 = vmatprep.subr.bf16.mxu0 0
      %2580 = vmatpush2.bf16.msra.mxu0 0
      %2581 = vmatprep.subr.bf16.mxu0 0
      %2582 = vmatpush2.bf16.msra.mxu0 0
      %2583 = vmatprep.mubr.bf16.mxu0 0
      %2584 = vmatmul.mubr.bf16.gmra.mxu0 %v2450
      %v2585 = vpop.f32.mrf.mxu0
      %v2586 = vadd.f32 0.0, %v2585
      %v2587 = vpop.f32.mrf.mxu0
      %v2588 = vpop.f32.mrf.mxu0
      %v2589 = vadd.f32 0.0, %v2588
      %v2590 = vpop.f32.mrf.mxu0
      %2591 = vmatprep.mubr.bf16.mxu0 0
      %2592 = vmatmul.mubr.bf16.gmra.mxu0 %v2452
      %v2593 = vpop.f32.mrf.mxu0
      %v2594 = vadd.f32 0.0, %v2593
      %v2595 = vpop.f32.mrf.mxu0
      %v2596 = vpop.f32.mrf.mxu0
      %v2597 = vadd.f32 0.0, %v2596
      %v2598 = vpop.f32.mrf.mxu0
      %2599 = vmatprep.mubr.bf16.mxu0 0
      %2600 = vmatmul.mubr.bf16.gmra.mxu0 %v2454
      %v2601 = vpop.f32.mrf.mxu0
      %v2602 = vadd.f32 0.0, %v2601
      %v2603 = vpop.f32.mrf.mxu0
      %v2604 = vpop.f32.mrf.mxu0
      %v2605 = vadd.f32 0.0, %v2604
      %v2606 = vpop.f32.mrf.mxu0
      %2607 = vmatprep.mubr.bf16.mxu0 0
      %2608 = vmatmul.mubr.bf16.gmra.mxu0 %v2456
      %v2609 = vpop.f32.mrf.mxu0
      %v2610 = vadd.f32 0.0, %v2609
      %v2611 = vpop.f32.mrf.mxu0
      %v2612 = vpop.f32.mrf.mxu0
      %v2613 = vadd.f32 0.0, %v2612
      %v2614 = vpop.f32.mrf.mxu0
      %2615 = vmatprep.mubr.bf16.mxu0 0
      %2616 = vmatmul.mubr.bf16.gmra.mxu0 %v2458
      %v2617 = vpop.f32.mrf.mxu0
      %v2618 = vadd.f32 0.0, %v2617
      %v2619 = vpop.f32.mrf.mxu0
      %v2620 = vpop.f32.mrf.mxu0
      %v2621 = vadd.f32 0.0, %v2620
      %v2622 = vpop.f32.mrf.mxu0
      %2623 = vmatprep.mubr.bf16.mxu0 0
      %2624 = vmatmul.mubr.bf16.gmra.mxu0 %v2460
      %v2625 = vpop.f32.mrf.mxu0
      %v2626 = vadd.f32 0.0, %v2625
      %v2627 = vpop.f32.mrf.mxu0
      %v2628 = vpop.f32.mrf.mxu0
      %v2629 = vadd.f32 0.0, %v2628
      %v2630 = vpop.f32.mrf.mxu0
      %2631 = vmatprep.mubr.bf16.mxu0 0
      %2632 = vmatmul.mubr.bf16.gmra.mxu0 %v2462
      %v2633 = vpop.f32.mrf.mxu0
      %v2634 = vadd.f32 0.0, %v2633
      %v2635 = vpop.f32.mrf.mxu0
      %v2636 = vpop.f32.mrf.mxu0
      %v2637 = vadd.f32 0.0, %v2636
      %v2638 = vpop.f32.mrf.mxu0
      %2639 = vmatprep.mubr.bf16.mxu0 0
      %2640 = vmatmul.mubr.bf16.gmra.mxu0 %v2464
      %v2641 = vpop.f32.mrf.mxu0
      %v2642 = vadd.f32 0.0, %v2641
      %v2643 = vpop.f32.mrf.mxu0
      %v2644 = vpop.f32.mrf.mxu0
      %v2645 = vadd.f32 0.0, %v2644
      %v2646 = vpop.f32.mrf.mxu0
      %2647 = vmatprep.mubr.bf16.mxu0 0
      %2648 = vmatmul.mubr.bf16.gmra.mxu0 %v2466
      %v2649 = vpop.f32.mrf.mxu0
      %v2650 = vadd.f32 0.0, %v2649
      %v2651 = vpop.f32.mrf.mxu0
      %v2652 = vpop.f32.mrf.mxu0
      %v2653 = vadd.f32 0.0, %v2652
      %v2654 = vpop.f32.mrf.mxu0
      %2655 = vmatprep.mubr.bf16.mxu0 0
      %2656 = vmatmul.mubr.bf16.gmra.mxu0 %v2468
      %v2657 = vpop.f32.mrf.mxu0
      %v2658 = vadd.f32 0.0, %v2657
      %v2659 = vpop.f32.mrf.mxu0
      %v2660 = vpop.f32.mrf.mxu0
      %v2661 = vadd.f32 0.0, %v2660
      %v2662 = vpop.f32.mrf.mxu0
      %2663 = vmatprep.mubr.bf16.mxu0 0
      %2664 = vmatmul.mubr.bf16.gmra.mxu0 %v2470
      %v2665 = vpop.f32.mrf.mxu0
      %v2666 = vadd.f32 0.0, %v2665
      %v2667 = vpop.f32.mrf.mxu0
      %v2668 = vpop.f32.mrf.mxu0
      %v2669 = vadd.f32 0.0, %v2668
      %v2670 = vpop.f32.mrf.mxu0
      %2671 = vmatprep.mubr.bf16.mxu0 0
      %2672 = vmatmul.mubr.bf16.gmra.mxu0 %v2472
      %v2673 = vpop.f32.mrf.mxu0
      %v2674 = vadd.f32 0.0, %v2673
      %v2675 = vpop.f32.mrf.mxu0
      %v2676 = vpop.f32.mrf.mxu0
      %v2677 = vadd.f32 0.0, %v2676
      %v2678 = vpop.f32.mrf.mxu0
      %2679 = vmatprep.mubr.bf16.mxu0 0
      %2680 = vmatmul.mubr.bf16.gmra.mxu0 %v2474
      %v2681 = vpop.f32.mrf.mxu0
      %v2682 = vadd.f32 0.0, %v2681
      %v2683 = vpop.f32.mrf.mxu0
      %v2684 = vpop.f32.mrf.mxu0
      %v2685 = vadd.f32 0.0, %v2684
      %v2686 = vpop.f32.mrf.mxu0
      %2687 = vmatprep.mubr.bf16.mxu0 0
      %2688 = vmatmul.mubr.bf16.gmra.mxu0 %v2476
      %v2689 = vpop.f32.mrf.mxu0
      %v2690 = vadd.f32 0.0, %v2689
      %v2691 = vpop.f32.mrf.mxu0
      %v2692 = vpop.f32.mrf.mxu0
      %v2693 = vadd.f32 0.0, %v2692
      %v2694 = vpop.f32.mrf.mxu0
      %2695 = vmatprep.mubr.bf16.mxu0 0
      %2696 = vmatmul.mubr.bf16.gmra.mxu0 %v2478
      %v2697 = vpop.f32.mrf.mxu0
      %v2698 = vadd.f32 0.0, %v2697
      %v2699 = vpop.f32.mrf.mxu0
      %v2700 = vpop.f32.mrf.mxu0
      %v2701 = vadd.f32 0.0, %v2700
      %v2702 = vpop.f32.mrf.mxu0
      %2703 = vmatprep.mubr.bf16.mxu0 0
      %2704 = vmatmul.mubr.bf16.gmra.mxu0 %v2480
      %v2705 = vpop.f32.mrf.mxu0
      %v2706 = vadd.f32 0.0, %v2705
      %v2707 = vpop.f32.mrf.mxu0
      %v2708 = vpop.f32.mrf.mxu0
      %v2709 = vadd.f32 0.0, %v2708
      %v2710 = vpop.f32.mrf.mxu0
      %2711 = vmatprep.mubr.bf16.mxu0 0
      %2712 = vmatmul.mubr.bf16.gmra.mxu0 %v2482
      %v2713 = vpop.f32.mrf.mxu0
      %v2714 = vadd.f32 0.0, %v2713
      %v2715 = vpop.f32.mrf.mxu0
      %v2716 = vpop.f32.mrf.mxu0
      %v2717 = vadd.f32 0.0, %v2716
      %v2718 = vpop.f32.mrf.mxu0
      %2719 = vmatprep.mubr.bf16.mxu0 0
      %2720 = vmatmul.mubr.bf16.gmra.mxu0 %v2484
      %v2721 = vpop.f32.mrf.mxu0
      %v2722 = vadd.f32 0.0, %v2721
      %v2723 = vpop.f32.mrf.mxu0
      %v2724 = vpop.f32.mrf.mxu0
      %v2725 = vadd.f32 0.0, %v2724
      %v2726 = vpop.f32.mrf.mxu0
      %2727 = vdwg.mxu0
      %v2728 = vadd.f32 %v2394, %v2586
      %v2729 = vadd.f32 %v2395, %v2589
      %v2730 = vadd.f32 %v2396, %v2594
      %v2731 = vadd.f32 %v2397, %v2597
      %v2732 = vadd.f32 %v2398, %v2602
      %v2733 = vadd.f32 %v2399, %v2605
      %v2734 = vadd.f32 %v2400, %v2610
      %v2735 = vadd.f32 %v2401, %v2613
      %v2736 = vadd.f32 %v2402, %v2618
      %v2737 = vadd.f32 %v2403, %v2621
      %v2738 = vadd.f32 %v2404, %v2626
      %v2739 = vadd.f32 %v2405, %v2629
      %v2740 = vadd.f32 %v2406, %v2634
      %v2741 = vadd.f32 %v2407, %v2637
      %v2742 = vadd.f32 %v2408, %v2642
      %v2743 = vadd.f32 %v2409, %v2645
      %v2744 = vadd.f32 %v2410, %v2650
      %v2745 = vadd.f32 %v2411, %v2653
      %v2746 = vadd.f32 %v2412, %v2658
      %v2747 = vadd.f32 %v2413, %v2661
      %v2748 = vadd.f32 %v2414, %v2666
      %v2749 = vadd.f32 %v2415, %v2669
      %v2750 = vadd.f32 %v2416, %v2674
      %v2751 = vadd.f32 %v2417, %v2677
      %v2752 = vadd.f32 %v2418, %v2682
      %v2753 = vadd.f32 %v2419, %v2685
      %v2754 = vadd.f32 %v2420, %v2690
      %v2755 = vadd.f32 %v2421, %v2693
      %v2756 = vadd.f32 %v2422, %v2698
      %v2757 = vadd.f32 %v2423, %v2701
      %v2758 = vadd.f32 %v2424, %v2706
      %v2759 = vadd.f32 %v2425, %v2709
      %v2760 = vadd.f32 %v2426, %v2714
      %v2761 = vadd.f32 %v2427, %v2717
      %v2762 = vadd.f32 %v2428, %v2722
      %v2763 = vadd.f32 %v2429, %v2725
      %2764 = vst [vmem:[#allocation2] sm:$0xff] %v2728
      %2765 = vst [vmem:[#allocation2 + $0x8] sm:$0xff] %v2729
      %2766 = vst [vmem:[#allocation2 + $0x10] sm:$0xff] %v2730
      %2767 = vst [vmem:[#allocation2 + $0x18] sm:$0xff] %v2731
      %2768 = vst [vmem:[#allocation2 + $0x20] sm:$0xff] %v2732
      %2769 = vst [vmem:[#allocation2 + $0x28] sm:$0xff] %v2733
      %2770 = vst [vmem:[#allocation2 + $0x30] sm:$0xff] %v2734
      %2771 = vst [vmem:[#allocation2 + $0x38] sm:$0xff] %v2735
      %2772 = vst [vmem:[#allocation2 + $0x40] sm:$0xff] %v2736
      %2773 = vst [vmem:[#allocation2 + $0x48] sm:$0xff] %v2737
      %2774 = vst [vmem:[#allocation2 + $0x50] sm:$0xff] %v2738
      %2775 = vst [vmem:[#allocation2 + $0x58] sm:$0xff] %v2739
      %2776 = vst [vmem:[#allocation2 + $0x60] sm:$0xff] %v2740
      %2777 = vst [vmem:[#allocation2 + $0x68] sm:$0xff] %v2741
      %2778 = vst [vmem:[#allocation2 + $0x70] sm:$0xff] %v2742
      %2779 = vst [vmem:[#allocation2 + $0x78] sm:$0xff] %v2743
      %2780 = vst [vmem:[#allocation2 + $0x80] sm:$0xff] %v2744
      %2781 = vst [vmem:[#allocation2 + $0x88] sm:$0xff] %v2745
      %2782 = vst [vmem:[#allocation2 + $0x90] sm:$0xff] %v2746
      %2783 = vst [vmem:[#allocation2 + $0x98] sm:$0xff] %v2747
      %2784 = vst [vmem:[#allocation2 + $0xa0] sm:$0xff] %v2748
      %2785 = vst [vmem:[#allocation2 + $0xa8] sm:$0xff] %v2749
      %2786 = vst [vmem:[#allocation2 + $0xb0] sm:$0xff] %v2750
      %2787 = vst [vmem:[#allocation2 + $0xb8] sm:$0xff] %v2751
      %2788 = vst [vmem:[#allocation2 + $0xc0] sm:$0xff] %v2752
      %2789 = vst [vmem:[#allocation2 + $0xc8] sm:$0xff] %v2753
      %2790 = vst [vmem:[#allocation2 + $0xd0] sm:$0xff] %v2754
      %2791 = vst [vmem:[#allocation2 + $0xd8] sm:$0xff] %v2755
      %2792 = vst [vmem:[#allocation2 + $0xe0] sm:$0xff] %v2756
      %2793 = vst [vmem:[#allocation2 + $0xe8] sm:$0xff] %v2757
      %2794 = vst [vmem:[#allocation2 + $0xf0] sm:$0xff] %v2758
      %2795 = vst [vmem:[#allocation2 + $0xf8] sm:$0xff] %v2759
      %2796 = vst [vmem:[#allocation2 + $0x100] sm:$0xff] %v2760
      %2797 = vst [vmem:[#allocation2 + $0x108] sm:$0xff] %v2761
      %2798 = vst [vmem:[#allocation2 + $0x110] sm:$0xff] %v2762
      %2799 = vst [vmem:[#allocation2 + $0x118] sm:$0xff] %v2763
      %v2800 = vld [vmem:[#allocation2] sm:$0xff]
      %v2801 = vld [vmem:[#allocation2 + $0x8] sm:$0xff]
      %v2802 = vld [vmem:[#allocation2 + $0x10] sm:$0xff]
      %v2803 = vld [vmem:[#allocation2 + $0x18] sm:$0xff]
      %v2804 = vld [vmem:[#allocation2 + $0x20] sm:$0xff]
      %v2805 = vld [vmem:[#allocation2 + $0x28] sm:$0xff]
      %v2806 = vld [vmem:[#allocation2 + $0x30] sm:$0xff]
      %v2807 = vld [vmem:[#allocation2 + $0x38] sm:$0xff]
      %v2808 = vld [vmem:[#allocation2 + $0x40] sm:$0xff]
      %v2809 = vld [vmem:[#allocation2 + $0x48] sm:$0xff]
      %v2810 = vld [vmem:[#allocation2 + $0x50] sm:$0xff]
      %v2811 = vld [vmem:[#allocation2 + $0x58] sm:$0xff]
      %v2812 = vld [vmem:[#allocation2 + $0x60] sm:$0xff]
      %v2813 = vld [vmem:[#allocation2 + $0x68] sm:$0xff]
      %v2814 = vld [vmem:[#allocation2 + $0x70] sm:$0xff]
      %v2815 = vld [vmem:[#allocation2 + $0x78] sm:$0xff]
      %v2816 = vld [vmem:[#allocation2 + $0x80] sm:$0xff]
      %v2817 = vld [vmem:[#allocation2 + $0x88] sm:$0xff]
      %v2818 = vld [vmem:[#allocation2 + $0x90] sm:$0xff]
      %v2819 = vld [vmem:[#allocation2 + $0x98] sm:$0xff]
      %v2820 = vld [vmem:[#allocation2 + $0xa0] sm:$0xff]
      %v2821 = vld [vmem:[#allocation2 + $0xa8] sm:$0xff]
      %v2822 = vld [vmem:[#allocation2 + $0xb0] sm:$0xff]
      %v2823 = vld [vmem:[#allocation2 + $0xb8] sm:$0xff]
      %v2824 = vld [vmem:[#allocation2 + $0xc0] sm:$0xff]
      %v2825 = vld [vmem:[#allocation2 + $0xc8] sm:$0xff]
      %v2826 = vld [vmem:[#allocation2 + $0xd0] sm:$0xff]
      %v2827 = vld [vmem:[#allocation2 + $0xd8] sm:$0xff]
      %v2828 = vld [vmem:[#allocation2 + $0xe0] sm:$0xff]
      %v2829 = vld [vmem:[#allocation2 + $0xe8] sm:$0xff]
      %v2830 = vld [vmem:[#allocation2 + $0xf0] sm:$0xff]
      %v2831 = vld [vmem:[#allocation2 + $0xf8] sm:$0xff]
      %v2832 = vld [vmem:[#allocation2 + $0x100] sm:$0xff]
      %v2833 = vld [vmem:[#allocation2 + $0x108] sm:$0xff]
      %v2834 = vld [vmem:[#allocation2 + $0x110] sm:$0xff]
      %v2835 = vld [vmem:[#allocation2 + $0x118] sm:$0xff]
      %s2836 = scalar_lea.vmem %s1, 384
      %v2837 = vld [vmem:[%s2836] sm:$0xf]
      %v2838 = vld [vmem:[%s2836 + $0x4] sm:$0xf]
      %v2839 = vld [vmem:[%s2836 + $0x8] sm:$0xf]
      %v2840 = vld [vmem:[%s2836 + $0xc] sm:$0xf]
      %v2841 = vld [vmem:[%s2836 + $0x10] sm:$0xf]
      %v2842 = vld [vmem:[%s2836 + $0x14] sm:$0xf]
      %v2843 = vld [vmem:[%s2836 + $0x18] sm:$0xf]
      %v2844 = vld [vmem:[%s2836 + $0x1c] sm:$0xf]
      %v2845 = vld [vmem:[%s2836 + $0x20] sm:$0xf]
      %v2846 = vld [vmem:[%s2836 + $0x24] sm:$0xf]
      %v2847 = vld [vmem:[%s2836 + $0x28] sm:$0xf]
      %v2848 = vld [vmem:[%s2836 + $0x2c] sm:$0xf]
      %v2849 = vld [vmem:[%s2836 + $0x30] sm:$0xf]
      %v2850 = vld [vmem:[%s2836 + $0x34] sm:$0xf]
      %v2851 = vld [vmem:[%s2836 + $0x38] sm:$0xf]
      %v2852 = vld [vmem:[%s2836 + $0x3c] sm:$0xf]
      %v2855 = vunpack.c.l.b16 %v265
      %v2856 = vunpack.c.l.b16 %v266
      %v2857 = vpack.c.b16 %v2855, %v1634
      %v2858 = vpack.c.b16 %v2856, %v2856
      %v2859 = vrot.slane %v2857, 2
      %v2860 = vsel %vm2447, %v2481, %v2859
      %v2861 = vrot.slane %v2858, 2
      %v2862 = vsel %vm2447, %v2859, %v2861
      %v2881 = vunpack.c.l.b16 %v2837
      %v2882 = vunpack.c.l.b16 %v2838
      %v2883 = vunpack.c.l.b16 %v2839
      %v2884 = vunpack.c.l.b16 %v2840
      %v2885 = vunpack.c.l.b16 %v2841
      %v2886 = vunpack.c.l.b16 %v2842
      %v2887 = vunpack.c.l.b16 %v2843
      %v2888 = vunpack.c.l.b16 %v2844
      %v2889 = vunpack.c.l.b16 %v2845
      %v2890 = vunpack.c.l.b16 %v2846
      %v2891 = vunpack.c.l.b16 %v2847
      %v2892 = vunpack.c.l.b16 %v2848
      %v2893 = vunpack.c.l.b16 %v2849
      %v2894 = vunpack.c.l.b16 %v2850
      %v2895 = vunpack.c.l.b16 %v2851
      %v2896 = vunpack.c.l.b16 %v2852
      %v2897 = vpack.c.b16 %v2882, %v2881
      %v2898 = vpack.c.b16 %v2884, %v2883
      %v2899 = vpack.c.b16 %v2886, %v2885
      %v2900 = vpack.c.b16 %v2888, %v2887
      %v2901 = vpack.c.b16 %v2890, %v2889
      %v2902 = vpack.c.b16 %v2892, %v2891
      %v2903 = vpack.c.b16 %v2894, %v2893
      %v2904 = vpack.c.b16 %v2896, %v2895
      %2913 = vmatprep.subr.bf16.mxu0 0
      %2914 = vmatpush1.bf16.msra.mxu0 %v2904
      %2915 = vmatprep.subr.bf16.mxu0 0
      %2916 = vmatpush1.bf16.msra.mxu0 %v2903
      %2917 = vmatprep.subr.bf16.mxu0 0
      %2918 = vmatpush1.bf16.msra.mxu0 %v2902
      %2919 = vmatprep.subr.bf16.mxu0 0
      %2920 = vmatpush1.bf16.msra.mxu0 %v2901
      %2921 = vmatprep.subr.bf16.mxu0 0
      %2922 = vmatpush1.bf16.msra.mxu0 %v2900
      %2923 = vmatprep.subr.bf16.mxu0 0
      %2924 = vmatpush1.bf16.msra.mxu0 %v2899
      %2925 = vmatprep.subr.bf16.mxu0 0
      %2926 = vmatpush1.bf16.msra.mxu0 %v2898
      %2927 = vmatprep.subr.bf16.mxu0 0
      %2928 = vmatpush1.bf16.msra.mxu0 %v2897
      %2929 = vmatprep.subr.bf16.mxu0 0
      %2930 = vmatpush2.bf16.msra.mxu0 0
      %2931 = vmatprep.subr.bf16.mxu0 0
      %2932 = vmatpush2.bf16.msra.mxu0 0
      %2933 = vmatprep.subr.bf16.mxu0 0
      %2934 = vmatpush2.bf16.msra.mxu0 0
      %2935 = vmatprep.subr.bf16.mxu0 0
      %2936 = vmatpush2.bf16.msra.mxu0 0
      %2937 = vmatprep.subr.bf16.mxu0 0
      %2938 = vmatpush2.bf16.msra.mxu0 0
      %2939 = vmatprep.subr.bf16.mxu0 0
      %2940 = vmatpush2.bf16.msra.mxu0 0
      %2941 = vmatprep.subr.bf16.mxu0 0
      %2942 = vmatpush2.bf16.msra.mxu0 0
      %2943 = vmatprep.subr.bf16.mxu0 0
      %2944 = vmatpush2.bf16.msra.mxu0 0
      %2945 = vmatprep.mubr.bf16.mxu0 0
      %2946 = vmatmul.mubr.bf16.gmra.mxu0 %v2452
      %v2947 = vpop.f32.mrf.mxu0
      %v2948 = vadd.f32 0.0, %v2947
      %v2949 = vpop.f32.mrf.mxu0
      %v2950 = vpop.f32.mrf.mxu0
      %v2951 = vadd.f32 0.0, %v2950
      %v2952 = vpop.f32.mrf.mxu0
      %2953 = vmatprep.mubr.bf16.mxu0 0
      %2954 = vmatmul.mubr.bf16.gmra.mxu0 %v2454
      %v2955 = vpop.f32.mrf.mxu0
      %v2956 = vadd.f32 0.0, %v2955
      %v2957 = vpop.f32.mrf.mxu0
      %v2958 = vpop.f32.mrf.mxu0
      %v2959 = vadd.f32 0.0, %v2958
      %v2960 = vpop.f32.mrf.mxu0
      %2961 = vmatprep.mubr.bf16.mxu0 0
      %2962 = vmatmul.mubr.bf16.gmra.mxu0 %v2456
      %v2963 = vpop.f32.mrf.mxu0
      %v2964 = vadd.f32 0.0, %v2963
      %v2965 = vpop.f32.mrf.mxu0
      %v2966 = vpop.f32.mrf.mxu0
      %v2967 = vadd.f32 0.0, %v2966
      %v2968 = vpop.f32.mrf.mxu0
      %2969 = vmatprep.mubr.bf16.mxu0 0
      %2970 = vmatmul.mubr.bf16.gmra.mxu0 %v2458
      %v2971 = vpop.f32.mrf.mxu0
      %v2972 = vadd.f32 0.0, %v2971
      %v2973 = vpop.f32.mrf.mxu0
      %v2974 = vpop.f32.mrf.mxu0
      %v2975 = vadd.f32 0.0, %v2974
      %v2976 = vpop.f32.mrf.mxu0
      %2977 = vmatprep.mubr.bf16.mxu0 0
      %2978 = vmatmul.mubr.bf16.gmra.mxu0 %v2460
      %v2979 = vpop.f32.mrf.mxu0
      %v2980 = vadd.f32 0.0, %v2979
      %v2981 = vpop.f32.mrf.mxu0
      %v2982 = vpop.f32.mrf.mxu0
      %v2983 = vadd.f32 0.0, %v2982
      %v2984 = vpop.f32.mrf.mxu0
      %2985 = vmatprep.mubr.bf16.mxu0 0
      %2986 = vmatmul.mubr.bf16.gmra.mxu0 %v2462
      %v2987 = vpop.f32.mrf.mxu0
      %v2988 = vadd.f32 0.0, %v2987
      %v2989 = vpop.f32.mrf.mxu0
      %v2990 = vpop.f32.mrf.mxu0
      %v2991 = vadd.f32 0.0, %v2990
      %v2992 = vpop.f32.mrf.mxu0
      %2993 = vmatprep.mubr.bf16.mxu0 0
      %2994 = vmatmul.mubr.bf16.gmra.mxu0 %v2464
      %v2995 = vpop.f32.mrf.mxu0
      %v2996 = vadd.f32 0.0, %v2995
      %v2997 = vpop.f32.mrf.mxu0
      %v2998 = vpop.f32.mrf.mxu0
      %v2999 = vadd.f32 0.0, %v2998
      %v3000 = vpop.f32.mrf.mxu0
      %3001 = vmatprep.mubr.bf16.mxu0 0
      %3002 = vmatmul.mubr.bf16.gmra.mxu0 %v2466
      %v3003 = vpop.f32.mrf.mxu0
      %v3004 = vadd.f32 0.0, %v3003
      %v3005 = vpop.f32.mrf.mxu0
      %v3006 = vpop.f32.mrf.mxu0
      %v3007 = vadd.f32 0.0, %v3006
      %v3008 = vpop.f32.mrf.mxu0
      %3009 = vmatprep.mubr.bf16.mxu0 0
      %3010 = vmatmul.mubr.bf16.gmra.mxu0 %v2468
      %v3011 = vpop.f32.mrf.mxu0
      %v3012 = vadd.f32 0.0, %v3011
      %v3013 = vpop.f32.mrf.mxu0
      %v3014 = vpop.f32.mrf.mxu0
      %v3015 = vadd.f32 0.0, %v3014
      %v3016 = vpop.f32.mrf.mxu0
      %3017 = vmatprep.mubr.bf16.mxu0 0
      %3018 = vmatmul.mubr.bf16.gmra.mxu0 %v2470
      %v3019 = vpop.f32.mrf.mxu0
      %v3020 = vadd.f32 0.0, %v3019
      %v3021 = vpop.f32.mrf.mxu0
      %v3022 = vpop.f32.mrf.mxu0
      %v3023 = vadd.f32 0.0, %v3022
      %v3024 = vpop.f32.mrf.mxu0
      %3025 = vmatprep.mubr.bf16.mxu0 0
      %3026 = vmatmul.mubr.bf16.gmra.mxu0 %v2472
      %v3027 = vpop.f32.mrf.mxu0
      %v3028 = vadd.f32 0.0, %v3027
      %v3029 = vpop.f32.mrf.mxu0
      %v3030 = vpop.f32.mrf.mxu0
      %v3031 = vadd.f32 0.0, %v3030
      %v3032 = vpop.f32.mrf.mxu0
      %3033 = vmatprep.mubr.bf16.mxu0 0
      %3034 = vmatmul.mubr.bf16.gmra.mxu0 %v2474
      %v3035 = vpop.f32.mrf.mxu0
      %v3036 = vadd.f32 0.0, %v3035
      %v3037 = vpop.f32.mrf.mxu0
      %v3038 = vpop.f32.mrf.mxu0
      %v3039 = vadd.f32 0.0, %v3038
      %v3040 = vpop.f32.mrf.mxu0
      %3041 = vmatprep.mubr.bf16.mxu0 0
      %3042 = vmatmul.mubr.bf16.gmra.mxu0 %v2476
      %v3043 = vpop.f32.mrf.mxu0
      %v3044 = vadd.f32 0.0, %v3043
      %v3045 = vpop.f32.mrf.mxu0
      %v3046 = vpop.f32.mrf.mxu0
      %v3047 = vadd.f32 0.0, %v3046
      %v3048 = vpop.f32.mrf.mxu0
      %3049 = vmatprep.mubr.bf16.mxu0 0
      %3050 = vmatmul.mubr.bf16.gmra.mxu0 %v2478
      %v3051 = vpop.f32.mrf.mxu0
      %v3052 = vadd.f32 0.0, %v3051
      %v3053 = vpop.f32.mrf.mxu0
      %v3054 = vpop.f32.mrf.mxu0
      %v3055 = vadd.f32 0.0, %v3054
      %v3056 = vpop.f32.mrf.mxu0
      %3057 = vmatprep.mubr.bf16.mxu0 0
      %3058 = vmatmul.mubr.bf16.gmra.mxu0 %v2480
      %v3059 = vpop.f32.mrf.mxu0
      %v3060 = vadd.f32 0.0, %v3059
      %v3061 = vpop.f32.mrf.mxu0
      %v3062 = vpop.f32.mrf.mxu0
      %v3063 = vadd.f32 0.0, %v3062
      %v3064 = vpop.f32.mrf.mxu0
      %3065 = vmatprep.mubr.bf16.mxu0 0
      %3066 = vmatmul.mubr.bf16.gmra.mxu0 %v2482
      %v3067 = vpop.f32.mrf.mxu0
      %v3068 = vadd.f32 0.0, %v3067
      %v3069 = vpop.f32.mrf.mxu0
      %v3070 = vpop.f32.mrf.mxu0
      %v3071 = vadd.f32 0.0, %v3070
      %v3072 = vpop.f32.mrf.mxu0
      %3073 = vmatprep.mubr.bf16.mxu0 0
      %3074 = vmatmul.mubr.bf16.gmra.mxu0 %v2860
      %v3075 = vpop.f32.mrf.mxu0
      %v3076 = vadd.f32 0.0, %v3075
      %v3077 = vpop.f32.mrf.mxu0
      %v3078 = vpop.f32.mrf.mxu0
      %v3079 = vadd.f32 0.0, %v3078
      %v3080 = vpop.f32.mrf.mxu0
      %3081 = vmatprep.mubr.bf16.mxu0 0
      %3082 = vmatmul.mubr.bf16.gmra.mxu0 %v2862
      %v3083 = vpop.f32.mrf.mxu0
      %v3084 = vadd.f32 0.0, %v3083
      %v3085 = vpop.f32.mrf.mxu0
      %v3086 = vpop.f32.mrf.mxu0
      %v3087 = vadd.f32 0.0, %v3086
      %v3088 = vpop.f32.mrf.mxu0
      %3089 = vdwg.mxu0
      %v3090 = vadd.f32 %v2800, %v2948
      %v3091 = vadd.f32 %v2801, %v2951
      %v3092 = vadd.f32 %v2802, %v2956
      %v3093 = vadd.f32 %v2803, %v2959
      %v3094 = vadd.f32 %v2804, %v2964
      %v3095 = vadd.f32 %v2805, %v2967
      %v3096 = vadd.f32 %v2806, %v2972
      %v3097 = vadd.f32 %v2807, %v2975
      %v3098 = vadd.f32 %v2808, %v2980
      %v3099 = vadd.f32 %v2809, %v2983
      %v3100 = vadd.f32 %v2810, %v2988
      %v3101 = vadd.f32 %v2811, %v2991
      %v3102 = vadd.f32 %v2812, %v2996
      %v3103 = vadd.f32 %v2813, %v2999
      %v3104 = vadd.f32 %v2814, %v3004
      %v3105 = vadd.f32 %v2815, %v3007
      %v3106 = vadd.f32 %v2816, %v3012
      %v3107 = vadd.f32 %v2817, %v3015
      %v3108 = vadd.f32 %v2818, %v3020
      %v3109 = vadd.f32 %v2819, %v3023
      %v3110 = vadd.f32 %v2820, %v3028
      %v3111 = vadd.f32 %v2821, %v3031
      %v3112 = vadd.f32 %v2822, %v3036
      %v3113 = vadd.f32 %v2823, %v3039
      %v3114 = vadd.f32 %v2824, %v3044
      %v3115 = vadd.f32 %v2825, %v3047
      %v3116 = vadd.f32 %v2826, %v3052
      %v3117 = vadd.f32 %v2827, %v3055
      %v3118 = vadd.f32 %v2828, %v3060
      %v3119 = vadd.f32 %v2829, %v3063
      %v3120 = vadd.f32 %v2830, %v3068
      %v3121 = vadd.f32 %v2831, %v3071
      %v3122 = vadd.f32 %v2832, %v3076
      %v3123 = vadd.f32 %v2833, %v3079
      %v3124 = vadd.f32 %v2834, %v3084
      %v3125 = vadd.f32 %v2835, %v3087
      %3126 = vst [vmem:[#allocation2] sm:$0xff] %v3090
      %3127 = vst [vmem:[#allocation2 + $0x8] sm:$0xff] %v3091
      %3128 = vst [vmem:[#allocation2 + $0x10] sm:$0xff] %v3092
      %3129 = vst [vmem:[#allocation2 + $0x18] sm:$0xff] %v3093
      %3130 = vst [vmem:[#allocation2 + $0x20] sm:$0xff] %v3094
      %3131 = vst [vmem:[#allocation2 + $0x28] sm:$0xff] %v3095
      %3132 = vst [vmem:[#allocation2 + $0x30] sm:$0xff] %v3096
      %3133 = vst [vmem:[#allocation2 + $0x38] sm:$0xff] %v3097
      %3134 = vst [vmem:[#allocation2 + $0x40] sm:$0xff] %v3098
      %3135 = vst [vmem:[#allocation2 + $0x48] sm:$0xff] %v3099
      %3136 = vst [vmem:[#allocation2 + $0x50] sm:$0xff] %v3100
      %3137 = vst [vmem:[#allocation2 + $0x58] sm:$0xff] %v3101
      %3138 = vst [vmem:[#allocation2 + $0x60] sm:$0xff] %v3102
      %3139 = vst [vmem:[#allocation2 + $0x68] sm:$0xff] %v3103
      %3140 = vst [vmem:[#allocation2 + $0x70] sm:$0xff] %v3104
      %3141 = vst [vmem:[#allocation2 + $0x78] sm:$0xff] %v3105
      %3142 = vst [vmem:[#allocation2 + $0x80] sm:$0xff] %v3106
      %3143 = vst [vmem:[#allocation2 + $0x88] sm:$0xff] %v3107
      %3144 = vst [vmem:[#allocation2 + $0x90] sm:$0xff] %v3108
      %3145 = vst [vmem:[#allocation2 + $0x98] sm:$0xff] %v3109
      %3146 = vst [vmem:[#allocation2 + $0xa0] sm:$0xff] %v3110
      %3147 = vst [vmem:[#allocation2 + $0xa8] sm:$0xff] %v3111
      %3148 = vst [vmem:[#allocation2 + $0xb0] sm:$0xff] %v3112
      %3149 = vst [vmem:[#allocation2 + $0xb8] sm:$0xff] %v3113
      %3150 = vst [vmem:[#allocation2 + $0xc0] sm:$0xff] %v3114
      %3151 = vst [vmem:[#allocation2 + $0xc8] sm:$0xff] %v3115
      %3152 = vst [vmem:[#allocation2 + $0xd0] sm:$0xff] %v3116
      %3153 = vst [vmem:[#allocation2 + $0xd8] sm:$0xff] %v3117
      %3154 = vst [vmem:[#allocation2 + $0xe0] sm:$0xff] %v3118
      %3155 = vst [vmem:[#allocation2 + $0xe8] sm:$0xff] %v3119
      %3156 = vst [vmem:[#allocation2 + $0xf0] sm:$0xff] %v3120
      %3157 = vst [vmem:[#allocation2 + $0xf8] sm:$0xff] %v3121
      %3158 = vst [vmem:[#allocation2 + $0x100] sm:$0xff] %v3122
      %3159 = vst [vmem:[#allocation2 + $0x108] sm:$0xff] %v3123
      %3160 = vst [vmem:[#allocation2 + $0x110] sm:$0xff] %v3124
      %3161 = vst [vmem:[#allocation2 + $0x118] sm:$0xff] %v3125
      %v3162 = vld [vmem:[#allocation2] sm:$0xff]
      %v3163 = vld [vmem:[#allocation2 + $0x8] sm:$0xff]
      %v3164 = vld [vmem:[#allocation2 + $0x10] sm:$0xff]
      %v3165 = vld [vmem:[#allocation2 + $0x18] sm:$0xff]
      %v3166 = vld [vmem:[#allocation2 + $0x20] sm:$0xff]
      %v3167 = vld [vmem:[#allocation2 + $0x28] sm:$0xff]
      %v3168 = vld [vmem:[#allocation2 + $0x30] sm:$0xff]
      %v3169 = vld [vmem:[#allocation2 + $0x38] sm:$0xff]
      %v3170 = vld [vmem:[#allocation2 + $0x40] sm:$0xff]
      %v3171 = vld [vmem:[#allocation2 + $0x48] sm:$0xff]
      %v3172 = vld [vmem:[#allocation2 + $0x50] sm:$0xff]
      %v3173 = vld [vmem:[#allocation2 + $0x58] sm:$0xff]
      %v3174 = vld [vmem:[#allocation2 + $0x60] sm:$0xff]
      %v3175 = vld [vmem:[#allocation2 + $0x68] sm:$0xff]
      %v3176 = vld [vmem:[#allocation2 + $0x70] sm:$0xff]
      %v3177 = vld [vmem:[#allocation2 + $0x78] sm:$0xff]
      %v3178 = vld [vmem:[#allocation2 + $0x80] sm:$0xff]
      %v3179 = vld [vmem:[#allocation2 + $0x88] sm:$0xff]
      %v3180 = vld [vmem:[#allocation2 + $0x90] sm:$0xff]
      %v3181 = vld [vmem:[#allocation2 + $0x98] sm:$0xff]
      %v3182 = vld [vmem:[#allocation2 + $0xa0] sm:$0xff]
      %v3183 = vld [vmem:[#allocation2 + $0xa8] sm:$0xff]
      %v3184 = vld [vmem:[#allocation2 + $0xb0] sm:$0xff]
      %v3185 = vld [vmem:[#allocation2 + $0xb8] sm:$0xff]
      %v3186 = vld [vmem:[#allocation2 + $0xc0] sm:$0xff]
      %v3187 = vld [vmem:[#allocation2 + $0xc8] sm:$0xff]
      %v3188 = vld [vmem:[#allocation2 + $0xd0] sm:$0xff]
      %v3189 = vld [vmem:[#allocation2 + $0xd8] sm:$0xff]
      %v3190 = vld [vmem:[#allocation2 + $0xe0] sm:$0xff]
      %v3191 = vld [vmem:[#allocation2 + $0xe8] sm:$0xff]
      %v3192 = vld [vmem:[#allocation2 + $0xf0] sm:$0xff]
      %v3193 = vld [vmem:[#allocation2 + $0xf8] sm:$0xff]
      %v3194 = vld [vmem:[#allocation2 + $0x100] sm:$0xff]
      %v3195 = vld [vmem:[#allocation2 + $0x108] sm:$0xff]
      %v3196 = vld [vmem:[#allocation2 + $0x110] sm:$0xff]
      %v3197 = vld [vmem:[#allocation2 + $0x118] sm:$0xff]
      %s3198 = scalar_lea.vmem %s1, 448
      %v3199 = vld [vmem:[%s3198] sm:$0xf]
      %v3200 = vld [vmem:[%s3198 + $0x4] sm:$0xf]
      %v3201 = vld [vmem:[%s3198 + $0x8] sm:$0xf]
      %v3202 = vld [vmem:[%s3198 + $0xc] sm:$0xf]
      %v3203 = vld [vmem:[%s3198 + $0x10] sm:$0xf]
      %v3204 = vld [vmem:[%s3198 + $0x14] sm:$0xf]
      %v3205 = vld [vmem:[%s3198 + $0x18] sm:$0xf]
      %v3206 = vld [vmem:[%s3198 + $0x1c] sm:$0xf]
      %v3207 = vld [vmem:[%s3198 + $0x20] sm:$0xf]
      %v3208 = vld [vmem:[%s3198 + $0x24] sm:$0xf]
      %v3209 = vld [vmem:[%s3198 + $0x28] sm:$0xf]
      %v3210 = vld [vmem:[%s3198 + $0x2c] sm:$0xf]
      %v3211 = vld [vmem:[%s3198 + $0x30] sm:$0xf]
      %v3212 = vld [vmem:[%s3198 + $0x34] sm:$0xf]
      %v3213 = vld [vmem:[%s3198 + $0x38] sm:$0xf]
      %v3214 = vld [vmem:[%s3198 + $0x3c] sm:$0xf]
      %vm3215 = vsmask.f32 5376
      %v3216 = vrot.slane %v729, 2
      %v3217 = vrot.slane %v725, 3
      %v3218 = vor.u32 %v3216, %v3217
      %v3219 = vrot.slane %v737, 2
      %v3220 = vrot.slane %v733, 3
      %v3221 = vor.u32 %v3219, %v3220
      %v3222 = vsel %vm3215, %v3218, %v3221
      %v3223 = vrot.slane %v745, 2
      %v3224 = vrot.slane %v741, 3
      %v3225 = vor.u32 %v3223, %v3224
      %v3226 = vsel %vm3215, %v3221, %v3225
      %v3227 = vrot.slane %v753, 2
      %v3228 = vrot.slane %v749, 3
      %v3229 = vor.u32 %v3227, %v3228
      %v3230 = vsel %vm3215, %v3225, %v3229
      %v3231 = vrot.slane %v761, 2
      %v3232 = vrot.slane %v757, 3
      %v3233 = vor.u32 %v3231, %v3232
      %v3234 = vsel %vm3215, %v3229, %v3233
      %v3235 = vrot.slane %v769, 2
      %v3236 = vrot.slane %v765, 3
      %v3237 = vor.u32 %v3235, %v3236
      %v3238 = vsel %vm3215, %v3233, %v3237
      %v3239 = vrot.slane %v777, 2
      %v3240 = vrot.slane %v773, 3
      %v3241 = vor.u32 %v3239, %v3240
      %v3242 = vsel %vm3215, %v3237, %v3241
      %v3243 = vrot.slane %v785, 2
      %v3244 = vrot.slane %v781, 3
      %v3245 = vor.u32 %v3243, %v3244
      %v3246 = vsel %vm3215, %v3241, %v3245
      %v3247 = vrot.slane %v793, 2
      %v3248 = vrot.slane %v789, 3
      %v3249 = vor.u32 %v3247, %v3248
      %v3250 = vsel %vm3215, %v3245, %v3249
      %v3251 = vrot.slane %v801, 2
      %v3252 = vrot.slane %v797, 3
      %v3253 = vor.u32 %v3251, %v3252
      %v3254 = vsel %vm3215, %v3249, %v3253
      %v3255 = vrot.slane %v809, 2
      %v3256 = vrot.slane %v805, 3
      %v3257 = vor.u32 %v3255, %v3256
      %v3258 = vsel %vm3215, %v3253, %v3257
      %v3259 = vrot.slane %v817, 2
      %v3260 = vrot.slane %v813, 3
      %v3261 = vor.u32 %v3259, %v3260
      %v3262 = vsel %vm3215, %v3257, %v3261
      %v3263 = vrot.slane %v825, 2
      %v3264 = vrot.slane %v821, 3
      %v3265 = vor.u32 %v3263, %v3264
      %v3266 = vsel %vm3215, %v3261, %v3265
      %v3267 = vrot.slane %v833, 2
      %v3268 = vrot.slane %v829, 3
      %v3269 = vor.u32 %v3267, %v3268
      %v3270 = vsel %vm3215, %v3265, %v3269
      %v3271 = vrot.slane %v841, 2
      %v3272 = vrot.slane %v837, 3
      %v3273 = vor.u32 %v3271, %v3272
      %v3274 = vsel %vm3215, %v3269, %v3273
      %v3275 = vrot.slane %v849, 2
      %v3276 = vrot.slane %v845, 3
      %v3277 = vor.u32 %v3275, %v3276
      %v3278 = vsel %vm3215, %v3273, %v3277
      %v3279 = vrot.slane %v2062, 2
      %v3280 = vrot.slane %v2065, 3
      %v3281 = vor.u32 %v3279, %v3280
      %v3282 = vsel %vm3215, %v3277, %v3281
      %v3284 = vshrl.u32 %v2857, 16
      %v3286 = vrot.slane %v3284, 2
      %v3287 = vshll.u32 %v2857, 16
      %v3289 = vrot.slane %v3287, 3
      %v3290 = vor.u32 %v3286, %v3289
      %v3291 = vsel %vm3215, %v3281, %v3290
      %v3293 = vshrl.u32 %v2858, 16
      %v3295 = vrot.slane %v3293, 2
      %v3296 = vshll.u32 %v2858, 16
      %v3298 = vrot.slane %v3296, 3
      %v3299 = vor.u32 %v3295, %v3298
      %v3300 = vsel %vm3215, %v3290, %v3299
      %v3335 = vunpack.c.l.b16 %v3199
      %v3336 = vunpack.c.l.b16 %v3200
      %v3337 = vunpack.c.l.b16 %v3201
      %v3338 = vunpack.c.l.b16 %v3202
      %v3339 = vunpack.c.l.b16 %v3203
      %v3340 = vunpack.c.l.b16 %v3204
      %v3341 = vunpack.c.l.b16 %v3205
      %v3342 = vunpack.c.l.b16 %v3206
      %v3343 = vunpack.c.l.b16 %v3207
      %v3344 = vunpack.c.l.b16 %v3208
      %v3345 = vunpack.c.l.b16 %v3209
      %v3346 = vunpack.c.l.b16 %v3210
      %v3347 = vunpack.c.l.b16 %v3211
      %v3348 = vunpack.c.l.b16 %v3212
      %v3349 = vunpack.c.l.b16 %v3213
      %v3350 = vunpack.c.l.b16 %v3214
      %v3351 = vpack.c.b16 %v3336, %v3335
      %v3352 = vpack.c.b16 %v3338, %v3337
      %v3353 = vpack.c.b16 %v3340, %v3339
      %v3354 = vpack.c.b16 %v3342, %v3341
      %v3355 = vpack.c.b16 %v3344, %v3343
      %v3356 = vpack.c.b16 %v3346, %v3345
      %v3357 = vpack.c.b16 %v3348, %v3347
      %v3358 = vpack.c.b16 %v3350, %v3349
      %3367 = vmatprep.subr.bf16.mxu0 0
      %3368 = vmatpush1.bf16.msra.mxu0 %v3358
      %3369 = vmatprep.subr.bf16.mxu0 0
      %3370 = vmatpush1.bf16.msra.mxu0 %v3357
      %3371 = vmatprep.subr.bf16.mxu0 0
      %3372 = vmatpush1.bf16.msra.mxu0 %v3356
      %3373 = vmatprep.subr.bf16.mxu0 0
      %3374 = vmatpush1.bf16.msra.mxu0 %v3355
      %3375 = vmatprep.subr.bf16.mxu0 0
      %3376 = vmatpush1.bf16.msra.mxu0 %v3354
      %3377 = vmatprep.subr.bf16.mxu0 0
      %3378 = vmatpush1.bf16.msra.mxu0 %v3353
      %3379 = vmatprep.subr.bf16.mxu0 0
      %3380 = vmatpush1.bf16.msra.mxu0 %v3352
      %3381 = vmatprep.subr.bf16.mxu0 0
      %3382 = vmatpush1.bf16.msra.mxu0 %v3351
      %3383 = vmatprep.subr.bf16.mxu0 0
      %3384 = vmatpush2.bf16.msra.mxu0 0
      %3385 = vmatprep.subr.bf16.mxu0 0
      %3386 = vmatpush2.bf16.msra.mxu0 0
      %3387 = vmatprep.subr.bf16.mxu0 0
      %3388 = vmatpush2.bf16.msra.mxu0 0
      %3389 = vmatprep.subr.bf16.mxu0 0
      %3390 = vmatpush2.bf16.msra.mxu0 0
      %3391 = vmatprep.subr.bf16.mxu0 0
      %3392 = vmatpush2.bf16.msra.mxu0 0
      %3393 = vmatprep.subr.bf16.mxu0 0
      %3394 = vmatpush2.bf16.msra.mxu0 0
      %3395 = vmatprep.subr.bf16.mxu0 0
      %3396 = vmatpush2.bf16.msra.mxu0 0
      %3397 = vmatprep.subr.bf16.mxu0 0
      %3398 = vmatpush2.bf16.msra.mxu0 0
      %3399 = vmatprep.mubr.bf16.mxu0 0
      %3400 = vmatmul.mubr.bf16.gmra.mxu0 %v3222
      %v3401 = vpop.f32.mrf.mxu0
      %v3402 = vadd.f32 0.0, %v3401
      %v3403 = vpop.f32.mrf.mxu0
      %v3404 = vpop.f32.mrf.mxu0
      %v3405 = vadd.f32 0.0, %v3404
      %v3406 = vpop.f32.mrf.mxu0
      %3407 = vmatprep.mubr.bf16.mxu0 0
      %3408 = vmatmul.mubr.bf16.gmra.mxu0 %v3226
      %v3409 = vpop.f32.mrf.mxu0
      %v3410 = vadd.f32 0.0, %v3409
      %v3411 = vpop.f32.mrf.mxu0
      %v3412 = vpop.f32.mrf.mxu0
      %v3413 = vadd.f32 0.0, %v3412
      %v3414 = vpop.f32.mrf.mxu0
      %3415 = vmatprep.mubr.bf16.mxu0 0
      %3416 = vmatmul.mubr.bf16.gmra.mxu0 %v3230
      %v3417 = vpop.f32.mrf.mxu0
      %v3418 = vadd.f32 0.0, %v3417
      %v3419 = vpop.f32.mrf.mxu0
      %v3420 = vpop.f32.mrf.mxu0
      %v3421 = vadd.f32 0.0, %v3420
      %v3422 = vpop.f32.mrf.mxu0
      %3423 = vmatprep.mubr.bf16.mxu0 0
      %3424 = vmatmul.mubr.bf16.gmra.mxu0 %v3234
      %v3425 = vpop.f32.mrf.mxu0
      %v3426 = vadd.f32 0.0, %v3425
      %v3427 = vpop.f32.mrf.mxu0
      %v3428 = vpop.f32.mrf.mxu0
      %v3429 = vadd.f32 0.0, %v3428
      %v3430 = vpop.f32.mrf.mxu0
      %3431 = vmatprep.mubr.bf16.mxu0 0
      %3432 = vmatmul.mubr.bf16.gmra.mxu0 %v3238
      %v3433 = vpop.f32.mrf.mxu0
      %v3434 = vadd.f32 0.0, %v3433
      %v3435 = vpop.f32.mrf.mxu0
      %v3436 = vpop.f32.mrf.mxu0
      %v3437 = vadd.f32 0.0, %v3436
      %v3438 = vpop.f32.mrf.mxu0
      %3439 = vmatprep.mubr.bf16.mxu0 0
      %3440 = vmatmul.mubr.bf16.gmra.mxu0 %v3242
      %v3441 = vpop.f32.mrf.mxu0
      %v3442 = vadd.f32 0.0, %v3441
      %v3443 = vpop.f32.mrf.mxu0
      %v3444 = vpop.f32.mrf.mxu0
      %v3445 = vadd.f32 0.0, %v3444
      %v3446 = vpop.f32.mrf.mxu0
      %3447 = vmatprep.mubr.bf16.mxu0 0
      %3448 = vmatmul.mubr.bf16.gmra.mxu0 %v3246
      %v3449 = vpop.f32.mrf.mxu0
      %v3450 = vadd.f32 0.0, %v3449
      %v3451 = vpop.f32.mrf.mxu0
      %v3452 = vpop.f32.mrf.mxu0
      %v3453 = vadd.f32 0.0, %v3452
      %v3454 = vpop.f32.mrf.mxu0
      %3455 = vmatprep.mubr.bf16.mxu0 0
      %3456 = vmatmul.mubr.bf16.gmra.mxu0 %v3250
      %v3457 = vpop.f32.mrf.mxu0
      %v3458 = vadd.f32 0.0, %v3457
      %v3459 = vpop.f32.mrf.mxu0
      %v3460 = vpop.f32.mrf.mxu0
      %v3461 = vadd.f32 0.0, %v3460
      %v3462 = vpop.f32.mrf.mxu0
      %3463 = vmatprep.mubr.bf16.mxu0 0
      %3464 = vmatmul.mubr.bf16.gmra.mxu0 %v3254
      %v3465 = vpop.f32.mrf.mxu0
      %v3466 = vadd.f32 0.0, %v3465
      %v3467 = vpop.f32.mrf.mxu0
      %v3468 = vpop.f32.mrf.mxu0
      %v3469 = vadd.f32 0.0, %v3468
      %v3470 = vpop.f32.mrf.mxu0
      %3471 = vmatprep.mubr.bf16.mxu0 0
      %3472 = vmatmul.mubr.bf16.gmra.mxu0 %v3258
      %v3473 = vpop.f32.mrf.mxu0
      %v3474 = vadd.f32 0.0, %v3473
      %v3475 = vpop.f32.mrf.mxu0
      %v3476 = vpop.f32.mrf.mxu0
      %v3477 = vadd.f32 0.0, %v3476
      %v3478 = vpop.f32.mrf.mxu0
      %3479 = vmatprep.mubr.bf16.mxu0 0
      %3480 = vmatmul.mubr.bf16.gmra.mxu0 %v3262
      %v3481 = vpop.f32.mrf.mxu0
      %v3482 = vadd.f32 0.0, %v3481
      %v3483 = vpop.f32.mrf.mxu0
      %v3484 = vpop.f32.mrf.mxu0
      %v3485 = vadd.f32 0.0, %v3484
      %v3486 = vpop.f32.mrf.mxu0
      %3487 = vmatprep.mubr.bf16.mxu0 0
      %3488 = vmatmul.mubr.bf16.gmra.mxu0 %v3266
      %v3489 = vpop.f32.mrf.mxu0
      %v3490 = vadd.f32 0.0, %v3489
      %v3491 = vpop.f32.mrf.mxu0
      %v3492 = vpop.f32.mrf.mxu0
      %v3493 = vadd.f32 0.0, %v3492
      %v3494 = vpop.f32.mrf.mxu0
      %3495 = vmatprep.mubr.bf16.mxu0 0
      %3496 = vmatmul.mubr.bf16.gmra.mxu0 %v3270
      %v3497 = vpop.f32.mrf.mxu0
      %v3498 = vadd.f32 0.0, %v3497
      %v3499 = vpop.f32.mrf.mxu0
      %v3500 = vpop.f32.mrf.mxu0
      %v3501 = vadd.f32 0.0, %v3500
      %v3502 = vpop.f32.mrf.mxu0
      %3503 = vmatprep.mubr.bf16.mxu0 0
      %3504 = vmatmul.mubr.bf16.gmra.mxu0 %v3274
      %v3505 = vpop.f32.mrf.mxu0
      %v3506 = vadd.f32 0.0, %v3505
      %v3507 = vpop.f32.mrf.mxu0
      %v3508 = vpop.f32.mrf.mxu0
      %v3509 = vadd.f32 0.0, %v3508
      %v3510 = vpop.f32.mrf.mxu0
      %3511 = vmatprep.mubr.bf16.mxu0 0
      %3512 = vmatmul.mubr.bf16.gmra.mxu0 %v3278
      %v3513 = vpop.f32.mrf.mxu0
      %v3514 = vadd.f32 0.0, %v3513
      %v3515 = vpop.f32.mrf.mxu0
      %v3516 = vpop.f32.mrf.mxu0
      %v3517 = vadd.f32 0.0, %v3516
      %v3518 = vpop.f32.mrf.mxu0
      %3519 = vmatprep.mubr.bf16.mxu0 0
      %3520 = vmatmul.mubr.bf16.gmra.mxu0 %v3282
      %v3521 = vpop.f32.mrf.mxu0
      %v3522 = vadd.f32 0.0, %v3521
      %v3523 = vpop.f32.mrf.mxu0
      %v3524 = vpop.f32.mrf.mxu0
      %v3525 = vadd.f32 0.0, %v3524
      %v3526 = vpop.f32.mrf.mxu0
      %3527 = vmatprep.mubr.bf16.mxu0 0
      %3528 = vmatmul.mubr.bf16.gmra.mxu0 %v3291
      %v3529 = vpop.f32.mrf.mxu0
      %v3530 = vadd.f32 0.0, %v3529
      %v3531 = vpop.f32.mrf.mxu0
      %v3532 = vpop.f32.mrf.mxu0
      %v3533 = vadd.f32 0.0, %v3532
      %v3534 = vpop.f32.mrf.mxu0
      %3535 = vmatprep.mubr.bf16.mxu0 0
      %3536 = vmatmul.mubr.bf16.gmra.mxu0 %v3300
      %v3537 = vpop.f32.mrf.mxu0
      %v3538 = vadd.f32 0.0, %v3537
      %v3539 = vpop.f32.mrf.mxu0
      %v3540 = vpop.f32.mrf.mxu0
      %v3541 = vadd.f32 0.0, %v3540
      %v3542 = vpop.f32.mrf.mxu0
      %3543 = vdwg.mxu0
      %v3544 = vadd.f32 %v3162, %v3402
      %v3545 = vadd.f32 %v3163, %v3405
      %v3546 = vadd.f32 %v3164, %v3410
      %v3547 = vadd.f32 %v3165, %v3413
      %v3548 = vadd.f32 %v3166, %v3418
      %v3549 = vadd.f32 %v3167, %v3421
      %v3550 = vadd.f32 %v3168, %v3426
      %v3551 = vadd.f32 %v3169, %v3429
      %v3552 = vadd.f32 %v3170, %v3434
      %v3553 = vadd.f32 %v3171, %v3437
      %v3554 = vadd.f32 %v3172, %v3442
      %v3555 = vadd.f32 %v3173, %v3445
      %v3556 = vadd.f32 %v3174, %v3450
      %v3557 = vadd.f32 %v3175, %v3453
      %v3558 = vadd.f32 %v3176, %v3458
      %v3559 = vadd.f32 %v3177, %v3461
      %v3560 = vadd.f32 %v3178, %v3466
      %v3561 = vadd.f32 %v3179, %v3469
      %v3562 = vadd.f32 %v3180, %v3474
      %v3563 = vadd.f32 %v3181, %v3477
      %v3564 = vadd.f32 %v3182, %v3482
      %v3565 = vadd.f32 %v3183, %v3485
      %v3566 = vadd.f32 %v3184, %v3490
      %v3567 = vadd.f32 %v3185, %v3493
      %v3568 = vadd.f32 %v3186, %v3498
      %v3569 = vadd.f32 %v3187, %v3501
      %v3570 = vadd.f32 %v3188, %v3506
      %v3571 = vadd.f32 %v3189, %v3509
      %v3572 = vadd.f32 %v3190, %v3514
      %v3573 = vadd.f32 %v3191, %v3517
      %v3574 = vadd.f32 %v3192, %v3522
      %v3575 = vadd.f32 %v3193, %v3525
      %v3576 = vadd.f32 %v3194, %v3530
      %v3577 = vadd.f32 %v3195, %v3533
      %v3578 = vadd.f32 %v3196, %v3538
      %v3579 = vadd.f32 %v3197, %v3541
      %3580 = vst [vmem:[#allocation2] sm:$0xff] %v3544
      %3581 = vst [vmem:[#allocation2 + $0x8] sm:$0xff] %v3545
      %3582 = vst [vmem:[#allocation2 + $0x10] sm:$0xff] %v3546
      %3583 = vst [vmem:[#allocation2 + $0x18] sm:$0xff] %v3547
      %3584 = vst [vmem:[#allocation2 + $0x20] sm:$0xff] %v3548
      %3585 = vst [vmem:[#allocation2 + $0x28] sm:$0xff] %v3549
      %3586 = vst [vmem:[#allocation2 + $0x30] sm:$0xff] %v3550
      %3587 = vst [vmem:[#allocation2 + $0x38] sm:$0xff] %v3551
      %3588 = vst [vmem:[#allocation2 + $0x40] sm:$0xff] %v3552
      %3589 = vst [vmem:[#allocation2 + $0x48] sm:$0xff] %v3553
      %3590 = vst [vmem:[#allocation2 + $0x50] sm:$0xff] %v3554
      %3591 = vst [vmem:[#allocation2 + $0x58] sm:$0xff] %v3555
      %3592 = vst [vmem:[#allocation2 + $0x60] sm:$0xff] %v3556
      %3593 = vst [vmem:[#allocation2 + $0x68] sm:$0xff] %v3557
      %3594 = vst [vmem:[#allocation2 + $0x70] sm:$0xff] %v3558
      %3595 = vst [vmem:[#allocation2 + $0x78] sm:$0xff] %v3559
      %3596 = vst [vmem:[#allocation2 + $0x80] sm:$0xff] %v3560
      %3597 = vst [vmem:[#allocation2 + $0x88] sm:$0xff] %v3561
      %3598 = vst [vmem:[#allocation2 + $0x90] sm:$0xff] %v3562
      %3599 = vst [vmem:[#allocation2 + $0x98] sm:$0xff] %v3563
      %3600 = vst [vmem:[#allocation2 + $0xa0] sm:$0xff] %v3564
      %3601 = vst [vmem:[#allocation2 + $0xa8] sm:$0xff] %v3565
      %3602 = vst [vmem:[#allocation2 + $0xb0] sm:$0xff] %v3566
      %3603 = vst [vmem:[#allocation2 + $0xb8] sm:$0xff] %v3567
      %3604 = vst [vmem:[#allocation2 + $0xc0] sm:$0xff] %v3568
      %3605 = vst [vmem:[#allocation2 + $0xc8] sm:$0xff] %v3569
      %3606 = vst [vmem:[#allocation2 + $0xd0] sm:$0xff] %v3570
      %3607 = vst [vmem:[#allocation2 + $0xd8] sm:$0xff] %v3571
      %3608 = vst [vmem:[#allocation2 + $0xe0] sm:$0xff] %v3572
      %3609 = vst [vmem:[#allocation2 + $0xe8] sm:$0xff] %v3573
      %3610 = vst [vmem:[#allocation2 + $0xf0] sm:$0xff] %v3574
      %3611 = vst [vmem:[#allocation2 + $0xf8] sm:$0xff] %v3575
      %3612 = vst [vmem:[#allocation2 + $0x100] sm:$0xff] %v3576
      %3613 = vst [vmem:[#allocation2 + $0x108] sm:$0xff] %v3577
      %3614 = vst [vmem:[#allocation2 + $0x110] sm:$0xff] %v3578
      %3615 = vst [vmem:[#allocation2 + $0x118] sm:$0xff] %v3579
      %v3616 = vld [vmem:[#allocation2] sm:$0xff]
      %v3617 = vld [vmem:[#allocation2 + $0x8] sm:$0xff]
      %v3618 = vld [vmem:[#allocation2 + $0x10] sm:$0xff]
      %v3619 = vld [vmem:[#allocation2 + $0x18] sm:$0xff]
      %v3620 = vld [vmem:[#allocation2 + $0x20] sm:$0xff]
      %v3621 = vld [vmem:[#allocation2 + $0x28] sm:$0xff]
      %v3622 = vld [vmem:[#allocation2 + $0x30] sm:$0xff]
      %v3623 = vld [vmem:[#allocation2 + $0x38] sm:$0xff]
      %v3624 = vld [vmem:[#allocation2 + $0x40] sm:$0xff]
      %v3625 = vld [vmem:[#allocation2 + $0x48] sm:$0xff]
      %v3626 = vld [vmem:[#allocation2 + $0x50] sm:$0xff]
      %v3627 = vld [vmem:[#allocation2 + $0x58] sm:$0xff]
      %v3628 = vld [vmem:[#allocation2 + $0x60] sm:$0xff]
      %v3629 = vld [vmem:[#allocation2 + $0x68] sm:$0xff]
      %v3630 = vld [vmem:[#allocation2 + $0x70] sm:$0xff]
      %v3631 = vld [vmem:[#allocation2 + $0x78] sm:$0xff]
      %v3632 = vld [vmem:[#allocation2 + $0x80] sm:$0xff]
      %v3633 = vld [vmem:[#allocation2 + $0x88] sm:$0xff]
      %v3634 = vld [vmem:[#allocation2 + $0x90] sm:$0xff]
      %v3635 = vld [vmem:[#allocation2 + $0x98] sm:$0xff]
      %v3636 = vld [vmem:[#allocation2 + $0xa0] sm:$0xff]
      %v3637 = vld [vmem:[#allocation2 + $0xa8] sm:$0xff]
      %v3638 = vld [vmem:[#allocation2 + $0xb0] sm:$0xff]
      %v3639 = vld [vmem:[#allocation2 + $0xb8] sm:$0xff]
      %v3640 = vld [vmem:[#allocation2 + $0xc0] sm:$0xff]
      %v3641 = vld [vmem:[#allocation2 + $0xc8] sm:$0xff]
      %v3642 = vld [vmem:[#allocation2 + $0xd0] sm:$0xff]
      %v3643 = vld [vmem:[#allocation2 + $0xd8] sm:$0xff]
      %v3644 = vld [vmem:[#allocation2 + $0xe0] sm:$0xff]
      %v3645 = vld [vmem:[#allocation2 + $0xe8] sm:$0xff]
      %v3646 = vld [vmem:[#allocation2 + $0xf0] sm:$0xff]
      %v3647 = vld [vmem:[#allocation2 + $0xf8] sm:$0xff]
      %v3648 = vld [vmem:[#allocation2 + $0x100] sm:$0xff]
      %v3649 = vld [vmem:[#allocation2 + $0x108] sm:$0xff]
      %v3650 = vld [vmem:[#allocation2 + $0x110] sm:$0xff]
      %v3651 = vld [vmem:[#allocation2 + $0x118] sm:$0xff]
      %s3652 = scalar_lea.vmem %s1, 512
      %v3653 = vld [vmem:[%s3652] sm:$0xf]
      %v3654 = vld [vmem:[%s3652 + $0x4] sm:$0xf]
      %v3655 = vld [vmem:[%s3652 + $0x8] sm:$0xf]
      %v3656 = vld [vmem:[%s3652 + $0xc] sm:$0xf]
      %v3657 = vld [vmem:[%s3652 + $0x10] sm:$0xf]
      %v3658 = vld [vmem:[%s3652 + $0x14] sm:$0xf]
      %v3659 = vld [vmem:[%s3652 + $0x18] sm:$0xf]
      %v3660 = vld [vmem:[%s3652 + $0x1c] sm:$0xf]
      %v3661 = vld [vmem:[%s3652 + $0x20] sm:$0xf]
      %v3662 = vld [vmem:[%s3652 + $0x24] sm:$0xf]
      %v3663 = vld [vmem:[%s3652 + $0x28] sm:$0xf]
      %v3664 = vld [vmem:[%s3652 + $0x2c] sm:$0xf]
      %v3665 = vld [vmem:[%s3652 + $0x30] sm:$0xf]
      %v3666 = vld [vmem:[%s3652 + $0x34] sm:$0xf]
      %v3667 = vld [vmem:[%s3652 + $0x38] sm:$0xf]
      %v3668 = vld [vmem:[%s3652 + $0x3c] sm:$0xf]
      %vm3669 = vcmask 1044480
      %v3670 = vrot.slane %v357, 3
      %v3671 = vrot.slane %v358, 3
      %v3672 = vsel %vm3669, %v3670, %v3671
      %v3673 = vrot.slane %v359, 3
      %v3674 = vsel %vm3669, %v3671, %v3673
      %v3675 = vrot.slane %v360, 3
      %v3676 = vsel %vm3669, %v3673, %v3675
      %v3677 = vrot.slane %v361, 3
      %v3678 = vsel %vm3669, %v3675, %v3677
      %v3679 = vrot.slane %v362, 3
      %v3680 = vsel %vm3669, %v3677, %v3679
      %v3681 = vrot.slane %v363, 3
      %v3682 = vsel %vm3669, %v3679, %v3681
      %v3683 = vrot.slane %v364, 3
      %v3684 = vsel %vm3669, %v3681, %v3683
      %v3685 = vrot.slane %v365, 3
      %v3686 = vsel %vm3669, %v3683, %v3685
      %v3687 = vrot.slane %v366, 3
      %v3688 = vsel %vm3669, %v3685, %v3687
      %v3689 = vrot.slane %v367, 3
      %v3690 = vsel %vm3669, %v3687, %v3689
      %v3691 = vrot.slane %v368, 3
      %v3692 = vsel %vm3669, %v3689, %v3691
      %v3693 = vrot.slane %v369, 3
      %v3694 = vsel %vm3669, %v3691, %v3693
      %v3695 = vrot.slane %v370, 3
      %v3696 = vsel %vm3669, %v3693, %v3695
      %v3697 = vrot.slane %v371, 3
      %v3698 = vsel %vm3669, %v3695, %v3697
      %v3699 = vrot.slane %v372, 3
      %v3700 = vsel %vm3669, %v3697, %v3699
      %v3701 = vrot.slane %v1635, 3
      %v3702 = vsel %vm3669, %v3699, %v3701
      %v3703 = vrot.slane %v2857, 3
      %v3704 = vsel %vm3669, %v3701, %v3703
      %v3705 = vrot.slane %v2858, 3
      %v3706 = vsel %vm3669, %v3703, %v3705
      %v3741 = vunpack.c.l.b16 %v3653
      %v3742 = vunpack.c.l.b16 %v3654
      %v3743 = vunpack.c.l.b16 %v3655
      %v3744 = vunpack.c.l.b16 %v3656
      %v3745 = vunpack.c.l.b16 %v3657
      %v3746 = vunpack.c.l.b16 %v3658
      %v3747 = vunpack.c.l.b16 %v3659
      %v3748 = vunpack.c.l.b16 %v3660
      %v3749 = vunpack.c.l.b16 %v3661
      %v3750 = vunpack.c.l.b16 %v3662
      %v3751 = vunpack.c.l.b16 %v3663
      %v3752 = vunpack.c.l.b16 %v3664
      %v3753 = vunpack.c.l.b16 %v3665
      %v3754 = vunpack.c.l.b16 %v3666
      %v3755 = vunpack.c.l.b16 %v3667
      %v3756 = vunpack.c.l.b16 %v3668
      %v3757 = vpack.c.b16 %v3742, %v3741
      %v3758 = vpack.c.b16 %v3744, %v3743
      %v3759 = vpack.c.b16 %v3746, %v3745
      %v3760 = vpack.c.b16 %v3748, %v3747
      %v3761 = vpack.c.b16 %v3750, %v3749
      %v3762 = vpack.c.b16 %v3752, %v3751
      %v3763 = vpack.c.b16 %v3754, %v3753
      %v3764 = vpack.c.b16 %v3756, %v3755
      %3773 = vmatprep.subr.bf16.mxu0 0
      %3774 = vmatpush1.bf16.msra.mxu0 %v3764
      %3775 = vmatprep.subr.bf16.mxu0 0
      %3776 = vmatpush1.bf16.msra.mxu0 %v3763
      %3777 = vmatprep.subr.bf16.mxu0 0
      %3778 = vmatpush1.bf16.msra.mxu0 %v3762
      %3779 = vmatprep.subr.bf16.mxu0 0
      %3780 = vmatpush1.bf16.msra.mxu0 %v3761
      %3781 = vmatprep.subr.bf16.mxu0 0
      %3782 = vmatpush1.bf16.msra.mxu0 %v3760
      %3783 = vmatprep.subr.bf16.mxu0 0
      %3784 = vmatpush1.bf16.msra.mxu0 %v3759
      %3785 = vmatprep.subr.bf16.mxu0 0
      %3786 = vmatpush1.bf16.msra.mxu0 %v3758
      %3787 = vmatprep.subr.bf16.mxu0 0
      %3788 = vmatpush1.bf16.msra.mxu0 %v3757
      %3789 = vmatprep.subr.bf16.mxu0 0
      %3790 = vmatpush2.bf16.msra.mxu0 0
      %3791 = vmatprep.subr.bf16.mxu0 0
      %3792 = vmatpush2.bf16.msra.mxu0 0
      %3793 = vmatprep.subr.bf16.mxu0 0
      %3794 = vmatpush2.bf16.msra.mxu0 0
      %3795 = vmatprep.subr.bf16.mxu0 0
      %3796 = vmatpush2.bf16.msra.mxu0 0
      %3797 = vmatprep.subr.bf16.mxu0 0
      %3798 = vmatpush2.bf16.msra.mxu0 0
      %3799 = vmatprep.subr.bf16.mxu0 0
      %3800 = vmatpush2.bf16.msra.mxu0 0
      %3801 = vmatprep.subr.bf16.mxu0 0
      %3802 = vmatpush2.bf16.msra.mxu0 0
      %3803 = vmatprep.subr.bf16.mxu0 0
      %3804 = vmatpush2.bf16.msra.mxu0 0
      %3805 = vmatprep.mubr.bf16.mxu0 0
      %3806 = vmatmul.mubr.bf16.gmra.mxu0 %v3672
      %v3807 = vpop.f32.mrf.mxu0
      %v3808 = vadd.f32 0.0, %v3807
      %v3809 = vpop.f32.mrf.mxu0
      %v3810 = vpop.f32.mrf.mxu0
      %v3811 = vadd.f32 0.0, %v3810
      %v3812 = vpop.f32.mrf.mxu0
      %3813 = vmatprep.mubr.bf16.mxu0 0
      %3814 = vmatmul.mubr.bf16.gmra.mxu0 %v3674
      %v3815 = vpop.f32.mrf.mxu0
      %v3816 = vadd.f32 0.0, %v3815
      %v3817 = vpop.f32.mrf.mxu0
      %v3818 = vpop.f32.mrf.mxu0
      %v3819 = vadd.f32 0.0, %v3818
      %v3820 = vpop.f32.mrf.mxu0
      %3821 = vmatprep.mubr.bf16.mxu0 0
      %3822 = vmatmul.mubr.bf16.gmra.mxu0 %v3676
      %v3823 = vpop.f32.mrf.mxu0
      %v3824 = vadd.f32 0.0, %v3823
      %v3825 = vpop.f32.mrf.mxu0
      %v3826 = vpop.f32.mrf.mxu0
      %v3827 = vadd.f32 0.0, %v3826
      %v3828 = vpop.f32.mrf.mxu0
      %3829 = vmatprep.mubr.bf16.mxu0 0
      %3830 = vmatmul.mubr.bf16.gmra.mxu0 %v3678
      %v3831 = vpop.f32.mrf.mxu0
      %v3832 = vadd.f32 0.0, %v3831
      %v3833 = vpop.f32.mrf.mxu0
      %v3834 = vpop.f32.mrf.mxu0
      %v3835 = vadd.f32 0.0, %v3834
      %v3836 = vpop.f32.mrf.mxu0
      %3837 = vmatprep.mubr.bf16.mxu0 0
      %3838 = vmatmul.mubr.bf16.gmra.mxu0 %v3680
      %v3839 = vpop.f32.mrf.mxu0
      %v3840 = vadd.f32 0.0, %v3839
      %v3841 = vpop.f32.mrf.mxu0
      %v3842 = vpop.f32.mrf.mxu0
      %v3843 = vadd.f32 0.0, %v3842
      %v3844 = vpop.f32.mrf.mxu0
      %3845 = vmatprep.mubr.bf16.mxu0 0
      %3846 = vmatmul.mubr.bf16.gmra.mxu0 %v3682
      %v3847 = vpop.f32.mrf.mxu0
      %v3848 = vadd.f32 0.0, %v3847
      %v3849 = vpop.f32.mrf.mxu0
      %v3850 = vpop.f32.mrf.mxu0
      %v3851 = vadd.f32 0.0, %v3850
      %v3852 = vpop.f32.mrf.mxu0
      %3853 = vmatprep.mubr.bf16.mxu0 0
      %3854 = vmatmul.mubr.bf16.gmra.mxu0 %v3684
      %v3855 = vpop.f32.mrf.mxu0
      %v3856 = vadd.f32 0.0, %v3855
      %v3857 = vpop.f32.mrf.mxu0
      %v3858 = vpop.f32.mrf.mxu0
      %v3859 = vadd.f32 0.0, %v3858
      %v3860 = vpop.f32.mrf.mxu0
      %3861 = vmatprep.mubr.bf16.mxu0 0
      %3862 = vmatmul.mubr.bf16.gmra.mxu0 %v3686
      %v3863 = vpop.f32.mrf.mxu0
      %v3864 = vadd.f32 0.0, %v3863
      %v3865 = vpop.f32.mrf.mxu0
      %v3866 = vpop.f32.mrf.mxu0
      %v3867 = vadd.f32 0.0, %v3866
      %v3868 = vpop.f32.mrf.mxu0
      %3869 = vmatprep.mubr.bf16.mxu0 0
      %3870 = vmatmul.mubr.bf16.gmra.mxu0 %v3688
      %v3871 = vpop.f32.mrf.mxu0
      %v3872 = vadd.f32 0.0, %v3871
      %v3873 = vpop.f32.mrf.mxu0
      %v3874 = vpop.f32.mrf.mxu0
      %v3875 = vadd.f32 0.0, %v3874
      %v3876 = vpop.f32.mrf.mxu0
      %3877 = vmatprep.mubr.bf16.mxu0 0
      %3878 = vmatmul.mubr.bf16.gmra.mxu0 %v3690
      %v3879 = vpop.f32.mrf.mxu0
      %v3880 = vadd.f32 0.0, %v3879
      %v3881 = vpop.f32.mrf.mxu0
      %v3882 = vpop.f32.mrf.mxu0
      %v3883 = vadd.f32 0.0, %v3882
      %v3884 = vpop.f32.mrf.mxu0
      %3885 = vmatprep.mubr.bf16.mxu0 0
      %3886 = vmatmul.mubr.bf16.gmra.mxu0 %v3692
      %v3887 = vpop.f32.mrf.mxu0
      %v3888 = vadd.f32 0.0, %v3887
      %v3889 = vpop.f32.mrf.mxu0
      %v3890 = vpop.f32.mrf.mxu0
      %v3891 = vadd.f32 0.0, %v3890
      %v3892 = vpop.f32.mrf.mxu0
      %3893 = vmatprep.mubr.bf16.mxu0 0
      %3894 = vmatmul.mubr.bf16.gmra.mxu0 %v3694
      %v3895 = vpop.f32.mrf.mxu0
      %v3896 = vadd.f32 0.0, %v3895
      %v3897 = vpop.f32.mrf.mxu0
      %v3898 = vpop.f32.mrf.mxu0
      %v3899 = vadd.f32 0.0, %v3898
      %v3900 = vpop.f32.mrf.mxu0
      %3901 = vmatprep.mubr.bf16.mxu0 0
      %3902 = vmatmul.mubr.bf16.gmra.mxu0 %v3696
      %v3903 = vpop.f32.mrf.mxu0
      %v3904 = vadd.f32 0.0, %v3903
      %v3905 = vpop.f32.mrf.mxu0
      %v3906 = vpop.f32.mrf.mxu0
      %v3907 = vadd.f32 0.0, %v3906
      %v3908 = vpop.f32.mrf.mxu0
      %3909 = vmatprep.mubr.bf16.mxu0 0
      %3910 = vmatmul.mubr.bf16.gmra.mxu0 %v3698
      %v3911 = vpop.f32.mrf.mxu0
      %v3912 = vadd.f32 0.0, %v3911
      %v3913 = vpop.f32.mrf.mxu0
      %v3914 = vpop.f32.mrf.mxu0
      %v3915 = vadd.f32 0.0, %v3914
      %v3916 = vpop.f32.mrf.mxu0
      %3917 = vmatprep.mubr.bf16.mxu0 0
      %3918 = vmatmul.mubr.bf16.gmra.mxu0 %v3700
      %v3919 = vpop.f32.mrf.mxu0
      %v3920 = vadd.f32 0.0, %v3919
      %v3921 = vpop.f32.mrf.mxu0
      %v3922 = vpop.f32.mrf.mxu0
      %v3923 = vadd.f32 0.0, %v3922
      %v3924 = vpop.f32.mrf.mxu0
      %3925 = vmatprep.mubr.bf16.mxu0 0
      %3926 = vmatmul.mubr.bf16.gmra.mxu0 %v3702
      %v3927 = vpop.f32.mrf.mxu0
      %v3928 = vadd.f32 0.0, %v3927
      %v3929 = vpop.f32.mrf.mxu0
      %v3930 = vpop.f32.mrf.mxu0
      %v3931 = vadd.f32 0.0, %v3930
      %v3932 = vpop.f32.mrf.mxu0
      %3933 = vmatprep.mubr.bf16.mxu0 0
      %3934 = vmatmul.mubr.bf16.gmra.mxu0 %v3704
      %v3935 = vpop.f32.mrf.mxu0
      %v3936 = vadd.f32 0.0, %v3935
      %v3937 = vpop.f32.mrf.mxu0
      %v3938 = vpop.f32.mrf.mxu0
      %v3939 = vadd.f32 0.0, %v3938
      %v3940 = vpop.f32.mrf.mxu0
      %3941 = vmatprep.mubr.bf16.mxu0 0
      %3942 = vmatmul.mubr.bf16.gmra.mxu0 %v3706
      %v3943 = vpop.f32.mrf.mxu0
      %v3944 = vadd.f32 0.0, %v3943
      %v3945 = vpop.f32.mrf.mxu0
      %v3946 = vpop.f32.mrf.mxu0
      %v3947 = vadd.f32 0.0, %v3946
      %v3948 = vpop.f32.mrf.mxu0
      %3949 = vdwg.mxu0
      %v3950 = vadd.f32 %v3616, %v3808
      %v3951 = vadd.f32 %v3617, %v3811
      %v3952 = vadd.f32 %v3618, %v3816
      %v3953 = vadd.f32 %v3619, %v3819
      %v3954 = vadd.f32 %v3620, %v3824
      %v3955 = vadd.f32 %v3621, %v3827
      %v3956 = vadd.f32 %v3622, %v3832
      %v3957 = vadd.f32 %v3623, %v3835
      %v3958 = vadd.f32 %v3624, %v3840
      %v3959 = vadd.f32 %v3625, %v3843
      %v3960 = vadd.f32 %v3626, %v3848
      %v3961 = vadd.f32 %v3627, %v3851
      %v3962 = vadd.f32 %v3628, %v3856
      %v3963 = vadd.f32 %v3629, %v3859
      %v3964 = vadd.f32 %v3630, %v3864
      %v3965 = vadd.f32 %v3631, %v3867
      %v3966 = vadd.f32 %v3632, %v3872
      %v3967 = vadd.f32 %v3633, %v3875
      %v3968 = vadd.f32 %v3634, %v3880
      %v3969 = vadd.f32 %v3635, %v3883
      %v3970 = vadd.f32 %v3636, %v3888
      %v3971 = vadd.f32 %v3637, %v3891
      %v3972 = vadd.f32 %v3638, %v3896
      %v3973 = vadd.f32 %v3639, %v3899
      %v3974 = vadd.f32 %v3640, %v3904
      %v3975 = vadd.f32 %v3641, %v3907
      %v3976 = vadd.f32 %v3642, %v3912
      %v3977 = vadd.f32 %v3643, %v3915
      %v3978 = vadd.f32 %v3644, %v3920
      %v3979 = vadd.f32 %v3645, %v3923
      %v3980 = vadd.f32 %v3646, %v3928
      %v3981 = vadd.f32 %v3647, %v3931
      %v3982 = vadd.f32 %v3648, %v3936
      %v3983 = vadd.f32 %v3649, %v3939
      %v3984 = vadd.f32 %v3650, %v3944
      %v3985 = vadd.f32 %v3651, %v3947
      %3986 = vst [vmem:[#allocation2] sm:$0xff] %v3950
      %3987 = vst [vmem:[#allocation2 + $0x8] sm:$0xff] %v3951
      %3988 = vst [vmem:[#allocation2 + $0x10] sm:$0xff] %v3952
      %3989 = vst [vmem:[#allocation2 + $0x18] sm:$0xff] %v3953
      %3990 = vst [vmem:[#allocation2 + $0x20] sm:$0xff] %v3954
      %3991 = vst [vmem:[#allocation2 + $0x28] sm:$0xff] %v3955
      %3992 = vst [vmem:[#allocation2 + $0x30] sm:$0xff] %v3956
      %3993 = vst [vmem:[#allocation2 + $0x38] sm:$0xff] %v3957
      %3994 = vst [vmem:[#allocation2 + $0x40] sm:$0xff] %v3958
      %3995 = vst [vmem:[#allocation2 + $0x48] sm:$0xff] %v3959
      %3996 = vst [vmem:[#allocation2 + $0x50] sm:$0xff] %v3960
      %3997 = vst [vmem:[#allocation2 + $0x58] sm:$0xff] %v3961
      %3998 = vst [vmem:[#allocation2 + $0x60] sm:$0xff] %v3962
      %3999 = vst [vmem:[#allocation2 + $0x68] sm:$0xff] %v3963
      %4000 = vst [vmem:[#allocation2 + $0x70] sm:$0xff] %v3964
      %4001 = vst [vmem:[#allocation2 + $0x78] sm:$0xff] %v3965
      %4002 = vst [vmem:[#allocation2 + $0x80] sm:$0xff] %v3966
      %4003 = vst [vmem:[#allocation2 + $0x88] sm:$0xff] %v3967
      %4004 = vst [vmem:[#allocation2 + $0x90] sm:$0xff] %v3968
      %4005 = vst [vmem:[#allocation2 + $0x98] sm:$0xff] %v3969
      %4006 = vst [vmem:[#allocation2 + $0xa0] sm:$0xff] %v3970
      %4007 = vst [vmem:[#allocation2 + $0xa8] sm:$0xff] %v3971
      %4008 = vst [vmem:[#allocation2 + $0xb0] sm:$0xff] %v3972
      %4009 = vst [vmem:[#allocation2 + $0xb8] sm:$0xff] %v3973
      %4010 = vst [vmem:[#allocation2 + $0xc0] sm:$0xff] %v3974
      %4011 = vst [vmem:[#allocation2 + $0xc8] sm:$0xff] %v3975
      %4012 = vst [vmem:[#allocation2 + $0xd0] sm:$0xff] %v3976
      %4013 = vst [vmem:[#allocation2 + $0xd8] sm:$0xff] %v3977
      %4014 = vst [vmem:[#allocation2 + $0xe0] sm:$0xff] %v3978
      %4015 = vst [vmem:[#allocation2 + $0xe8] sm:$0xff] %v3979
      %4016 = vst [vmem:[#allocation2 + $0xf0] sm:$0xff] %v3980
      %4017 = vst [vmem:[#allocation2 + $0xf8] sm:$0xff] %v3981
      %4018 = vst [vmem:[#allocation2 + $0x100] sm:$0xff] %v3982
      %4019 = vst [vmem:[#allocation2 + $0x108] sm:$0xff] %v3983
      %4020 = vst [vmem:[#allocation2 + $0x110] sm:$0xff] %v3984
      %4021 = vst [vmem:[#allocation2 + $0x118] sm:$0xff] %v3985
      %v4022 = vld [vmem:[#allocation2] sm:$0xff]
      %v4023 = vld [vmem:[#allocation2 + $0x8] sm:$0xff]
      %v4024 = vld [vmem:[#allocation2 + $0x10] sm:$0xff]
      %v4025 = vld [vmem:[#allocation2 + $0x18] sm:$0xff]
      %v4026 = vld [vmem:[#allocation2 + $0x20] sm:$0xff]
      %v4027 = vld [vmem:[#allocation2 + $0x28] sm:$0xff]
      %v4028 = vld [vmem:[#allocation2 + $0x30] sm:$0xff]
      %v4029 = vld [vmem:[#allocation2 + $0x38] sm:$0xff]
      %v4030 = vld [vmem:[#allocation2 + $0x40] sm:$0xff]
      %v4031 = vld [vmem:[#allocation2 + $0x48] sm:$0xff]
      %v4032 = vld [vmem:[#allocation2 + $0x50] sm:$0xff]
      %v4033 = vld [vmem:[#allocation2 + $0x58] sm:$0xff]
      %v4034 = vld [vmem:[#allocation2 + $0x60] sm:$0xff]
      %v4035 = vld [vmem:[#allocation2 + $0x68] sm:$0xff]
      %v4036 = vld [vmem:[#allocation2 + $0x70] sm:$0xff]
      %v4037 = vld [vmem:[#allocation2 + $0x78] sm:$0xff]
      %v4038 = vld [vmem:[#allocation2 + $0x80] sm:$0xff]
      %v4039 = vld [vmem:[#allocation2 + $0x88] sm:$0xff]
      %v4040 = vld [vmem:[#allocation2 + $0x90] sm:$0xff]
      %v4041 = vld [vmem:[#allocation2 + $0x98] sm:$0xff]
      %v4042 = vld [vmem:[#allocation2 + $0xa0] sm:$0xff]
      %v4043 = vld [vmem:[#allocation2 + $0xa8] sm:$0xff]
      %v4044 = vld [vmem:[#allocation2 + $0xb0] sm:$0xff]
      %v4045 = vld [vmem:[#allocation2 + $0xb8] sm:$0xff]
      %v4046 = vld [vmem:[#allocation2 + $0xc0] sm:$0xff]
      %v4047 = vld [vmem:[#allocation2 + $0xc8] sm:$0xff]
      %v4048 = vld [vmem:[#allocation2 + $0xd0] sm:$0xff]
      %v4049 = vld [vmem:[#allocation2 + $0xd8] sm:$0xff]
      %v4050 = vld [vmem:[#allocation2 + $0xe0] sm:$0xff]
      %v4051 = vld [vmem:[#allocation2 + $0xe8] sm:$0xff]
      %v4052 = vld [vmem:[#allocation2 + $0xf0] sm:$0xff]
      %v4053 = vld [vmem:[#allocation2 + $0xf8] sm:$0xff]
      %v4054 = vld [vmem:[#allocation2 + $0x100] sm:$0xff]
      %v4055 = vld [vmem:[#allocation2 + $0x108] sm:$0xff]
      %v4056 = vld [vmem:[#allocation2 + $0x110] sm:$0xff]
      %v4057 = vld [vmem:[#allocation2 + $0x118] sm:$0xff]
      %v4058 = vld [vmem:[%s2] sm:$0x1]
      %v4060 = vlaneseq
      %v4061 = vshrl.u32 %v4060, 7
      %v4062 = vsub.s32 0, %v4061
      %v4063 = vrot.slane %v4058, %v4062
      %v4065 = vadd.f32 %v4022, %v4063
      %v4066 = vadd.f32 %v4023, %v4063
      %v4067 = vadd.f32 %v4024, %v4063
      %v4068 = vadd.f32 %v4025, %v4063
      %v4069 = vadd.f32 %v4026, %v4063
      %v4070 = vadd.f32 %v4027, %v4063
      %v4071 = vadd.f32 %v4028, %v4063
      %v4072 = vadd.f32 %v4029, %v4063
      %v4073 = vadd.f32 %v4030, %v4063
      %v4074 = vadd.f32 %v4031, %v4063
      %v4075 = vadd.f32 %v4032, %v4063
      %v4076 = vadd.f32 %v4033, %v4063
      %v4077 = vadd.f32 %v4034, %v4063
      %v4078 = vadd.f32 %v4035, %v4063
      %v4079 = vadd.f32 %v4036, %v4063
      %v4080 = vadd.f32 %v4037, %v4063
      %v4081 = vadd.f32 %v4038, %v4063
      %v4082 = vadd.f32 %v4039, %v4063
      %v4083 = vadd.f32 %v4040, %v4063
      %v4084 = vadd.f32 %v4041, %v4063
      %v4085 = vadd.f32 %v4042, %v4063
      %v4086 = vadd.f32 %v4043, %v4063
      %v4087 = vadd.f32 %v4044, %v4063
      %v4088 = vadd.f32 %v4045, %v4063
      %v4089 = vadd.f32 %v4046, %v4063
      %v4090 = vadd.f32 %v4047, %v4063
      %v4091 = vadd.f32 %v4048, %v4063
      %v4092 = vadd.f32 %v4049, %v4063
      %v4093 = vadd.f32 %v4050, %v4063
      %v4094 = vadd.f32 %v4051, %v4063
      %v4095 = vadd.f32 %v4052, %v4063
      %v4096 = vadd.f32 %v4053, %v4063
      %v4097 = vadd.f32 %v4054, %v4063
      %v4098 = vadd.f32 %v4055, %v4063
      %v4099 = vadd.f32 %v4056, %v4063
      %v4100 = vadd.f32 %v4057, %v4063
      %vm4101 = vcmp.gt.f32.partialorder %v4065, 0.0
      %vm4102 = vcmp.gt.f32.partialorder %v4066, 0.0
      %vm4103 = vcmp.gt.f32.partialorder %v4067, 0.0
      %vm4104 = vcmp.gt.f32.partialorder %v4068, 0.0
      %vm4105 = vcmp.gt.f32.partialorder %v4069, 0.0
      %vm4106 = vcmp.gt.f32.partialorder %v4070, 0.0
      %vm4107 = vcmp.gt.f32.partialorder %v4071, 0.0
      %vm4108 = vcmp.gt.f32.partialorder %v4072, 0.0
      %vm4109 = vcmp.gt.f32.partialorder %v4073, 0.0
      %vm4110 = vcmp.gt.f32.partialorder %v4074, 0.0
      %vm4111 = vcmp.gt.f32.partialorder %v4075, 0.0
      %vm4112 = vcmp.gt.f32.partialorder %v4076, 0.0
      %vm4113 = vcmp.gt.f32.partialorder %v4077, 0.0
      %vm4114 = vcmp.gt.f32.partialorder %v4078, 0.0
      %vm4115 = vcmp.gt.f32.partialorder %v4079, 0.0
      %vm4116 = vcmp.gt.f32.partialorder %v4080, 0.0
      %vm4117 = vcmp.gt.f32.partialorder %v4081, 0.0
      %vm4118 = vcmp.gt.f32.partialorder %v4082, 0.0
      %vm4119 = vcmp.gt.f32.partialorder %v4083, 0.0
      %vm4120 = vcmp.gt.f32.partialorder %v4084, 0.0
      %vm4121 = vcmp.gt.f32.partialorder %v4085, 0.0
      %vm4122 = vcmp.gt.f32.partialorder %v4086, 0.0
      %vm4123 = vcmp.gt.f32.partialorder %v4087, 0.0
      %vm4124 = vcmp.gt.f32.partialorder %v4088, 0.0
      %vm4125 = vcmp.gt.f32.partialorder %v4089, 0.0
      %vm4126 = vcmp.gt.f32.partialorder %v4090, 0.0
      %vm4127 = vcmp.gt.f32.partialorder %v4091, 0.0
      %vm4128 = vcmp.gt.f32.partialorder %v4092, 0.0
      %vm4129 = vcmp.gt.f32.partialorder %v4093, 0.0
      %vm4130 = vcmp.gt.f32.partialorder %v4094, 0.0
      %vm4131 = vcmp.gt.f32.partialorder %v4095, 0.0
      %vm4132 = vcmp.gt.f32.partialorder %v4096, 0.0
      %vm4133 = vcmp.gt.f32.partialorder %v4097, 0.0
      %vm4134 = vcmp.gt.f32.partialorder %v4098, 0.0
      %vm4135 = vcmp.gt.f32.partialorder %v4099, 0.0
      %vm4136 = vcmp.gt.f32.partialorder %v4100, 0.0
      %v4137 = vmul.f32 %v4065, 0.1
      %v4138 = vmul.f32 %v4066, 0.1
      %v4139 = vmul.f32 %v4067, 0.1
      %v4140 = vmul.f32 %v4068, 0.1
      %v4141 = vmul.f32 %v4069, 0.1
      %v4142 = vmul.f32 %v4070, 0.1
      %v4143 = vmul.f32 %v4071, 0.1
      %v4144 = vmul.f32 %v4072, 0.1
      %v4145 = vmul.f32 %v4073, 0.1
      %v4146 = vmul.f32 %v4074, 0.1
      %v4147 = vmul.f32 %v4075, 0.1
      %v4148 = vmul.f32 %v4076, 0.1
      %v4149 = vmul.f32 %v4077, 0.1
      %v4150 = vmul.f32 %v4078, 0.1
      %v4151 = vmul.f32 %v4079, 0.1
      %v4152 = vmul.f32 %v4080, 0.1
      %v4153 = vmul.f32 %v4081, 0.1
      %v4154 = vmul.f32 %v4082, 0.1
      %v4155 = vmul.f32 %v4083, 0.1
      %v4156 = vmul.f32 %v4084, 0.1
      %v4157 = vmul.f32 %v4085, 0.1
      %v4158 = vmul.f32 %v4086, 0.1
      %v4159 = vmul.f32 %v4087, 0.1
      %v4160 = vmul.f32 %v4088, 0.1
      %v4161 = vmul.f32 %v4089, 0.1
      %v4162 = vmul.f32 %v4090, 0.1
      %v4163 = vmul.f32 %v4091, 0.1
      %v4164 = vmul.f32 %v4092, 0.1
      %v4165 = vmul.f32 %v4093, 0.1
      %v4166 = vmul.f32 %v4094, 0.1
      %v4167 = vmul.f32 %v4095, 0.1
      %v4168 = vmul.f32 %v4096, 0.1
      %v4169 = vmul.f32 %v4097, 0.1
      %v4170 = vmul.f32 %v4098, 0.1
      %v4171 = vmul.f32 %v4099, 0.1
      %v4172 = vmul.f32 %v4100, 0.1
      %v4173 = vsel %vm4101, %v4065, %v4137
      %v4174 = vsel %vm4102, %v4066, %v4138
      %v4175 = vsel %vm4103, %v4067, %v4139
      %v4176 = vsel %vm4104, %v4068, %v4140
      %v4177 = vsel %vm4105, %v4069, %v4141
      %v4178 = vsel %vm4106, %v4070, %v4142
      %v4179 = vsel %vm4107, %v4071, %v4143
      %v4180 = vsel %vm4108, %v4072, %v4144
      %v4181 = vsel %vm4109, %v4073, %v4145
      %v4182 = vsel %vm4110, %v4074, %v4146
      %v4183 = vsel %vm4111, %v4075, %v4147
      %v4184 = vsel %vm4112, %v4076, %v4148
      %v4185 = vsel %vm4113, %v4077, %v4149
      %v4186 = vsel %vm4114, %v4078, %v4150
      %v4187 = vsel %vm4115, %v4079, %v4151
      %v4188 = vsel %vm4116, %v4080, %v4152
      %v4189 = vsel %vm4117, %v4081, %v4153
      %v4190 = vsel %vm4118, %v4082, %v4154
      %v4191 = vsel %vm4119, %v4083, %v4155
      %v4192 = vsel %vm4120, %v4084, %v4156
      %v4193 = vsel %vm4121, %v4085, %v4157
      %v4194 = vsel %vm4122, %v4086, %v4158
      %v4195 = vsel %vm4123, %v4087, %v4159
      %v4196 = vsel %vm4124, %v4088, %v4160
      %v4197 = vsel %vm4125, %v4089, %v4161
      %v4198 = vsel %vm4126, %v4090, %v4162
      %v4199 = vsel %vm4127, %v4091, %v4163
      %v4200 = vsel %vm4128, %v4092, %v4164
      %v4201 = vsel %vm4129, %v4093, %v4165
      %v4202 = vsel %vm4130, %v4094, %v4166
      %v4203 = vsel %vm4131, %v4095, %v4167
      %v4204 = vsel %vm4132, %v4096, %v4168
      %v4205 = vsel %vm4133, %v4097, %v4169
      %v4206 = vsel %vm4134, %v4098, %v4170
      %v4207 = vsel %vm4135, %v4099, %v4171
      %v4208 = vsel %vm4136, %v4100, %v4172
      %v4209 = vpack.c.bf16 %v4174, %v4173
      %v4210 = vpack.c.bf16 %v4176, %v4175
      %v4211 = vpack.c.bf16 %v4178, %v4177
      %v4212 = vpack.c.bf16 %v4180, %v4179
      %v4213 = vpack.c.bf16 %v4182, %v4181
      %v4214 = vpack.c.bf16 %v4184, %v4183
      %v4215 = vpack.c.bf16 %v4186, %v4185
      %v4216 = vpack.c.bf16 %v4188, %v4187
      %v4217 = vpack.c.bf16 %v4190, %v4189
      %v4218 = vpack.c.bf16 %v4192, %v4191
      %v4219 = vpack.c.bf16 %v4194, %v4193
      %v4220 = vpack.c.bf16 %v4196, %v4195
      %v4221 = vpack.c.bf16 %v4198, %v4197
      %v4222 = vpack.c.bf16 %v4200, %v4199
      %v4223 = vpack.c.bf16 %v4202, %v4201
      %v4224 = vpack.c.bf16 %v4204, %v4203
      %v4225 = vpack.c.bf16 %v4206, %v4205
      %v4226 = vpack.c.bf16 %v4208, %v4207
      %v4227 = vld [vmem:[%s3] sm:$0xf]
      %v4228 = vld [vmem:[%s3 + $0x4] sm:$0xf]
      %v4229 = vld [vmem:[%s3 + $0x8] sm:$0xf]
      %v4230 = vld [vmem:[%s3 + $0xc] sm:$0xf]
      %v4231 = vld [vmem:[%s3 + $0x10] sm:$0xf]
      %v4232 = vld [vmem:[%s3 + $0x14] sm:$0xf]
      %v4233 = vld [vmem:[%s3 + $0x18] sm:$0xf]
      %v4234 = vld [vmem:[%s3 + $0x1c] sm:$0xf]
      %v4235 = vld [vmem:[%s3 + $0x20] sm:$0xf]
      %v4236 = vld [vmem:[%s3 + $0x24] sm:$0xf]
      %v4237 = vld [vmem:[%s3 + $0x28] sm:$0xf]
      %v4238 = vld [vmem:[%s3 + $0x2c] sm:$0xf]
      %v4239 = vld [vmem:[%s3 + $0x30] sm:$0xf]
      %v4240 = vld [vmem:[%s3 + $0x34] sm:$0xf]
      %v4241 = vld [vmem:[%s3 + $0x38] sm:$0xf]
      %v4242 = vld [vmem:[%s3 + $0x3c] sm:$0xf]
      %v4243 = vld [vmem:[%s4] sm:$0x1]
      %v4245 = vlaneseq
      %v4246 = vshrl.u32 %v4245, 7
      %v4247 = vsub.s32 0, %v4246
      %v4248 = vrot.slane %v4243, %v4247
      %v4266 = vunpack.c.l.b16 %v4227
      %v4267 = vunpack.c.l.b16 %v4228
      %v4268 = vunpack.c.l.b16 %v4229
      %v4269 = vunpack.c.l.b16 %v4230
      %v4270 = vunpack.c.l.b16 %v4231
      %v4271 = vunpack.c.l.b16 %v4232
      %v4272 = vunpack.c.l.b16 %v4233
      %v4273 = vunpack.c.l.b16 %v4234
      %v4274 = vunpack.c.l.b16 %v4235
      %v4275 = vunpack.c.l.b16 %v4236
      %v4276 = vunpack.c.l.b16 %v4237
      %v4277 = vunpack.c.l.b16 %v4238
      %v4278 = vunpack.c.l.b16 %v4239
      %v4279 = vunpack.c.l.b16 %v4240
      %v4280 = vunpack.c.l.b16 %v4241
      %v4281 = vunpack.c.l.b16 %v4242
      %v4282 = vpack.c.b16 %v4267, %v4266
      %v4283 = vpack.c.b16 %v4269, %v4268
      %v4284 = vpack.c.b16 %v4271, %v4270
      %v4285 = vpack.c.b16 %v4273, %v4272
      %v4286 = vpack.c.b16 %v4275, %v4274
      %v4287 = vpack.c.b16 %v4277, %v4276
      %v4288 = vpack.c.b16 %v4279, %v4278
      %v4289 = vpack.c.b16 %v4281, %v4280
      %4298 = vmatprep.subr.bf16.mxu0 0
      %4299 = vmatpush1.bf16.msra.mxu0 %v4289
      %4300 = vmatprep.subr.bf16.mxu0 0
      %4301 = vmatpush1.bf16.msra.mxu0 %v4288
      %4302 = vmatprep.subr.bf16.mxu0 0
      %4303 = vmatpush1.bf16.msra.mxu0 %v4287
      %4304 = vmatprep.subr.bf16.mxu0 0
      %4305 = vmatpush1.bf16.msra.mxu0 %v4286
      %4306 = vmatprep.subr.bf16.mxu0 0
      %4307 = vmatpush1.bf16.msra.mxu0 %v4285
      %4308 = vmatprep.subr.bf16.mxu0 0
      %4309 = vmatpush1.bf16.msra.mxu0 %v4284
      %4310 = vmatprep.subr.bf16.mxu0 0
      %4311 = vmatpush1.bf16.msra.mxu0 %v4283
      %4312 = vmatprep.subr.bf16.mxu0 0
      %4313 = vmatpush1.bf16.msra.mxu0 %v4282
      %4314 = vmatprep.subr.bf16.mxu0 0
      %4315 = vmatpush2.bf16.msra.mxu0 0
      %4316 = vmatprep.subr.bf16.mxu0 0
      %4317 = vmatpush2.bf16.msra.mxu0 0
      %4318 = vmatprep.subr.bf16.mxu0 0
      %4319 = vmatpush2.bf16.msra.mxu0 0
      %4320 = vmatprep.subr.bf16.mxu0 0
      %4321 = vmatpush2.bf16.msra.mxu0 0
      %4322 = vmatprep.subr.bf16.mxu0 0
      %4323 = vmatpush2.bf16.msra.mxu0 0
      %4324 = vmatprep.subr.bf16.mxu0 0
      %4325 = vmatpush2.bf16.msra.mxu0 0
      %4326 = vmatprep.subr.bf16.mxu0 0
      %4327 = vmatpush2.bf16.msra.mxu0 0
      %4328 = vmatprep.subr.bf16.mxu0 0
      %4329 = vmatpush2.bf16.msra.mxu0 0
      %4330 = vmatprep.mubr.bf16.mxu0 0
      %4331 = vmatmul.mubr.bf16.gmra.mxu0 %v4209
      %v4332 = vpop.f32.mrf.mxu0
      %v4333 = vadd.f32 %v4248, %v4332
      %v4334 = vpop.f32.mrf.mxu0
      %v4335 = vpop.f32.mrf.mxu0
      %v4336 = vadd.f32 %v4248, %v4335
      %v4337 = vpop.f32.mrf.mxu0
      %4338 = vmatprep.mubr.bf16.mxu0 0
      %4339 = vmatmul.mubr.bf16.gmra.mxu0 %v4210
      %v4340 = vpop.f32.mrf.mxu0
      %v4341 = vadd.f32 %v4248, %v4340
      %v4342 = vpop.f32.mrf.mxu0
      %v4343 = vpop.f32.mrf.mxu0
      %v4344 = vadd.f32 %v4248, %v4343
      %v4345 = vpop.f32.mrf.mxu0
      %4346 = vmatprep.mubr.bf16.mxu0 0
      %4347 = vmatmul.mubr.bf16.gmra.mxu0 %v4211
      %v4348 = vpop.f32.mrf.mxu0
      %v4349 = vadd.f32 %v4248, %v4348
      %v4350 = vpop.f32.mrf.mxu0
      %v4351 = vpop.f32.mrf.mxu0
      %v4352 = vadd.f32 %v4248, %v4351
      %v4353 = vpop.f32.mrf.mxu0
      %4354 = vmatprep.mubr.bf16.mxu0 0
      %4355 = vmatmul.mubr.bf16.gmra.mxu0 %v4212
      %v4356 = vpop.f32.mrf.mxu0
      %v4357 = vadd.f32 %v4248, %v4356
      %v4358 = vpop.f32.mrf.mxu0
      %v4359 = vpop.f32.mrf.mxu0
      %v4360 = vadd.f32 %v4248, %v4359
      %v4361 = vpop.f32.mrf.mxu0
      %4362 = vmatprep.mubr.bf16.mxu0 0
      %4363 = vmatmul.mubr.bf16.gmra.mxu0 %v4213
      %v4364 = vpop.f32.mrf.mxu0
      %v4365 = vadd.f32 %v4248, %v4364
      %v4366 = vpop.f32.mrf.mxu0
      %v4367 = vpop.f32.mrf.mxu0
      %v4368 = vadd.f32 %v4248, %v4367
      %v4369 = vpop.f32.mrf.mxu0
      %4370 = vmatprep.mubr.bf16.mxu0 0
      %4371 = vmatmul.mubr.bf16.gmra.mxu0 %v4214
      %v4372 = vpop.f32.mrf.mxu0
      %v4373 = vadd.f32 %v4248, %v4372
      %v4374 = vpop.f32.mrf.mxu0
      %v4375 = vpop.f32.mrf.mxu0
      %v4376 = vadd.f32 %v4248, %v4375
      %v4377 = vpop.f32.mrf.mxu0
      %4378 = vmatprep.mubr.bf16.mxu0 0
      %4379 = vmatmul.mubr.bf16.gmra.mxu0 %v4215
      %v4380 = vpop.f32.mrf.mxu0
      %v4381 = vadd.f32 %v4248, %v4380
      %v4382 = vpop.f32.mrf.mxu0
      %v4383 = vpop.f32.mrf.mxu0
      %v4384 = vadd.f32 %v4248, %v4383
      %v4385 = vpop.f32.mrf.mxu0
      %4386 = vmatprep.mubr.bf16.mxu0 0
      %4387 = vmatmul.mubr.bf16.gmra.mxu0 %v4216
      %v4388 = vpop.f32.mrf.mxu0
      %v4389 = vadd.f32 %v4248, %v4388
      %v4390 = vpop.f32.mrf.mxu0
      %v4391 = vpop.f32.mrf.mxu0
      %v4392 = vadd.f32 %v4248, %v4391
      %v4393 = vpop.f32.mrf.mxu0
      %4394 = vmatprep.mubr.bf16.mxu0 0
      %4395 = vmatmul.mubr.bf16.gmra.mxu0 %v4217
      %v4396 = vpop.f32.mrf.mxu0
      %v4397 = vadd.f32 %v4248, %v4396
      %v4398 = vpop.f32.mrf.mxu0
      %v4399 = vpop.f32.mrf.mxu0
      %v4400 = vadd.f32 %v4248, %v4399
      %v4401 = vpop.f32.mrf.mxu0
      %4402 = vmatprep.mubr.bf16.mxu0 0
      %4403 = vmatmul.mubr.bf16.gmra.mxu0 %v4218
      %v4404 = vpop.f32.mrf.mxu0
      %v4405 = vadd.f32 %v4248, %v4404
      %v4406 = vpop.f32.mrf.mxu0
      %v4407 = vpop.f32.mrf.mxu0
      %v4408 = vadd.f32 %v4248, %v4407
      %v4409 = vpop.f32.mrf.mxu0
      %4410 = vmatprep.mubr.bf16.mxu0 0
      %4411 = vmatmul.mubr.bf16.gmra.mxu0 %v4219
      %v4412 = vpop.f32.mrf.mxu0
      %v4413 = vadd.f32 %v4248, %v4412
      %v4414 = vpop.f32.mrf.mxu0
      %v4415 = vpop.f32.mrf.mxu0
      %v4416 = vadd.f32 %v4248, %v4415
      %v4417 = vpop.f32.mrf.mxu0
      %4418 = vmatprep.mubr.bf16.mxu0 0
      %4419 = vmatmul.mubr.bf16.gmra.mxu0 %v4220
      %v4420 = vpop.f32.mrf.mxu0
      %v4421 = vadd.f32 %v4248, %v4420
      %v4422 = vpop.f32.mrf.mxu0
      %v4423 = vpop.f32.mrf.mxu0
      %v4424 = vadd.f32 %v4248, %v4423
      %v4425 = vpop.f32.mrf.mxu0
      %4426 = vmatprep.mubr.bf16.mxu0 0
      %4427 = vmatmul.mubr.bf16.gmra.mxu0 %v4221
      %v4428 = vpop.f32.mrf.mxu0
      %v4429 = vadd.f32 %v4248, %v4428
      %v4430 = vpop.f32.mrf.mxu0
      %v4431 = vpop.f32.mrf.mxu0
      %v4432 = vadd.f32 %v4248, %v4431
      %v4433 = vpop.f32.mrf.mxu0
      %4434 = vmatprep.mubr.bf16.mxu0 0
      %4435 = vmatmul.mubr.bf16.gmra.mxu0 %v4222
      %v4436 = vpop.f32.mrf.mxu0
      %v4437 = vadd.f32 %v4248, %v4436
      %v4438 = vpop.f32.mrf.mxu0
      %v4439 = vpop.f32.mrf.mxu0
      %v4440 = vadd.f32 %v4248, %v4439
      %v4441 = vpop.f32.mrf.mxu0
      %4442 = vmatprep.mubr.bf16.mxu0 0
      %4443 = vmatmul.mubr.bf16.gmra.mxu0 %v4223
      %v4444 = vpop.f32.mrf.mxu0
      %v4445 = vadd.f32 %v4248, %v4444
      %v4446 = vpop.f32.mrf.mxu0
      %v4447 = vpop.f32.mrf.mxu0
      %v4448 = vadd.f32 %v4248, %v4447
      %v4449 = vpop.f32.mrf.mxu0
      %4450 = vmatprep.mubr.bf16.mxu0 0
      %4451 = vmatmul.mubr.bf16.gmra.mxu0 %v4224
      %v4452 = vpop.f32.mrf.mxu0
      %v4453 = vadd.f32 %v4248, %v4452
      %v4454 = vpop.f32.mrf.mxu0
      %v4455 = vpop.f32.mrf.mxu0
      %v4456 = vadd.f32 %v4248, %v4455
      %v4457 = vpop.f32.mrf.mxu0
      %4458 = vmatprep.mubr.bf16.mxu0 0
      %4459 = vmatmul.mubr.bf16.gmra.mxu0 %v4225
      %v4460 = vpop.f32.mrf.mxu0
      %v4461 = vadd.f32 %v4248, %v4460
      %v4462 = vpop.f32.mrf.mxu0
      %v4463 = vpop.f32.mrf.mxu0
      %v4464 = vadd.f32 %v4248, %v4463
      %v4465 = vpop.f32.mrf.mxu0
      %4466 = vmatprep.mubr.bf16.mxu0 0
      %4467 = vmatmul.mubr.bf16.gmra.mxu0 %v4226
      %v4468 = vpop.f32.mrf.mxu0
      %v4469 = vadd.f32 %v4248, %v4468
      %v4470 = vpop.f32.mrf.mxu0
      %v4471 = vpop.f32.mrf.mxu0
      %v4472 = vadd.f32 %v4248, %v4471
      %v4473 = vpop.f32.mrf.mxu0
      %4474 = vdwg.mxu0
      %v4475 = vpack.c.bf16 %v4336, %v4333
      %v4476 = vpack.c.bf16 %v4344, %v4341
      %v4477 = vpack.c.bf16 %v4352, %v4349
      %v4478 = vpack.c.bf16 %v4360, %v4357
      %v4479 = vpack.c.bf16 %v4368, %v4365
      %v4480 = vpack.c.bf16 %v4376, %v4373
      %v4481 = vpack.c.bf16 %v4384, %v4381
      %v4482 = vpack.c.bf16 %v4392, %v4389
      %v4483 = vpack.c.bf16 %v4400, %v4397
      %v4484 = vpack.c.bf16 %v4408, %v4405
      %v4485 = vpack.c.bf16 %v4416, %v4413
      %v4486 = vpack.c.bf16 %v4424, %v4421
      %v4487 = vpack.c.bf16 %v4432, %v4429
      %v4488 = vpack.c.bf16 %v4440, %v4437
      %v4489 = vpack.c.bf16 %v4448, %v4445
      %v4490 = vpack.c.bf16 %v4456, %v4453
      %v4491 = vpack.c.bf16 %v4464, %v4461
      %v4492 = vpack.c.bf16 %v4472, %v4469
      %v4511 = vunpack.c.l.b16 %v4475
      %v4512 = vunpack.c.h.b16 %v4475
      %v4513 = vunpack.c.l.b16 %v4476
      %v4514 = vunpack.c.h.b16 %v4476
      %v4515 = vunpack.c.l.b16 %v4477
      %v4516 = vunpack.c.h.b16 %v4477
      %v4517 = vunpack.c.l.b16 %v4478
      %v4518 = vunpack.c.h.b16 %v4478
      %v4519 = vunpack.c.l.b16 %v4479
      %v4520 = vunpack.c.h.b16 %v4479
      %v4521 = vunpack.c.l.b16 %v4480
      %v4522 = vunpack.c.h.b16 %v4480
      %v4523 = vunpack.c.l.b16 %v4481
      %v4524 = vunpack.c.h.b16 %v4481
      %v4525 = vunpack.c.l.b16 %v4482
      %v4526 = vunpack.c.h.b16 %v4482
      %v4527 = vunpack.c.l.b16 %v4483
      %v4528 = vunpack.c.h.b16 %v4483
      %v4529 = vunpack.c.l.b16 %v4484
      %v4530 = vunpack.c.h.b16 %v4484
      %v4531 = vunpack.c.l.b16 %v4485
      %v4532 = vunpack.c.h.b16 %v4485
      %v4533 = vunpack.c.l.b16 %v4486
      %v4534 = vunpack.c.h.b16 %v4486
      %v4535 = vunpack.c.l.b16 %v4487
      %v4536 = vunpack.c.h.b16 %v4487
      %v4537 = vunpack.c.l.b16 %v4488
      %v4538 = vunpack.c.h.b16 %v4488
      %v4539 = vunpack.c.l.b16 %v4489
      %v4540 = vunpack.c.h.b16 %v4489
      %v4541 = vunpack.c.l.b16 %v4490
      %v4542 = vunpack.c.h.b16 %v4490
      %v4543 = vunpack.c.l.b16 %v4491
      %v4544 = vunpack.c.h.b16 %v4491
      %v4545 = vunpack.c.l.b16 %v4492
      %v4546 = vunpack.c.h.b16 %v4492
      %v4547 = vpack.c.b16 %v4511, %v4511
      %v4548 = vpack.c.b16 %v4512, %v4512
      %v4549 = vpack.c.b16 %v4513, %v4513
      %v4550 = vpack.c.b16 %v4514, %v4514
      %v4551 = vpack.c.b16 %v4515, %v4515
      %v4552 = vpack.c.b16 %v4516, %v4516
      %v4553 = vpack.c.b16 %v4517, %v4517
      %v4554 = vpack.c.b16 %v4518, %v4518
      %v4555 = vpack.c.b16 %v4519, %v4519
      %v4556 = vpack.c.b16 %v4520, %v4520
      %v4557 = vpack.c.b16 %v4521, %v4521
      %v4558 = vpack.c.b16 %v4522, %v4522
      %v4559 = vpack.c.b16 %v4523, %v4523
      %v4560 = vpack.c.b16 %v4524, %v4524
      %v4561 = vpack.c.b16 %v4525, %v4525
      %v4562 = vpack.c.b16 %v4526, %v4526
      %v4563 = vpack.c.b16 %v4527, %v4527
      %v4564 = vpack.c.b16 %v4528, %v4528
      %v4565 = vpack.c.b16 %v4529, %v4529
      %v4566 = vpack.c.b16 %v4530, %v4530
      %v4567 = vpack.c.b16 %v4531, %v4531
      %v4568 = vpack.c.b16 %v4532, %v4532
      %v4569 = vpack.c.b16 %v4533, %v4533
      %v4570 = vpack.c.b16 %v4534, %v4534
      %v4571 = vpack.c.b16 %v4535, %v4535
      %v4572 = vpack.c.b16 %v4536, %v4536
      %v4573 = vpack.c.b16 %v4537, %v4537
      %v4574 = vpack.c.b16 %v4538, %v4538
      %v4575 = vpack.c.b16 %v4539, %v4539
      %v4576 = vpack.c.b16 %v4540, %v4540
      %v4577 = vpack.c.b16 %v4541, %v4541
      %v4578 = vpack.c.b16 %v4542, %v4542
      %v4579 = vpack.c.b16 %v4543, %v4543
      %v4580 = vpack.c.b16 %v4544, %v4544
      %v4581 = vpack.c.b16 %v4545, %v4545
      %v4582 = vpack.c.b16 %v4546, %v4546
      %4619 = vst [vmem:[%s224] sm:$0xf] %v4547
      %4620 = vst [vmem:[%s224 + $0x4] sm:$0xf] %v4548
      %4621 = vst [vmem:[%s224 + $0x8] sm:$0xf] %v4549
      %4622 = vst [vmem:[%s224 + $0xc] sm:$0xf] %v4550
      %4623 = vst [vmem:[%s224 + $0x10] sm:$0xf] %v4551
      %4624 = vst [vmem:[%s224 + $0x14] sm:$0xf] %v4552
      %4625 = vst [vmem:[%s224 + $0x18] sm:$0xf] %v4553
      %4626 = vst [vmem:[%s224 + $0x1c] sm:$0xf] %v4554
      %4627 = vst [vmem:[%s224 + $0x20] sm:$0xf] %v4555
      %4628 = vst [vmem:[%s224 + $0x24] sm:$0xf] %v4556
      %4629 = vst [vmem:[%s224 + $0x28] sm:$0xf] %v4557
      %4630 = vst [vmem:[%s224 + $0x2c] sm:$0xf] %v4558
      %4631 = vst [vmem:[%s224 + $0x30] sm:$0xf] %v4559
      %4632 = vst [vmem:[%s224 + $0x34] sm:$0xf] %v4560
      %4633 = vst [vmem:[%s224 + $0x38] sm:$0xf] %v4561
      %4634 = vst [vmem:[%s224 + $0x3c] sm:$0xf] %v4562
      %4635 = vst [vmem:[%s224 + $0x40] sm:$0xf] %v4563
      %4636 = vst [vmem:[%s224 + $0x44] sm:$0xf] %v4564
      %4637 = vst [vmem:[%s224 + $0x48] sm:$0xf] %v4565
      %4638 = vst [vmem:[%s224 + $0x4c] sm:$0xf] %v4566
      %4639 = vst [vmem:[%s224 + $0x50] sm:$0xf] %v4567
      %4640 = vst [vmem:[%s224 + $0x54] sm:$0xf] %v4568
      %4641 = vst [vmem:[%s224 + $0x58] sm:$0xf] %v4569
      %4642 = vst [vmem:[%s224 + $0x5c] sm:$0xf] %v4570
      %4643 = vst [vmem:[%s224 + $0x60] sm:$0xf] %v4571
      %4644 = vst [vmem:[%s224 + $0x64] sm:$0xf] %v4572
      %4645 = vst [vmem:[%s224 + $0x68] sm:$0xf] %v4573
      %4646 = vst [vmem:[%s224 + $0x6c] sm:$0xf] %v4574
      %4647 = vst [vmem:[%s224 + $0x70] sm:$0xf] %v4575
      %4648 = vst [vmem:[%s224 + $0x74] sm:$0xf] %v4576
      %4649 = vst [vmem:[%s224 + $0x78] sm:$0xf] %v4577
      %4650 = vst [vmem:[%s224 + $0x7c] sm:$0xf] %v4578
      %4651 = vst [vmem:[%s224 + $0x80] sm:$0xf] %v4579
      %4652 = vst [vmem:[%s224 + $0x84] sm:$0xf] %v4580
      %4653 = vst [vmem:[%s224 + $0x88] sm:$0xf] %v4581
      %4654 = vst [vmem:[%s224 + $0x8c] sm:$0xf] %v4582
      %p4655 = scmp.lt.s32.totalorder %s16, 1
      %s4656 = scalar_select %p4655, %s16, 1
      %s4657 = smul.addr %s4656, 36
      %s4658 = smul.addr %s4657, 4
      %s4659 = scalar_lea.vmem %s5, %s4658
      // Predicated region
      $region41: #{scale_prediction_pallas.1} parent=39 // pred_check
        %p4660 = pneg %p144
      $region42: #{scale_prediction_pallas.1} parent=39 // pred_check_branch
        %4662 = sbr.rel (%p4660) target = $region44
      $region43: #{scale_prediction_pallas.1} parent=39 // pred_region
        _
      $region44: #{scale_prediction_pallas.1} parent=39 // pred_fallthru
        _
    $region40: #{scale_prediction_pallas.1} parent=5 // pred_fallthru
      _
    %p4663 = scmp.le.s32.totalorder 2, %s11
    // Predicated region
    $region45: #{scale_prediction_pallas.1} parent=5 // pred_check
      %p4664 = pneg %p4663
    $region46: #{scale_prediction_pallas.1} parent=5 // pred_check_branch
      %4666 = sbr.rel (%p4664) target = $region48
    $region47: #{scale_prediction_pallas.1} parent=5 // pred_region
      %s4667 = ssub.s32 %s11, 2
      // Predicated region
      $region49: #{scale_prediction_pallas.1} parent=47 // pred_check
        %p4668 = pneg %p150
      $region50: #{scale_prediction_pallas.1} parent=47 // pred_check_branch
        %4670 = sbr.rel (%p4668) target = $region52
      $region51: #{scale_prediction_pallas.1} parent=47 // pred_region
        %p4671 = scmp.lt.s32.totalorder %s17, 1
        %s4672 = scalar_select %p4671, %s17, 1
        %s4673 = smul.addr %s4672, 36
        %s4674 = smul.addr %s4673, 4
        %s4675 = scalar_lea.vmem %s5, %s4674
      $region52: #{scale_prediction_pallas.1} parent=47 // pred_fallthru
        _
    $region48: #{scale_prediction_pallas.1} parent=5 // pred_fallthru
      _
  $region6: #{scale_prediction_pallas.1} parent=0 // loop_footer
    %s15 = sadd.s32 1, %s11
  $region7: #{scale_prediction_pallas.1} parent=0 // loop_footer_branch
    %10 = sbr.rel target = $region3
  $region8: #{scale_prediction_pallas.1} parent=0 // loop_exit
    _

</llo_original>
